<compile_context>
chip_gen: v7x
topology: tpu7x:2x2x1
jax: 0.10.0
libtpu: 0.0.40
codegen_flags: <defaults>
</compile_context>

<pallas_src>
import math
from functools import partial

import jax
import jax.numpy as jnp
from jax.experimental import pallas as pl
from jax.experimental.pallas import tpu as pltpu

EPS = 1e-5  # nn.LayerNorm default

BLOCK_PARAM_ORDER = ("ln1_g", "ln1_b", "w_attn", "b_attn", "w_proj", "b_proj",
                     "ln2_g", "ln2_b", "w_fc", "b_fc", "w_fc2", "b_fc2")


def _round_up(x, m):
    return ((x + m - 1) // m) * m


def _layernorm(x, g, b):
    mu = jnp.mean(x, axis=-1, keepdims=True)
    var = jnp.mean((x - mu) ** 2, axis=-1, keepdims=True)
    return (x - mu) * jax.lax.rsqrt(var + EPS) * g + b


def _gelu_exact(x):
    # PyTorch nn.GELU() default: 0.5 * x * (1 + erf(x / sqrt(2)))
    return 0.5 * x * (1.0 + jax.lax.erf(x * (1.0 / math.sqrt(2.0))))


def _compiler_params(semantics, est_vmem_bytes):
    kw = dict(dimension_semantics=semantics)
    # v5e scoped-VMEM default is 16 MiB -> raise the limit whenever the working
    # set exceeds ~12 MiB; cap at 56 MiB to stay inside v7x's 64 MiB physical VMEM.
    if est_vmem_bytes > 12 * 1024 * 1024:
        kw["vmem_limit_bytes"] = int(min(max(int(1.5 * est_vmem_bytes),
                                             32 * 1024 * 1024),
                                         56 * 1024 * 1024))
    return pltpu.CompilerParams(**kw)


# --------------------------------------------------------------------------- #
# Fused transformer-blocks kernel + final ln_f: grid = (layer,)               #
# --------------------------------------------------------------------------- #
def blocks_kernel(n_head,
                  x_ref, ln1_g, ln1_b, w_attn, b_attn, w_proj, b_proj,
                  ln2_g, ln2_b, w_fc, b_fc, w_fc2, b_fc2,
                  lnf_g, lnf_b, o_ref, res_ref):
    """All layers of `Block` (pre-LN attention + pre-LN MLP), batch folded into M.

    The f32 residual stream lives in the VMEM scratch `res_ref`, resident across
    the layer grid axis; the bf16 output `o_ref` receives ln_f(x) on the last layer.
    """
    layer = pl.program_id(0)
    n_layer = pl.num_programs(0)

    @pl.when(layer == 0)
    def _():
        res_ref[...] = x_ref[...]            # load embeddings into the residual stream

    B, T, C = res_ref.shape
    BT = B * T
    H = n_head
    hs = C // H
    scale = 1.0 / math.sqrt(hs)

    x = res_ref[...].reshape(BT, C)          # (B*T, C) f32 residual (leading reshape = free)

    # ---- x = x + attn(ln1(x)) (bidirectional / no causal mask, per spec) ----
    xn = _layernorm(x, ln1_g[0], ln1_b[0])
    qkv = jnp.dot(xn.astype(jnp.bfloat16), w_attn[0],
                  preferred_element_type=jnp.float32) + b_attn[0]   # (BT, 3C) f32
    q = qkv[:, :C] * scale                   # fold 1/sqrt(hs) into q
    k = qkv[:, C:2 * C]
    v = qkv[:, 2 * C:]

    def split_heads(t):
        # (B*T, C) -> (H*B, T, hs); cast to bf16 at the slice so the f32 dies early.
        # TODO(synk): replace the per-head lane slices + stack with one
        # pltpu.einshape relayout per tensor once validated for this layout.
        parts = [t[:, h * hs:(h + 1) * hs].astype(jnp.bfloat16) for h in range(H)]
        return jnp.stack(parts, axis=0).reshape(H * B, T, hs)

    qh = split_heads(q)
    kh = split_heads(k)
    vh = split_heads(v)

    # TODO(synk): for T >> 128, add a kv-tile loop + online-softmax (flash)
    # instead of materializing the full (H*B, T, T) score tensor.
    s = jnp.einsum('nqd,nkd->nqk', qh, kh, preferred_element_type=jnp.float32)
    m = jnp.max(s, axis=-1, keepdims=True)
    p = jnp.exp(s - m)
    inv = pl.reciprocal(jnp.sum(p, axis=-1, keepdims=True), approx=True)  # EUP slot
    p = (p * inv).astype(jnp.bfloat16)
    y = jnp.einsum('nqk,nkd->nqd', p, vh, preferred_element_type=jnp.float32)  # (H*B, T, hs)
    y = y.reshape(H, BT, hs)
    y = jnp.concatenate([y[h] for h in range(H)], axis=-1)                      # (BT, C)

    att = jnp.dot(y.astype(jnp.bfloat16), w_proj[0],
                  preferred_element_type=jnp.float32) + b_proj[0]
    x = x + att

    # ---- x = x + mlp(ln2(x)) ----
    xn2 = _layernorm(x, ln2_g[0], ln2_b[0])
    h1 = jnp.dot(xn2.astype(jnp.bfloat16), w_fc[0],
                 preferred_element_type=jnp.float32) + b_fc[0]
    h1 = _gelu_exact(h1)
    out = jnp.dot(h1.astype(jnp.bfloat16), w_fc2[0],
                  preferred_element_type=jnp.float32) + b_fc2[0]
    x = x + out

    res_ref[...] = x.reshape(B, T, C)

    # ---- ln_f hoisted here: write normalized bf16 activations once, at the end ----
    @pl.when(layer == n_layer - 1)
    def _():
        o_ref[...] = _layernorm(x, lnf_g[...], lnf_b[...]).reshape(B, T, C).astype(o_ref.dtype)


def run_blocks(x, blocks, lnf_g, lnf_b, n_head):
    B, T, C = x.shape
    BT = B * T
    weights = [blocks[kname] for kname in BLOCK_PARAM_ORDER]     # each (L, a, b)
    L = weights[0].shape[0]

    in_specs = [pl.BlockSpec((B, T, C), lambda l: (0, 0, 0))]    # embeddings, fetched once
    for w in weights:
        in_specs.append(pl.BlockSpec((1,) + tuple(w.shape[1:]), lambda l: (l, 0, 0)))
    in_specs.append(pl.BlockSpec((1, C), lambda l: (0, 0)))      # lnf_g
    in_specs.append(pl.BlockSpec((1, C), lambda l: (0, 0)))      # lnf_b

    per_layer_w = sum(math.prod(w.shape[1:]) * w.dtype.itemsize for w in weights)
    H = n_head
    est_vmem = (2 * per_layer_w                 # double-buffered per-layer weights
                + 3 * BT * C * 4                # x input (2-buf) + residual scratch
                + 2 * BT * C * 2                # bf16 output
                + BT * 3 * C * 6                # qkv f32 + bf16 copies
                + H * B * T * T * 6             # scores f32 + bf16 p
                + 4 * BT * C * 4                # head copies / y / attn out
                + BT * 4 * C * 6)               # MLP intermediate f32 + bf16

    # TODO(synk): for v7x megacore, add a parallel q-tile/head grid axis so both
    # TensorCores are used; the layer axis must remain "arbitrary".
    return pl.pallas_call(
        partial(blocks_kernel, n_head),
        out_shape=jax.ShapeDtypeStruct((B, T, C), jnp.bfloat16),
        grid=(L,),
        in_specs=in_specs,
        out_specs=pl.BlockSpec((B, T, C), lambda l: (0, 0, 0)),
        scratch_shapes=[pltpu.VMEM((B, T, C), jnp.float32)],
        compiler_params=_compiler_params(("arbitrary",), est_vmem),
    )(x, *weights, lnf_g, lnf_b)


# --------------------------------------------------------------------------- #
# Tied lm_head, vocab-tiled, with fused online logsumexp: grid = (vocab_tile,) #
# --------------------------------------------------------------------------- #
def head_kernel(v_actual, x_ref, wte_ref, logits_ref, lse_ref, m_sc, l_sc):
    vt = pl.program_id(0)
    tv = logits_ref.shape[-1]

    @pl.when(vt == 0)
    def _():
        m_sc[...] = jnp.full_like(m_sc, -jnp.inf)
        l_sc[...] = jnp.zeros_like(l_sc)

    # x is already ln_f-normalized bf16; contract wte's last dim (== x @ wte_tile.T).
    logits = jax.lax.dot_general(
        x_ref[...], wte_ref[...],
        dimension_numbers=(((1,), (1,)), ((), ())),
        preferred_element_type=jnp.float32)                        # (B*T, tv) f32
    logits_ref[...] = logits

    # Online logsumexp over vocab tiles (mask vocab padding with -inf).
    col = vt * tv + jax.lax.broadcasted_iota(jnp.int32, logits.shape, 1)
    lm = jnp.where(col < v_actual, logits, -jnp.inf)
    m_new = jnp.maximum(m_sc[...], jnp.max(lm, axis=-1, keepdims=True))
    l_sc[...] = (l_sc[...] * jnp.exp(m_sc[...] - m_new)
                 + jnp.sum(jnp.exp(lm - m_new), axis=-1, keepdims=True))
    m_sc[...] = m_new

    @pl.when(vt == pl.num_programs(0) - 1)
    def _():
        lse_ref[...] = m_sc[...] + jnp.log(l_sc[...])


def run_head(xn_bf16, wte_bf16, *, tile_v=1024):
    B, T, C = xn_bf16.shape
    BT = B * T
    V = wte_bf16.shape[0]
    tv = min(tile_v, _round_up(V, 128))
    Vp = _round_up(V, tv)
    if Vp != V:
        wte_bf16 = jnp.pad(wte_bf16, ((0, Vp - V), (0, 0)))
    x2 = xn_bf16.reshape(BT, C)

    est_vmem = (2 * tv * C * 2          # wte tile, double-buffered
                + 2 * BT * tv * 4       # logits output tile, double-buffered
                + 2 * BT * C * 2        # x
                + BT * tv * 4           # in-kernel f32 logits value
                + 4 * BT * 4)

    logits, lse = pl.pallas_call(
        partial(head_kernel, V),
        out_shape=(jax.ShapeDtypeStruct((BT, Vp), jnp.float32),
                   jax.ShapeDtypeStruct((BT, 1), jnp.float32)),
        grid=(Vp // tv,),
        in_specs=[
            pl.BlockSpec((BT, C), lambda vt: (0, 0)),
            pl.BlockSpec((tv, C), lambda vt: (vt, 0)),
        ],
        out_specs=(pl.BlockSpec((BT, tv), lambda vt: (0, vt)),
                   pl.BlockSpec((BT, 1), lambda vt: (0, 0))),
        scratch_shapes=[pltpu.VMEM((BT, 1), jnp.float32),
                        pltpu.VMEM((BT, 1), jnp.float32)],
        compiler_params=_compiler_params(("arbitrary",), est_vmem),
    )(x2, wte_bf16)

    logits = logits.reshape(B, T, Vp)[..., :V]
    lse = lse.reshape(B, T)
    return logits, lse


# --------------------------------------------------------------------------- #
# Parameters & forward                                                        #
# --------------------------------------------------------------------------- #
def init_params(key, *, vocab_size, block_size, n_layer, n_head, n_embed):
    C = n_embed
    L = n_layer
    std = 0.02
    kw, kp, kb = jax.random.split(key, 3)
    wte = (jax.random.normal(kw, (vocab_size, C)) * std).astype(jnp.float32)
    wpe = (jax.random.normal(kp, (block_size, C)) * std).astype(jnp.float32)

    bkeys = jax.random.split(kb, 4 * n_layer)

    def nrm(k, shape):
        return (jax.random.normal(k, shape) * std).astype(jnp.bfloat16)

    # Stacked per-layer weights: matmul weights bf16, biases / layernorm params f32.
    blocks = {
        "ln1_g": jnp.ones((L, 1, C), jnp.float32),
        "ln1_b": jnp.zeros((L, 1, C), jnp.float32),
        "w_attn": jnp.stack([nrm(bkeys[4 * i + 0], (C, 3 * C)) for i in range(L)]),
        "b_attn": jnp.zeros((L, 1, 3 * C), jnp.float32),
        "w_proj": jnp.stack([nrm(bkeys[4 * i + 1], (C, C)) for i in range(L)]),
        "b_proj": jnp.zeros((L, 1, C), jnp.float32),
        "ln2_g": jnp.ones((L, 1, C), jnp.float32),
        "ln2_b": jnp.zeros((L, 1, C), jnp.float32),
        "w_fc": jnp.stack([nrm(bkeys[4 * i + 2], (C, 4 * C)) for i in range(L)]),
        "b_fc": jnp.zeros((L, 1, 4 * C), jnp.float32),
        "w_fc2": jnp.stack([nrm(bkeys[4 * i + 3], (4 * C, C)) for i in range(L)]),
        "b_fc2": jnp.zeros((L, 1, C), jnp.float32),
    }
    return {
        "wte": wte,                                  # f32, used for embedding gather
        "wte_bf16": wte.astype(jnp.bfloat16),        # pre-cast once for the tied lm_head
        "wpe": wpe,
        "lnf_g": jnp.ones((1, C), jnp.float32),
        "lnf_b": jnp.zeros((1, C), jnp.float32),
        "blocks": blocks,
        "n_head": n_head,
    }


def gpt_denoiser_forward(params, idx, targets=None):
    wte = params["wte"]
    wpe = params["wpe"]
    B, T = idx.shape

    # Embedding gather + add (plain JAX glue; gather has no clean BlockSpec form).
    x = (wte[idx] + wpe[:T][None, :, :]).astype(jnp.float32)        # (B, T, C)

    # All transformer blocks + ln_f in one fused pallas_call (bf16 normalized output).
    xn = run_blocks(x, params["blocks"], params["lnf_g"], params["lnf_b"],
                    params["n_head"])

    # Tied lm_head (logits = ln_f(x) @ wte.T) with fused per-row logsumexp.
    logits, lse = run_head(xn, params["wte_bf16"])

    loss = None
    if targets is not None:
        # loss = mean over tokens of [logsumexp(logits) - logit[target]]
        tgt_logit = jnp.take_along_axis(logits, targets[..., None], axis=-1)[..., 0]
        loss = jnp.mean(lse - tgt_logit)             # F.cross_entropy mean reduction
    return logits, loss


if __name__ == "__main__":
    # Small config consistent with GPTDenoiser(Config(...)), lane-friendly dims.
    vocab_size = 512
    blk_size = 32
    n_layer = 2
    n_head = 4
    n_embed = 128
    B, T = 2, 16

    key = jax.random.PRNGKey(0)
    k_param, k_idx, k_tgt = jax.random.split(key, 3)
    params = init_params(k_param, vocab_size=vocab_size, block_size=blk_size,
                         n_layer=n_layer, n_head=n_head, n_embed=n_embed)

    idx = jax.random.randint(k_idx, (B, T), 0, vocab_size, dtype=jnp.int32)
    targets = jax.random.randint(k_tgt, (B, T), 0, vocab_size, dtype=jnp.int32)

    logits, loss = gpt_denoiser_forward(params, idx, targets)
    jax.block_until_ready(logits)
    jax.block_until_ready(loss)
    assert logits.shape == (B, T, vocab_size)
    assert loss.shape == ()
    assert bool(jnp.isfinite(loss))
    print("KERNEL_OK")
</pallas_src>

<mosaic_0001>
module attributes {stable_mosaic.version = 11 : i64} {
  func.func @blocks_kernel(%arg0: i32, %arg1: memref<2x16x128xf32, #tpu.memory_space<vmem>>, %arg2: memref<1x1x128xf32, #tpu.memory_space<vmem>>, %arg3: memref<1x1x128xf32, #tpu.memory_space<vmem>>, %arg4: memref<1x128x384xbf16, #tpu.memory_space<vmem>>, %arg5: memref<1x1x384xf32, #tpu.memory_space<vmem>>, %arg6: memref<1x128x128xbf16, #tpu.memory_space<vmem>>, %arg7: memref<1x1x128xf32, #tpu.memory_space<vmem>>, %arg8: memref<1x1x128xf32, #tpu.memory_space<vmem>>, %arg9: memref<1x1x128xf32, #tpu.memory_space<vmem>>, %arg10: memref<1x128x512xbf16, #tpu.memory_space<vmem>>, %arg11: memref<1x1x512xf32, #tpu.memory_space<vmem>>, %arg12: memref<1x512x128xbf16, #tpu.memory_space<vmem>>, %arg13: memref<1x1x128xf32, #tpu.memory_space<vmem>>, %arg14: memref<1x128xf32, #tpu.memory_space<vmem>>, %arg15: memref<1x128xf32, #tpu.memory_space<vmem>>, %arg16: memref<2x16x128xbf16, #tpu.memory_space<vmem>>, %arg17: memref<2x16x128xf32, #tpu.memory_space<vmem>>) attributes {dimension_semantics = [#tpu.dimension_semantics<arbitrary>], iteration_bounds = array<i64: 2>, scalar_prefetch = 0 : i64, scratch_operands = 1 : i64, tpu.core_type = #tpu.core_type<tc>, window_params = [{pipeline_mode = #tpu.pipeline_mode<synchronous>, transform_indices = @transform_0, window_bounds = array<i64: 2, 16, 128>}, {transform_indices = @transform_1, window_bounds = array<i64: 1, 1, 128>}, {transform_indices = @transform_2, window_bounds = array<i64: 1, 1, 128>}, {transform_indices = @transform_3, window_bounds = array<i64: 1, 128, 384>}, {transform_indices = @transform_4, window_bounds = array<i64: 1, 1, 384>}, {transform_indices = @transform_5, window_bounds = array<i64: 1, 128, 128>}, {transform_indices = @transform_6, window_bounds = array<i64: 1, 1, 128>}, {transform_indices = @transform_7, window_bounds = array<i64: 1, 1, 128>}, {transform_indices = @transform_8, window_bounds = array<i64: 1, 1, 128>}, {transform_indices = @transform_9, window_bounds = array<i64: 1, 128, 512>}, {transform_indices = @transform_10, window_bounds = array<i64: 1, 1, 512>}, {transform_indices = @transform_11, window_bounds = array<i64: 1, 512, 128>}, {transform_indices = @transform_12, window_bounds = array<i64: 1, 1, 128>}, {pipeline_mode = #tpu.pipeline_mode<synchronous>, transform_indices = @transform_13, window_bounds = array<i64: 1, 128>}, {pipeline_mode = #tpu.pipeline_mode<synchronous>, transform_indices = @transform_14, window_bounds = array<i64: 1, 128>}, {pipeline_mode = #tpu.pipeline_mode<synchronous>, transform_indices = @transform_15, window_bounds = array<i64: 2, 16, 128>}]} {
    %c0_i32 = arith.constant 0 : i32
    %0 = arith.cmpi eq, %arg0, %c0_i32 : i32
    %1 = arith.extui %0 : i1 to i32
    %c0_i32_0 = arith.constant 0 : i32
    %2 = arith.cmpi ne, %1, %c0_i32_0 : i32
    scf.if %2 {
      %c0_64 = arith.constant 0 : index
      %c0_65 = arith.constant 0 : index
      %c0_66 = arith.constant 0 : index
      %174 = vector.load %arg1[%c0_64, %c0_65, %c0_66] : memref<2x16x128xf32, #tpu.memory_space<vmem>>, vector<2x16x128xf32>
      %c0_67 = arith.constant 0 : index
      %c0_68 = arith.constant 0 : index
      %c0_69 = arith.constant 0 : index
      %175 = vector.load %arg17[%c0_67, %c0_68, %c0_69] : memref<2x16x128xf32, #tpu.memory_space<vmem>>, vector<2x16x128xf32>
      tpu.vector_store %arg17[%c0_67, %c0_68, %c0_69], %174 {strides = array<i32>} : memref<2x16x128xf32, #tpu.memory_space<vmem>>, vector<2x16x128xf32>,
    } else {
    }
    %c0 = arith.constant 0 : index
    %c0_1 = arith.constant 0 : index
    %c0_2 = arith.constant 0 : index
    %3 = vector.load %arg17[%c0, %c0_1, %c0_2] : memref<2x16x128xf32, #tpu.memory_space<vmem>>, vector<2x16x128xf32>
    %4 = vector.shape_cast %3 : vector<2x16x128xf32> to vector<32x128xf32>
    %c0_3 = arith.constant 0 : index
    %c0_4 = arith.constant 0 : index
    %c0_5 = arith.constant 0 : index
    %5 = vector.load %arg2[%c0_3, %c0_4, %c0_5] : memref<1x1x128xf32, #tpu.memory_space<vmem>>, vector<1x1x128xf32>
    %6 = vector.shape_cast %5 : vector<1x1x128xf32> to vector<1x128xf32>
    %c0_6 = arith.constant 0 : index
    %c0_7 = arith.constant 0 : index
    %c0_8 = arith.constant 0 : index
    %7 = vector.load %arg3[%c0_6, %c0_7, %c0_8] : memref<1x1x128xf32, #tpu.memory_space<vmem>>, vector<1x1x128xf32>
    %8 = vector.shape_cast %7 : vector<1x1x128xf32> to vector<1x128xf32>
    %cst = arith.constant dense<0.000000e+00> : vector<32xf32>
    %9 = vector.multi_reduction <add>, %4, %cst [1] : vector<32x128xf32> to vector<32xf32>
    %10 = vector.shape_cast %9 : vector<32xf32> to vector<32x1xf32>
    %cst_9 = arith.constant 1.280000e+02 : f32
    %11 = vector.broadcast %cst_9 : f32 to vector<32x1xf32>
    %12 = arith.divf %10, %11 : vector<32x1xf32>
    %13 = vector.broadcast %12 : vector<32x1xf32> to vector<32x128xf32>
    %14 = arith.subf %4, %13 : vector<32x128xf32>
    %15 = arith.mulf %14, %14 : vector<32x128xf32>
    %cst_10 = arith.constant dense<0.000000e+00> : vector<32xf32>
    %16 = vector.multi_reduction <add>, %15, %cst_10 [1] : vector<32x128xf32> to vector<32xf32>
    %17 = vector.shape_cast %16 : vector<32xf32> to vector<32x1xf32>
    %cst_11 = arith.constant 1.280000e+02 : f32
    %18 = vector.broadcast %cst_11 : f32 to vector<32x1xf32>
    %19 = arith.divf %17, %18 : vector<32x1xf32>
    %20 = vector.broadcast %12 : vector<32x1xf32> to vector<32x128xf32>
    %21 = arith.subf %4, %20 : vector<32x128xf32>
    %cst_12 = arith.constant 9.99999974E-6 : f32
    %22 = vector.broadcast %cst_12 : f32 to vector<32x1xf32>
    %23 = arith.addf %19, %22 : vector<32x1xf32>
    %24 = math.rsqrt %23 : vector<32x1xf32>
    %25 = vector.broadcast %24 : vector<32x1xf32> to vector<32x128xf32>
    %26 = arith.mulf %21, %25 : vector<32x128xf32>
    %27 = vector.broadcast %6 : vector<1x128xf32> to vector<32x128xf32>
    %28 = arith.mulf %26, %27 : vector<32x128xf32>
    %29 = vector.broadcast %8 : vector<1x128xf32> to vector<32x128xf32>
    %30 = arith.addf %28, %29 : vector<32x128xf32>
    %31 = arith.truncf %30 : vector<32x128xf32> to vector<32x128xbf16>
    %c0_13 = arith.constant 0 : index
    %c0_14 = arith.constant 0 : index
    %c0_15 = arith.constant 0 : index
    %32 = vector.load %arg4[%c0_13, %c0_14, %c0_15] : memref<1x128x384xbf16, #tpu.memory_space<vmem>>, vector<1x128x384xbf16>
    %33 = vector.shape_cast %32 : vector<1x128x384xbf16> to vector<128x384xbf16>
    %cst_16 = arith.constant dense<0.000000e+00> : vector<32x384xf32>
    %34 = tpu.matmul %31, %33, %cst_16 {dimension_numbers = #tpu.dot_dimension_numbers<[1], [0], [0], [1], [0, 0, 1, 1], [], []>} : vector<32x128xbf16>, vector<128x384xbf16>, vector<32x384xf32> -> vector<32x384xf32>
    %c0_17 = arith.constant 0 : index
    %c0_18 = arith.constant 0 : index
    %c0_19 = arith.constant 0 : index
    %35 = vector.load %arg5[%c0_17, %c0_18, %c0_19] : memref<1x1x384xf32, #tpu.memory_space<vmem>>, vector<1x1x384xf32>
    %36 = vector.shape_cast %35 : vector<1x1x384xf32> to vector<1x384xf32>
    %37 = vector.broadcast %36 : vector<1x384xf32> to vector<32x384xf32>
    %38 = arith.addf %34, %37 : vector<32x384xf32>
    %39 = vector.extract_strided_slice %38 {offsets = [0, 0], sizes = [32, 128], strides = [1, 1]} : vector<32x384xf32> to vector<32x128xf32>
    %cst_20 = arith.constant 0.176776692 : f32
    %40 = vector.broadcast %cst_20 : f32 to vector<32x128xf32>
    %41 = arith.mulf %39, %40 : vector<32x128xf32>
    %42 = vector.extract_strided_slice %38 {offsets = [0, 128], sizes = [32, 128], strides = [1, 1]} : vector<32x384xf32> to vector<32x128xf32>
    %43 = vector.extract_strided_slice %38 {offsets = [0, 256], sizes = [32, 128], strides = [1, 1]} : vector<32x384xf32> to vector<32x128xf32>
    %44 = vector.extract_strided_slice %41 {offsets = [0, 0], sizes = [32, 32], strides = [1, 1]} : vector<32x128xf32> to vector<32x32xf32>
    %45 = arith.truncf %44 : vector<32x32xf32> to vector<32x32xbf16>
    %46 = vector.extract_strided_slice %41 {offsets = [0, 32], sizes = [32, 32], strides = [1, 1]} : vector<32x128xf32> to vector<32x32xf32>
    %47 = arith.truncf %46 : vector<32x32xf32> to vector<32x32xbf16>
    %48 = vector.extract_strided_slice %41 {offsets = [0, 64], sizes = [32, 32], strides = [1, 1]} : vector<32x128xf32> to vector<32x32xf32>
    %49 = arith.truncf %48 : vector<32x32xf32> to vector<32x32xbf16>
    %50 = vector.extract_strided_slice %41 {offsets = [0, 96], sizes = [32, 32], strides = [1, 1]} : vector<32x128xf32> to vector<32x32xf32>
    %51 = arith.truncf %50 : vector<32x32xf32> to vector<32x32xbf16>
    %52 = vector.shape_cast %45 : vector<32x32xbf16> to vector<1x32x32xbf16>
    %53 = vector.shape_cast %47 : vector<32x32xbf16> to vector<1x32x32xbf16>
    %54 = vector.shape_cast %49 : vector<32x32xbf16> to vector<1x32x32xbf16>
    %55 = vector.shape_cast %51 : vector<32x32xbf16> to vector<1x32x32xbf16>
    %56 = tpu.concatenate %52, %53, %54, %55 in 0 : vector<1x32x32xbf16>, vector<1x32x32xbf16>, vector<1x32x32xbf16>, vector<1x32x32xbf16> -> vector<4x32x32xbf16>
    %57 = vector.shape_cast %56 : vector<4x32x32xbf16> to vector<8x16x32xbf16>
    %58 = vector.extract_strided_slice %42 {offsets = [0, 0], sizes = [32, 32], strides = [1, 1]} : vector<32x128xf32> to vector<32x32xf32>
    %59 = arith.truncf %58 : vector<32x32xf32> to vector<32x32xbf16>
    %60 = vector.extract_strided_slice %42 {offsets = [0, 32], sizes = [32, 32], strides = [1, 1]} : vector<32x128xf32> to vector<32x32xf32>
    %61 = arith.truncf %60 : vector<32x32xf32> to vector<32x32xbf16>
    %62 = vector.extract_strided_slice %42 {offsets = [0, 64], sizes = [32, 32], strides = [1, 1]} : vector<32x128xf32> to vector<32x32xf32>
    %63 = arith.truncf %62 : vector<32x32xf32> to vector<32x32xbf16>
    %64 = vector.extract_strided_slice %42 {offsets = [0, 96], sizes = [32, 32], strides = [1, 1]} : vector<32x128xf32> to vector<32x32xf32>
    %65 = arith.truncf %64 : vector<32x32xf32> to vector<32x32xbf16>
    %66 = vector.shape_cast %59 : vector<32x32xbf16> to vector<1x32x32xbf16>
    %67 = vector.shape_cast %61 : vector<32x32xbf16> to vector<1x32x32xbf16>
    %68 = vector.shape_cast %63 : vector<32x32xbf16> to vector<1x32x32xbf16>
    %69 = vector.shape_cast %65 : vector<32x32xbf16> to vector<1x32x32xbf16>
    %70 = tpu.concatenate %66, %67, %68, %69 in 0 : vector<1x32x32xbf16>, vector<1x32x32xbf16>, vector<1x32x32xbf16>, vector<1x32x32xbf16> -> vector<4x32x32xbf16>
    %71 = vector.shape_cast %70 : vector<4x32x32xbf16> to vector<8x16x32xbf16>
    %72 = vector.extract_strided_slice %43 {offsets = [0, 0], sizes = [32, 32], strides = [1, 1]} : vector<32x128xf32> to vector<32x32xf32>
    %73 = arith.truncf %72 : vector<32x32xf32> to vector<32x32xbf16>
    %74 = vector.extract_strided_slice %43 {offsets = [0, 32], sizes = [32, 32], strides = [1, 1]} : vector<32x128xf32> to vector<32x32xf32>
    %75 = arith.truncf %74 : vector<32x32xf32> to vector<32x32xbf16>
    %76 = vector.extract_strided_slice %43 {offsets = [0, 64], sizes = [32, 32], strides = [1, 1]} : vector<32x128xf32> to vector<32x32xf32>
    %77 = arith.truncf %76 : vector<32x32xf32> to vector<32x32xbf16>
    %78 = vector.extract_strided_slice %43 {offsets = [0, 96], sizes = [32, 32], strides = [1, 1]} : vector<32x128xf32> to vector<32x32xf32>
    %79 = arith.truncf %78 : vector<32x32xf32> to vector<32x32xbf16>
    %80 = vector.shape_cast %73 : vector<32x32xbf16> to vector<1x32x32xbf16>
    %81 = vector.shape_cast %75 : vector<32x32xbf16> to vector<1x32x32xbf16>
    %82 = vector.shape_cast %77 : vector<32x32xbf16> to vector<1x32x32xbf16>
    %83 = vector.shape_cast %79 : vector<32x32xbf16> to vector<1x32x32xbf16>
    %84 = tpu.concatenate %80, %81, %82, %83 in 0 : vector<1x32x32xbf16>, vector<1x32x32xbf16>, vector<1x32x32xbf16>, vector<1x32x32xbf16> -> vector<4x32x32xbf16>
    %85 = vector.shape_cast %84 : vector<4x32x32xbf16> to vector<8x16x32xbf16>
    "tpu.trace_start"() <{level = 10 : i32, message = "nqd,nkd->nqk"}> : () -> ()
    %cst_21 = arith.constant dense<0.000000e+00> : vector<8x16x16xf32>
    %86 = tpu.matmul %57, %71, %cst_21 {dimension_numbers = #tpu.dot_dimension_numbers<[2], [2], [1], [1], [0, 0, 0, 1, 1, 1], [0], [0]>} : vector<8x16x32xbf16>, vector<8x16x32xbf16>, vector<8x16x16xf32> -> vector<8x16x16xf32>
    "tpu.trace_stop"() : () -> ()
    %cst_22 = arith.constant dense<0xFF800000> : vector<8x16xf32>
    %87 = vector.multi_reduction <maximumf>, %86, %cst_22 [2] : vector<8x16x16xf32> to vector<8x16xf32>
    %88 = vector.shape_cast %87 : vector<8x16xf32> to vector<8x16x1xf32>
    %89 = vector.broadcast %88 : vector<8x16x1xf32> to vector<8x16x16xf32>
    %90 = arith.subf %86, %89 : vector<8x16x16xf32>
    %91 = math.exp %90 : vector<8x16x16xf32>
    %cst_23 = arith.constant dense<0.000000e+00> : vector<8x16xf32>
    %92 = vector.multi_reduction <add>, %91, %cst_23 [2] : vector<8x16x16xf32> to vector<8x16xf32>
    %93 = vector.shape_cast %92 : vector<8x16xf32> to vector<8x16x1xf32>
    %94 = tpu.reciprocal %93 {approx = true} : vector<8x16x1xf32> -> vector<8x16x1xf32>
    %95 = vector.broadcast %94 : vector<8x16x1xf32> to vector<8x16x16xf32>
    %96 = arith.mulf %91, %95 : vector<8x16x16xf32>
    %97 = arith.truncf %96 : vector<8x16x16xf32> to vector<8x16x16xbf16>
    "tpu.trace_start"() <{level = 10 : i32, message = "nqk,nkd->nqd"}> : () -> ()
    %cst_24 = arith.constant dense<0.000000e+00> : vector<8x16x32xf32>
    %98 = tpu.matmul %97, %85, %cst_24 {dimension_numbers = #tpu.dot_dimension_numbers<[2], [1], [1], [2], [0, 0, 0, 1, 1, 2], [0], [0]>} : vector<8x16x16xbf16>, vector<8x16x32xbf16>, vector<8x16x32xf32> -> vector<8x16x32xf32>
    "tpu.trace_stop"() : () -> ()
    %99 = vector.shape_cast %98 : vector<8x16x32xf32> to vector<4x32x32xf32>
    %100 = vector.extract_strided_slice %99 {offsets = [0, 0, 0], sizes = [1, 32, 32], strides = [1, 1, 1]} : vector<4x32x32xf32> to vector<1x32x32xf32>
    %101 = vector.shape_cast %100 : vector<1x32x32xf32> to vector<32x32xf32>
    %102 = vector.extract_strided_slice %99 {offsets = [1, 0, 0], sizes = [1, 32, 32], strides = [1, 1, 1]} : vector<4x32x32xf32> to vector<1x32x32xf32>
    %103 = vector.shape_cast %102 : vector<1x32x32xf32> to vector<32x32xf32>
    %104 = vector.extract_strided_slice %99 {offsets = [2, 0, 0], sizes = [1, 32, 32], strides = [1, 1, 1]} : vector<4x32x32xf32> to vector<1x32x32xf32>
    %105 = vector.shape_cast %104 : vector<1x32x32xf32> to vector<32x32xf32>
    %106 = vector.extract_strided_slice %99 {offsets = [3, 0, 0], sizes = [1, 32, 32], strides = [1, 1, 1]} : vector<4x32x32xf32> to vector<1x32x32xf32>
    %107 = vector.shape_cast %106 : vector<1x32x32xf32> to vector<32x32xf32>
    %108 = tpu.concatenate %101, %103, %105, %107 in 1 : vector<32x32xf32>, vector<32x32xf32>, vector<32x32xf32>, vector<32x32xf32> -> vector<32x128xf32>
    %109 = arith.truncf %108 : vector<32x128xf32> to vector<32x128xbf16>
    %c0_25 = arith.constant 0 : index
    %c0_26 = arith.constant 0 : index
    %c0_27 = arith.constant 0 : index
    %110 = vector.load %arg6[%c0_25, %c0_26, %c0_27] : memref<1x128x128xbf16, #tpu.memory_space<vmem>>, vector<1x128x128xbf16>
    %111 = vector.shape_cast %110 : vector<1x128x128xbf16> to vector<128x128xbf16>
    %cst_28 = arith.constant dense<0.000000e+00> : vector<32x128xf32>
    %112 = tpu.matmul %109, %111, %cst_28 {dimension_numbers = #tpu.dot_dimension_numbers<[1], [0], [0], [1], [0, 0, 1, 1], [], []>} : vector<32x128xbf16>, vector<128x128xbf16>, vector<32x128xf32> -> vector<32x128xf32>
    %c0_29 = arith.constant 0 : index
    %c0_30 = arith.constant 0 : index
    %c0_31 = arith.constant 0 : index
    %113 = vector.load %arg7[%c0_29, %c0_30, %c0_31] : memref<1x1x128xf32, #tpu.memory_space<vmem>>, vector<1x1x128xf32>
    %114 = vector.shape_cast %113 : vector<1x1x128xf32> to vector<1x128xf32>
    %115 = vector.broadcast %114 : vector<1x128xf32> to vector<32x128xf32>
    %116 = arith.addf %112, %115 : vector<32x128xf32>
    %117 = arith.addf %4, %116 : vector<32x128xf32>
    %c0_32 = arith.constant 0 : index
    %c0_33 = arith.constant 0 : index
    %c0_34 = arith.constant 0 : index
    %118 = vector.load %arg8[%c0_32, %c0_33, %c0_34] : memref<1x1x128xf32, #tpu.memory_space<vmem>>, vector<1x1x128xf32>
    %119 = vector.shape_cast %118 : vector<1x1x128xf32> to vector<1x128xf32>
    %c0_35 = arith.constant 0 : index
    %c0_36 = arith.constant 0 : index
    %c0_37 = arith.constant 0 : index
    %120 = vector.load %arg9[%c0_35, %c0_36, %c0_37] : memref<1x1x128xf32, #tpu.memory_space<vmem>>, vector<1x1x128xf32>
    %121 = vector.shape_cast %120 : vector<1x1x128xf32> to vector<1x128xf32>
    %cst_38 = arith.constant dense<0.000000e+00> : vector<32xf32>
    %122 = vector.multi_reduction <add>, %117, %cst_38 [1] : vector<32x128xf32> to vector<32xf32>
    %123 = vector.shape_cast %122 : vector<32xf32> to vector<32x1xf32>
    %cst_39 = arith.constant 1.280000e+02 : f32
    %124 = vector.broadcast %cst_39 : f32 to vector<32x1xf32>
    %125 = arith.divf %123, %124 : vector<32x1xf32>
    %126 = vector.broadcast %125 : vector<32x1xf32> to vector<32x128xf32>
    %127 = arith.subf %117, %126 : vector<32x128xf32>
    %128 = arith.mulf %127, %127 : vector<32x128xf32>
    %cst_40 = arith.constant dense<0.000000e+00> : vector<32xf32>
    %129 = vector.multi_reduction <add>, %128, %cst_40 [1] : vector<32x128xf32> to vector<32xf32>
    %130 = vector.shape_cast %129 : vector<32xf32> to vector<32x1xf32>
    %cst_41 = arith.constant 1.280000e+02 : f32
    %131 = vector.broadcast %cst_41 : f32 to vector<32x1xf32>
    %132 = arith.divf %130, %131 : vector<32x1xf32>
    %133 = vector.broadcast %125 : vector<32x1xf32> to vector<32x128xf32>
    %134 = arith.subf %117, %133 : vector<32x128xf32>
    %cst_42 = arith.constant 9.99999974E-6 : f32
    %135 = vector.broadcast %cst_42 : f32 to vector<32x1xf32>
    %136 = arith.addf %132, %135 : vector<32x1xf32>
    %137 = math.rsqrt %136 : vector<32x1xf32>
    %138 = vector.broadcast %137 : vector<32x1xf32> to vector<32x128xf32>
    %139 = arith.mulf %134, %138 : vector<32x128xf32>
    %140 = vector.broadcast %119 : vector<1x128xf32> to vector<32x128xf32>
    %141 = arith.mulf %139, %140 : vector<32x128xf32>
    %142 = vector.broadcast %121 : vector<1x128xf32> to vector<32x128xf32>
    %143 = arith.addf %141, %142 : vector<32x128xf32>
    %144 = arith.truncf %143 : vector<32x128xf32> to vector<32x128xbf16>
    %c0_43 = arith.constant 0 : index
    %c0_44 = arith.constant 0 : index
    %c0_45 = arith.constant 0 : index
    %145 = vector.load %arg10[%c0_43, %c0_44, %c0_45] : memref<1x128x512xbf16, #tpu.memory_space<vmem>>, vector<1x128x512xbf16>
    %146 = vector.shape_cast %145 : vector<1x128x512xbf16> to vector<128x512xbf16>
    %cst_46 = arith.constant dense<0.000000e+00> : vector<32x512xf32>
    %147 = tpu.matmul %144, %146, %cst_46 {dimension_numbers = #tpu.dot_dimension_numbers<[1], [0], [0], [1], [0, 0, 1, 1], [], []>} : vector<32x128xbf16>, vector<128x512xbf16>, vector<32x512xf32> -> vector<32x512xf32>
    %c0_47 = arith.constant 0 : index
    %c0_48 = arith.constant 0 : index
    %c0_49 = arith.constant 0 : index
    %148 = vector.load %arg11[%c0_47, %c0_48, %c0_49] : memref<1x1x512xf32, #tpu.memory_space<vmem>>, vector<1x1x512xf32>
    %149 = vector.shape_cast %148 : vector<1x1x512xf32> to vector<1x512xf32>
    %150 = vector.broadcast %149 : vector<1x512xf32> to vector<32x512xf32>
    %151 = arith.addf %147, %150 : vector<32x512xf32>
    %cst_50 = arith.constant 5.000000e-01 : f32
    %152 = vector.broadcast %cst_50 : f32 to vector<32x512xf32>
    %153 = arith.mulf %152, %151 : vector<32x512xf32>
    %cst_51 = arith.constant 0.707106769 : f32
    %154 = vector.broadcast %cst_51 : f32 to vector<32x512xf32>
    %155 = arith.mulf %151, %154 : vector<32x512xf32>
    %156 = math.erf %155 : vector<32x512xf32>
    %cst_52 = arith.constant 1.000000e+00 : f32
    %157 = vector.broadcast %cst_52 : f32 to vector<32x512xf32>
    %158 = arith.addf %157, %156 : vector<32x512xf32>
    %159 = arith.mulf %153, %158 : vector<32x512xf32>
    %160 = arith.truncf %159 : vector<32x512xf32> to vector<32x512xbf16>
    %c0_53 = arith.constant 0 : index
    %c0_54 = arith.constant 0 : index
    %c0_55 = arith.constant 0 : index
    %161 = vector.load %arg12[%c0_53, %c0_54, %c0_55] : memref<1x512x128xbf16, #tpu.memory_space<vmem>>, vector<1x512x128xbf16>
    %162 = vector.shape_cast %161 : vector<1x512x128xbf16> to vector<512x128xbf16>
    %cst_56 = arith.constant dense<0.000000e+00> : vector<32x128xf32>
    %163 = tpu.matmul %160, %162, %cst_56 {dimension_numbers = #tpu.dot_dimension_numbers<[1], [0], [0], [1], [0, 0, 1, 1], [], []>} : vector<32x512xbf16>, vector<512x128xbf16>, vector<32x128xf32> -> vector<32x128xf32>
    %c0_57 = arith.constant 0 : index
    %c0_58 = arith.constant 0 : index
    %c0_59 = arith.constant 0 : index
    %164 = vector.load %arg13[%c0_57, %c0_58, %c0_59] : memref<1x1x128xf32, #tpu.memory_space<vmem>>, vector<1x1x128xf32>
    %165 = vector.shape_cast %164 : vector<1x1x128xf32> to vector<1x128xf32>
    %166 = vector.broadcast %165 : vector<1x128xf32> to vector<32x128xf32>
    %167 = arith.addf %163, %166 : vector<32x128xf32>
    %168 = arith.addf %117, %167 : vector<32x128xf32>
    %169 = vector.shape_cast %168 : vector<32x128xf32> to vector<2x16x128xf32>
    %c0_60 = arith.constant 0 : index
    %c0_61 = arith.constant 0 : index
    %c0_62 = arith.constant 0 : index
    %170 = vector.load %arg17[%c0_60, %c0_61, %c0_62] : memref<2x16x128xf32, #tpu.memory_space<vmem>>, vector<2x16x128xf32>
    tpu.vector_store %arg17[%c0_60, %c0_61, %c0_62], %169 {strides = array<i32>} : memref<2x16x128xf32, #tpu.memory_space<vmem>>, vector<2x16x128xf32>,
    %c1_i32 = arith.constant 1 : i32
    %171 = arith.cmpi eq, %arg0, %c1_i32 : i32
    %172 = arith.extui %171 : i1 to i32
    %c0_i32_63 = arith.constant 0 : i32
    %173 = arith.cmpi ne, %172, %c0_i32_63 : i32
    scf.if %173 {
      %c0_64 = arith.constant 0 : index
      %c0_65 = arith.constant 0 : index
      %174 = vector.load %arg14[%c0_64, %c0_65] : memref<1x128xf32, #tpu.memory_space<vmem>>, vector<1x128xf32>
      %c0_66 = arith.constant 0 : index
      %c0_67 = arith.constant 0 : index
      %175 = vector.load %arg15[%c0_66, %c0_67] : memref<1x128xf32, #tpu.memory_space<vmem>>, vector<1x128xf32>
      %cst_68 = arith.constant dense<0.000000e+00> : vector<32xf32>
      %176 = vector.multi_reduction <add>, %168, %cst_68 [1] : vector<32x128xf32> to vector<32xf32>
      %177 = vector.shape_cast %176 : vector<32xf32> to vector<32x1xf32>
      %cst_69 = arith.constant 1.280000e+02 : f32
      %178 = vector.broadcast %cst_69 : f32 to vector<32x1xf32>
      %179 = arith.divf %177, %178 : vector<32x1xf32>
      %180 = vector.broadcast %179 : vector<32x1xf32> to vector<32x128xf32>
      %181 = arith.subf %168, %180 : vector<32x128xf32>
      %182 = arith.mulf %181, %181 : vector<32x128xf32>
      %cst_70 = arith.constant dense<0.000000e+00> : vector<32xf32>
      %183 = vector.multi_reduction <add>, %182, %cst_70 [1] : vector<32x128xf32> to vector<32xf32>
      %184 = vector.shape_cast %183 : vector<32xf32> to vector<32x1xf32>
      %cst_71 = arith.constant 1.280000e+02 : f32
      %185 = vector.broadcast %cst_71 : f32 to vector<32x1xf32>
      %186 = arith.divf %184, %185 : vector<32x1xf32>
      %187 = vector.broadcast %179 : vector<32x1xf32> to vector<32x128xf32>
      %188 = arith.subf %168, %187 : vector<32x128xf32>
      %cst_72 = arith.constant 9.99999974E-6 : f32
      %189 = vector.broadcast %cst_72 : f32 to vector<32x1xf32>
      %190 = arith.addf %186, %189 : vector<32x1xf32>
      %191 = math.rsqrt %190 : vector<32x1xf32>
      %192 = vector.broadcast %191 : vector<32x1xf32> to vector<32x128xf32>
      %193 = arith.mulf %188, %192 : vector<32x128xf32>
      %194 = vector.broadcast %174 : vector<1x128xf32> to vector<32x128xf32>
      %195 = arith.mulf %193, %194 : vector<32x128xf32>
      %196 = vector.broadcast %175 : vector<1x128xf32> to vector<32x128xf32>
      %197 = arith.addf %195, %196 : vector<32x128xf32>
      %198 = vector.shape_cast %197 : vector<32x128xf32> to vector<2x16x128xf32>
      %199 = arith.truncf %198 : vector<2x16x128xf32> to vector<2x16x128xbf16>
      %c0_73 = arith.constant 0 : index
      %c0_74 = arith.constant 0 : index
      %c0_75 = arith.constant 0 : index
      %200 = vector.load %arg16[%c0_73, %c0_74, %c0_75] : memref<2x16x128xbf16, #tpu.memory_space<vmem>>, vector<2x16x128xbf16>
      tpu.vector_store %arg16[%c0_73, %c0_74, %c0_75], %199 {strides = array<i32>} : memref<2x16x128xbf16, #tpu.memory_space<vmem>>, vector<2x16x128xbf16>,
    } else {
    }
    return
  }
  func.func @transform_0(%arg0: i32) -> (i32, i32, i32) {
    %c0_i32 = arith.constant 0 : i32
    %c0_i32_0 = arith.constant 0 : i32
    %c0_i32_1 = arith.constant 0 : i32
    %c0_i32_2 = arith.constant 0 : i32
    return %c0_i32, %c0_i32_0, %c0_i32_1 : i32, i32, i32
  }
  func.func @transform_1(%arg0: i32) -> (i32, i32, i32) {
    %c0_i32 = arith.constant 0 : i32
    %c0_i32_0 = arith.constant 0 : i32
    %c0_i32_1 = arith.constant 0 : i32
    return %arg0, %c0_i32, %c0_i32_0 : i32, i32, i32
  }
  func.func @transform_2(%arg0: i32) -> (i32, i32, i32) {
    %c0_i32 = arith.constant 0 : i32
    %c0_i32_0 = arith.constant 0 : i32
    %c0_i32_1 = arith.constant 0 : i32
    return %arg0, %c0_i32, %c0_i32_0 : i32, i32, i32
  }
  func.func @transform_3(%arg0: i32) -> (i32, i32, i32) {
    %c0_i32 = arith.constant 0 : i32
    %c0_i32_0 = arith.constant 0 : i32
    %c0_i32_1 = arith.constant 0 : i32
    return %arg0, %c0_i32, %c0_i32_0 : i32, i32, i32
  }
  func.func @transform_4(%arg0: i32) -> (i32, i32, i32) {
    %c0_i32 = arith.constant 0 : i32
    %c0_i32_0 = arith.constant 0 : i32
    %c0_i32_1 = arith.constant 0 : i32
    return %arg0, %c0_i32, %c0_i32_0 : i32, i32, i32
  }
  func.func @transform_5(%arg0: i32) -> (i32, i32, i32) {
    %c0_i32 = arith.constant 0 : i32
    %c0_i32_0 = arith.constant 0 : i32
    %c0_i32_1 = arith.constant 0 : i32
    return %arg0, %c0_i32, %c0_i32_0 : i32, i32, i32
  }
  func.func @transform_6(%arg0: i32) -> (i32, i32, i32) {
    %c0_i32 = arith.constant 0 : i32
    %c0_i32_0 = arith.constant 0 : i32
    %c0_i32_1 = arith.constant 0 : i32
    return %arg0, %c0_i32, %c0_i32_0 : i32, i32, i32
  }
  func.func @transform_7(%arg0: i32) -> (i32, i32, i32) {
    %c0_i32 = arith.constant 0 : i32
    %c0_i32_0 = arith.constant 0 : i32
    %c0_i32_1 = arith.constant 0 : i32
    return %arg0, %c0_i32, %c0_i32_0 : i32, i32, i32
  }
  func.func @transform_8(%arg0: i32) -> (i32, i32, i32) {
    %c0_i32 = arith.constant 0 : i32
    %c0_i32_0 = arith.constant 0 : i32
    %c0_i32_1 = arith.constant 0 : i32
    return %arg0, %c0_i32, %c0_i32_0 : i32, i32, i32
  }
  func.func @transform_9(%arg0: i32) -> (i32, i32, i32) {
    %c0_i32 = arith.constant 0 : i32
    %c0_i32_0 = arith.constant 0 : i32
    %c0_i32_1 = arith.constant 0 : i32
    return %arg0, %c0_i32, %c0_i32_0 : i32, i32, i32
  }
  func.func @transform_10(%arg0: i32) -> (i32, i32, i32) {
    %c0_i32 = arith.constant 0 : i32
    %c0_i32_0 = arith.constant 0 : i32
    %c0_i32_1 = arith.constant 0 : i32
    return %arg0, %c0_i32, %c0_i32_0 : i32, i32, i32
  }
  func.func @transform_11(%arg0: i32) -> (i32, i32, i32) {
    %c0_i32 = arith.constant 0 : i32
    %c0_i32_0 = arith.constant 0 : i32
    %c0_i32_1 = arith.constant 0 : i32
    return %arg0, %c0_i32, %c0_i32_0 : i32, i32, i32
  }
  func.func @transform_12(%arg0: i32) -> (i32, i32, i32) {
    %c0_i32 = arith.constant 0 : i32
    %c0_i32_0 = arith.constant 0 : i32
    %c0_i32_1 = arith.constant 0 : i32
    return %arg0, %c0_i32, %c0_i32_0 : i32, i32, i32
  }
  func.func @transform_13(%arg0: i32) -> (i32, i32) {
    %c0_i32 = arith.constant 0 : i32
    %c0_i32_0 = arith.constant 0 : i32
    %c0_i32_1 = arith.constant 0 : i32
    return %c0_i32, %c0_i32_0 : i32, i32
  }
  func.func @transform_14(%arg0: i32) -> (i32, i32) {
    %c0_i32 = arith.constant 0 : i32
    %c0_i32_0 = arith.constant 0 : i32
    %c0_i32_1 = arith.constant 0 : i32
    return %c0_i32, %c0_i32_0 : i32, i32
  }
  func.func @transform_15(%arg0: i32) -> (i32, i32, i32) {
    %c0_i32 = arith.constant 0 : i32
    %c0_i32_0 = arith.constant 0 : i32
    %c0_i32_1 = arith.constant 0 : i32
    %c0_i32_2 = arith.constant 0 : i32
    return %c0_i32, %c0_i32_0, %c0_i32_1 : i32, i32, i32
  }
}

</mosaic_0001>

<llo_original>
// kernel: tpu_custom_call.1
$region0: #{tpu_custom_call.1}
  #allocation0 [shape = 'u32[]', space=smem, size = 0x4, offset = 0x4, fixed_abs, tag = 'smem constant byte address 0x4 - core index']
  #allocation1 [shape = 'u32[144,128]{1,0:T(1,128)}', space=vmem, size = 0x12000, scoped, tag = 'internal scratch']
  #allocation2 [shape = 'f32[2,16,128]{2,1,0:T(8,128)}', space=vmem, size = 0x4000, scoped, tag = 'scratch operand']
  %s0 = inlined_call_operand.hbm [shape: f32[2,16,128], index: 0, kind: input, shape index: {}]
  %s1 = inlined_call_operand.hbm [shape: f32[2,1,128], index: 1, kind: input, shape index: {}]
  %s2 = inlined_call_operand.hbm [shape: f32[2,1,128], index: 2, kind: input, shape index: {}]
  %s3 = inlined_call_operand.hbm [shape: bf16[2,128,384], index: 3, kind: input, shape index: {}]
  %s4 = inlined_call_operand.vmem [shape: f32[2,1,384], index: 4, kind: input, shape index: {}]
  %s5 = inlined_call_operand.hbm [shape: bf16[2,128,128], index: 5, kind: input, shape index: {}]
  %s6 = inlined_call_operand.vmem [shape: f32[2,1,128], index: 6, kind: input, shape index: {}]
  %s7 = inlined_call_operand.vmem [shape: f32[2,1,128], index: 7, kind: input, shape index: {}]
  %s8 = inlined_call_operand.vmem [shape: f32[2,1,128], index: 8, kind: input, shape index: {}]
  %s9 = inlined_call_operand.hbm [shape: bf16[2,128,512], index: 9, kind: input, shape index: {}]
  %s10 = inlined_call_operand.vmem [shape: f32[2,1,512], index: 10, kind: input, shape index: {}]
  %s11 = inlined_call_operand.hbm [shape: bf16[2,512,128], index: 11, kind: input, shape index: {}]
  %s12 = inlined_call_operand.vmem [shape: f32[2,1,128], index: 12, kind: input, shape index: {}]
  %s13 = inlined_call_operand.vmem [shape: f32[1,128], index: 13, kind: input, shape index: {}]
  %s14 = inlined_call_operand.vmem [shape: f32[1,128], index: 14, kind: input, shape index: {}]
  %s15 = inlined_call_operand.hbm [shape: bf16[2,16,128], index: 15, kind: output, shape index: {}]
  %s16 = sld [smem:[#allocation0]]
  $region129: #{tpu_custom_call.1} parent=0
    _
  %s18 = ssub.s32 1, %s16
  %s19 = scalar_select 0, %s18, %s16
  $region1: #{tpu_custom_call.1} parent=0
    #allocation3 [shape = 'u8[16384]{0}', space=vmem, size = 0x4000, scoped, tag = 'input window, operand 0, single buffered']
    #allocation4 [shape = 's32[2]{0}', space=sflag, size = 0x8, scoped, tag = 'scoped memory for tpu_custom_call.1']
    #allocation5 [shape = 's32[2]{0}', space=sflag, size = 0x8, scoped, tag = 'scoped memory for tpu_custom_call.1']
    #allocation6 [shape = 'u8[1024]{0}', space=vmem, size = 0x400, scoped, tag = 'input window, operand 1']
    #allocation7 [shape = 's32[2]{0}', space=sflag, size = 0x8, scoped, tag = 'scoped memory for tpu_custom_call.1']
    #allocation8 [shape = 'u8[1024]{0}', space=vmem, size = 0x400, scoped, tag = 'input window, operand 2']
    #allocation9 [shape = 'u8[196608]{0}', space=vmem, size = 0x30000, scoped, tag = 'input window, operand 3']
    #allocation10 [shape = 's32[2]{0}', space=sflag, size = 0x8, scoped, tag = 'scoped memory for tpu_custom_call.1']
    #allocation11 [shape = 'u8[65536]{0}', space=vmem, size = 0x10000, scoped, tag = 'input window, operand 5']
    #allocation12 [shape = 'u8[262144]{0}', space=vmem, size = 0x40000, scoped, tag = 'input window, operand 9']
    #allocation13 [shape = 's32[2]{0}', space=sflag, size = 0x8, scoped, tag = 'scoped memory for tpu_custom_call.1']
    #allocation14 [shape = 'u8[262144]{0}', space=vmem, size = 0x40000, scoped, tag = 'input window, operand 11']
    #allocation15 [shape = 'u8[8192]{0}', space=vmem, size = 0x2000, scoped, tag = 'output window, operand 0, single buffered']
    %20 = vsyncpa [#allocation4], 0
    %21 = vsyncpa [#allocation7], 0
    %s22 = scalar_lea.sflag [#allocation7], 1
    %23 = vsyncpa %s22, 0
    %24 = vsyncpa [#allocation10], 0
    %s25 = scalar_lea.sflag [#allocation10], 1
    %26 = vsyncpa %s25, 0
    %27 = vsyncpa [#allocation13], 0
    %s28 = scalar_lea.sflag [#allocation13], 1
    %29 = vsyncpa %s28, 0
    %30 = vsyncpa [#allocation5], 0
    loop: start=0, step=1, limit=4
    $region2: #{tpu_custom_call.1} parent=1 // loop_pre_header
      _
    $region3: #{tpu_custom_call.1} parent=1 // loop_header
      %s32 = sphi 0, %s36
      %p33 = scmp.ge.s32.totalorder %s32, 4
      %s40 = sphi 0, %s40
      %s42 = sphi 0, %s40
      %s43 = sphi 0, %s42
      %s57 = sphi 0, %s43
      %s63 = sphi 0, %s65
      %s66 = sphi 0, %s63
      %s67 = sphi 0, %s66
      %s83 = sphi 0, %s67
      %s89 = sphi 0, %s91
      %s92 = sphi 0, %s89
      %s93 = sphi 0, %s92
      %s109 = sphi 0, %s93
      %s115 = sphi 0, %s117
      %s118 = sphi 0, %s115
      %s119 = sphi 0, %s118
      %s135 = sphi 0, %s119
      %s141 = sphi 0, %s143
      %s144 = sphi 0, %s141
      %s145 = sphi 0, %s144
      %s161 = sphi 0, %s145
      %s167 = sphi 0, %s169
      %s170 = sphi 0, %s167
      %s171 = sphi 0, %s170
      %s187 = sphi 0, %s171
      %s193 = sphi 0, %s195
      %s196 = sphi 0, %s193
      %s197 = sphi 0, %s196
      %s213 = sphi 0, %s197
      %s219 = sphi 0, %s221
      %s222 = sphi 0, %s219
      %s223 = sphi 0, %s222
      %s239 = sphi 0, %s223
      %s245 = sphi 0, %s247
      %s248 = sphi 0, %s245
      %s249 = sphi 0, %s248
      %s265 = sphi 0, %s249
      %s271 = sphi 0, %s273
      %s274 = sphi 0, %s271
      %s275 = sphi 0, %s274
      %s291 = sphi 0, %s275
      %s297 = sphi 0, %s299
      %s300 = sphi 0, %s297
      %s301 = sphi 0, %s300
      %s317 = sphi 0, %s301
      %s323 = sphi 0, %s325
      %s326 = sphi 0, %s323
      %s327 = sphi 0, %s326
      %s343 = sphi 0, %s327
      %s349 = sphi 0, %s351
      %s352 = sphi 0, %s349
      %s353 = sphi 0, %s352
      %s369 = sphi 0, %s353
      %s373 = sphi 0, %s373
      %s375 = sphi 0, %s373
      %s376 = sphi 0, %s375
      %s390 = sphi 0, %s376
      %s394 = sphi 0, %s394
      %s396 = sphi 0, %s394
      %s397 = sphi 0, %s396
      %s411 = sphi 0, %s397
      %s415 = sphi 0, %s415
      %s417 = sphi 0, %s415
      %s418 = sphi 0, %s417
      %s432 = sphi 0, %s418
    $region4: #{tpu_custom_call.1} parent=1 // loop_header_branch
      %35 = sbr.rel (%p33) target = $region8
    $region5: #{tpu_custom_call.1} parent=1 // loop_body
      %s37 = ssub.s32 %s32, 1
      %s38 = ssub.s32 %s32, 2
      %s39 = sadd.s32 %s32, 1
      %s41 = sadd.s32 %s40, 1
      %p44 = scmp.eq.s32.totalorder %s32, 1
      %p45 = scmp.ne.s32.totalorder %s40, %s42
      %p46 = scmp.eq.s32.totalorder %s32, 0
      %p47 = por %p45, %p46
      %p48 = scmp.ne.s32.totalorder %s40, %s42
      %p49 = scmp.eq.s32.totalorder %s37, 1
      %p50 = por %p48, %p49
      %p51 = scmp.ne.s32.totalorder %s42, %s43
      %p52 = scmp.eq.s32.totalorder %s37, 0
      %p53 = por %p51, %p52
      %p54 = scmp.ne.s32.totalorder %s42, %s43
      %p55 = scmp.eq.s32.totalorder %s38, 1
      %p56 = por %p54, %p55
      %p58 = scmp.ne.s32.totalorder %s43, %s57
      %p59 = scmp.eq.s32.totalorder %s38, 0
      %p60 = por %p58, %p59
      %s61 = ssub.s32 %s32, %s39
      %p62 = scmp.eq.s32.totalorder %s61, 0
      %s64 = sadd.s32 %s63, 1
      %s65 = scalar_select %p62, %s63, %s64
      %p68 = pneg %p62
      %p69 = scmp.eq.s32.totalorder %s32, 1
      %p70 = por %p68, %p69
      %p71 = scmp.ne.s32.totalorder %s63, %s66
      %p72 = scmp.eq.s32.totalorder %s32, 0
      %p73 = por %p71, %p72
      %p74 = scmp.ne.s32.totalorder %s63, %s66
      %p75 = scmp.eq.s32.totalorder %s37, 1
      %p76 = por %p74, %p75
      %p77 = scmp.ne.s32.totalorder %s66, %s67
      %p78 = scmp.eq.s32.totalorder %s37, 0
      %p79 = por %p77, %p78
      %p80 = scmp.ne.s32.totalorder %s66, %s67
      %p81 = scmp.eq.s32.totalorder %s38, 1
      %p82 = por %p80, %p81
      %p84 = scmp.ne.s32.totalorder %s67, %s83
      %p85 = scmp.eq.s32.totalorder %s38, 0
      %p86 = por %p84, %p85
      %s87 = ssub.s32 %s32, %s39
      %p88 = scmp.eq.s32.totalorder %s87, 0
      %s90 = sadd.s32 %s89, 1
      %s91 = scalar_select %p88, %s89, %s90
      %p94 = pneg %p88
      %p95 = scmp.eq.s32.totalorder %s32, 1
      %p96 = por %p94, %p95
      %p97 = scmp.ne.s32.totalorder %s89, %s92
      %p98 = scmp.eq.s32.totalorder %s32, 0
      %p99 = por %p97, %p98
      %p100 = scmp.ne.s32.totalorder %s89, %s92
      %p101 = scmp.eq.s32.totalorder %s37, 1
      %p102 = por %p100, %p101
      %p103 = scmp.ne.s32.totalorder %s92, %s93
      %p104 = scmp.eq.s32.totalorder %s37, 0
      %p105 = por %p103, %p104
      %p106 = scmp.ne.s32.totalorder %s92, %s93
      %p107 = scmp.eq.s32.totalorder %s38, 1
      %p108 = por %p106, %p107
      %p110 = scmp.ne.s32.totalorder %s93, %s109
      %p111 = scmp.eq.s32.totalorder %s38, 0
      %p112 = por %p110, %p111
      %s113 = ssub.s32 %s32, %s39
      %p114 = scmp.eq.s32.totalorder %s113, 0
      %s116 = sadd.s32 %s115, 1
      %s117 = scalar_select %p114, %s115, %s116
      %p120 = pneg %p114
      %p121 = scmp.eq.s32.totalorder %s32, 1
      %p122 = por %p120, %p121
      %p123 = scmp.ne.s32.totalorder %s115, %s118
      %p124 = scmp.eq.s32.totalorder %s32, 0
      %p125 = por %p123, %p124
      %p126 = scmp.ne.s32.totalorder %s115, %s118
      %p127 = scmp.eq.s32.totalorder %s37, 1
      %p128 = por %p126, %p127
      %p129 = scmp.ne.s32.totalorder %s118, %s119
      %p130 = scmp.eq.s32.totalorder %s37, 0
      %p131 = por %p129, %p130
      %p132 = scmp.ne.s32.totalorder %s118, %s119
      %p133 = scmp.eq.s32.totalorder %s38, 1
      %p134 = por %p132, %p133
      %p136 = scmp.ne.s32.totalorder %s119, %s135
      %p137 = scmp.eq.s32.totalorder %s38, 0
      %p138 = por %p136, %p137
      %s139 = ssub.s32 %s32, %s39
      %p140 = scmp.eq.s32.totalorder %s139, 0
      %s142 = sadd.s32 %s141, 1
      %s143 = scalar_select %p140, %s141, %s142
      %p146 = pneg %p140
      %p147 = scmp.eq.s32.totalorder %s32, 1
      %p148 = por %p146, %p147
      %p149 = scmp.ne.s32.totalorder %s141, %s144
      %p150 = scmp.eq.s32.totalorder %s32, 0
      %p151 = por %p149, %p150
      %p152 = scmp.ne.s32.totalorder %s141, %s144
      %p153 = scmp.eq.s32.totalorder %s37, 1
      %p154 = por %p152, %p153
      %p155 = scmp.ne.s32.totalorder %s144, %s145
      %p156 = scmp.eq.s32.totalorder %s37, 0
      %p157 = por %p155, %p156
      %p158 = scmp.ne.s32.totalorder %s144, %s145
      %p159 = scmp.eq.s32.totalorder %s38, 1
      %p160 = por %p158, %p159
      %p162 = scmp.ne.s32.totalorder %s145, %s161
      %p163 = scmp.eq.s32.totalorder %s38, 0
      %p164 = por %p162, %p163
      %s165 = ssub.s32 %s32, %s39
      %p166 = scmp.eq.s32.totalorder %s165, 0
      %s168 = sadd.s32 %s167, 1
      %s169 = scalar_select %p166, %s167, %s168
      %p172 = pneg %p166
      %p173 = scmp.eq.s32.totalorder %s32, 1
      %p174 = por %p172, %p173
      %p175 = scmp.ne.s32.totalorder %s167, %s170
      %p176 = scmp.eq.s32.totalorder %s32, 0
      %p177 = por %p175, %p176
      %p178 = scmp.ne.s32.totalorder %s167, %s170
      %p179 = scmp.eq.s32.totalorder %s37, 1
      %p180 = por %p178, %p179
      %p181 = scmp.ne.s32.totalorder %s170, %s171
      %p182 = scmp.eq.s32.totalorder %s37, 0
      %p183 = por %p181, %p182
      %p184 = scmp.ne.s32.totalorder %s170, %s171
      %p185 = scmp.eq.s32.totalorder %s38, 1
      %p186 = por %p184, %p185
      %p188 = scmp.ne.s32.totalorder %s171, %s187
      %p189 = scmp.eq.s32.totalorder %s38, 0
      %p190 = por %p188, %p189
      %s191 = ssub.s32 %s32, %s39
      %p192 = scmp.eq.s32.totalorder %s191, 0
      %s194 = sadd.s32 %s193, 1
      %s195 = scalar_select %p192, %s193, %s194
      %p198 = pneg %p192
      %p199 = scmp.eq.s32.totalorder %s32, 1
      %p200 = por %p198, %p199
      %p201 = scmp.ne.s32.totalorder %s193, %s196
      %p202 = scmp.eq.s32.totalorder %s32, 0
      %p203 = por %p201, %p202
      %p204 = scmp.ne.s32.totalorder %s193, %s196
      %p205 = scmp.eq.s32.totalorder %s37, 1
      %p206 = por %p204, %p205
      %p207 = scmp.ne.s32.totalorder %s196, %s197
      %p208 = scmp.eq.s32.totalorder %s37, 0
      %p209 = por %p207, %p208
      %p210 = scmp.ne.s32.totalorder %s196, %s197
      %p211 = scmp.eq.s32.totalorder %s38, 1
      %p212 = por %p210, %p211
      %p214 = scmp.ne.s32.totalorder %s197, %s213
      %p215 = scmp.eq.s32.totalorder %s38, 0
      %p216 = por %p214, %p215
      %s217 = ssub.s32 %s32, %s39
      %p218 = scmp.eq.s32.totalorder %s217, 0
      %s220 = sadd.s32 %s219, 1
      %s221 = scalar_select %p218, %s219, %s220
      %p224 = pneg %p218
      %p225 = scmp.eq.s32.totalorder %s32, 1
      %p226 = por %p224, %p225
      %p227 = scmp.ne.s32.totalorder %s219, %s222
      %p228 = scmp.eq.s32.totalorder %s32, 0
      %p229 = por %p227, %p228
      %p230 = scmp.ne.s32.totalorder %s219, %s222
      %p231 = scmp.eq.s32.totalorder %s37, 1
      %p232 = por %p230, %p231
      %p233 = scmp.ne.s32.totalorder %s222, %s223
      %p234 = scmp.eq.s32.totalorder %s37, 0
      %p235 = por %p233, %p234
      %p236 = scmp.ne.s32.totalorder %s222, %s223
      %p237 = scmp.eq.s32.totalorder %s38, 1
      %p238 = por %p236, %p237
      %p240 = scmp.ne.s32.totalorder %s223, %s239
      %p241 = scmp.eq.s32.totalorder %s38, 0
      %p242 = por %p240, %p241
      %s243 = ssub.s32 %s32, %s39
      %p244 = scmp.eq.s32.totalorder %s243, 0
      %s246 = sadd.s32 %s245, 1
      %s247 = scalar_select %p244, %s245, %s246
      %p250 = pneg %p244
      %p251 = scmp.eq.s32.totalorder %s32, 1
      %p252 = por %p250, %p251
      %p253 = scmp.ne.s32.totalorder %s245, %s248
      %p254 = scmp.eq.s32.totalorder %s32, 0
      %p255 = por %p253, %p254
      %p256 = scmp.ne.s32.totalorder %s245, %s248
      %p257 = scmp.eq.s32.totalorder %s37, 1
      %p258 = por %p256, %p257
      %p259 = scmp.ne.s32.totalorder %s248, %s249
      %p260 = scmp.eq.s32.totalorder %s37, 0
      %p261 = por %p259, %p260
      %p262 = scmp.ne.s32.totalorder %s248, %s249
      %p263 = scmp.eq.s32.totalorder %s38, 1
      %p264 = por %p262, %p263
      %p266 = scmp.ne.s32.totalorder %s249, %s265
      %p267 = scmp.eq.s32.totalorder %s38, 0
      %p268 = por %p266, %p267
      %s269 = ssub.s32 %s32, %s39
      %p270 = scmp.eq.s32.totalorder %s269, 0
      %s272 = sadd.s32 %s271, 1
      %s273 = scalar_select %p270, %s271, %s272
      %p276 = pneg %p270
      %p277 = scmp.eq.s32.totalorder %s32, 1
      %p278 = por %p276, %p277
      %p279 = scmp.ne.s32.totalorder %s271, %s274
      %p280 = scmp.eq.s32.totalorder %s32, 0
      %p281 = por %p279, %p280
      %p282 = scmp.ne.s32.totalorder %s271, %s274
      %p283 = scmp.eq.s32.totalorder %s37, 1
      %p284 = por %p282, %p283
      %p285 = scmp.ne.s32.totalorder %s274, %s275
      %p286 = scmp.eq.s32.totalorder %s37, 0
      %p287 = por %p285, %p286
      %p288 = scmp.ne.s32.totalorder %s274, %s275
      %p289 = scmp.eq.s32.totalorder %s38, 1
      %p290 = por %p288, %p289
      %p292 = scmp.ne.s32.totalorder %s275, %s291
      %p293 = scmp.eq.s32.totalorder %s38, 0
      %p294 = por %p292, %p293
      %s295 = ssub.s32 %s32, %s39
      %p296 = scmp.eq.s32.totalorder %s295, 0
      %s298 = sadd.s32 %s297, 1
      %s299 = scalar_select %p296, %s297, %s298
      %p302 = pneg %p296
      %p303 = scmp.eq.s32.totalorder %s32, 1
      %p304 = por %p302, %p303
      %p305 = scmp.ne.s32.totalorder %s297, %s300
      %p306 = scmp.eq.s32.totalorder %s32, 0
      %p307 = por %p305, %p306
      %p308 = scmp.ne.s32.totalorder %s297, %s300
      %p309 = scmp.eq.s32.totalorder %s37, 1
      %p310 = por %p308, %p309
      %p311 = scmp.ne.s32.totalorder %s300, %s301
      %p312 = scmp.eq.s32.totalorder %s37, 0
      %p313 = por %p311, %p312
      %p314 = scmp.ne.s32.totalorder %s300, %s301
      %p315 = scmp.eq.s32.totalorder %s38, 1
      %p316 = por %p314, %p315
      %p318 = scmp.ne.s32.totalorder %s301, %s317
      %p319 = scmp.eq.s32.totalorder %s38, 0
      %p320 = por %p318, %p319
      %s321 = ssub.s32 %s32, %s39
      %p322 = scmp.eq.s32.totalorder %s321, 0
      %s324 = sadd.s32 %s323, 1
      %s325 = scalar_select %p322, %s323, %s324
      %p328 = pneg %p322
      %p329 = scmp.eq.s32.totalorder %s32, 1
      %p330 = por %p328, %p329
      %p331 = scmp.ne.s32.totalorder %s323, %s326
      %p332 = scmp.eq.s32.totalorder %s32, 0
      %p333 = por %p331, %p332
      %p334 = scmp.ne.s32.totalorder %s323, %s326
      %p335 = scmp.eq.s32.totalorder %s37, 1
      %p336 = por %p334, %p335
      %p337 = scmp.ne.s32.totalorder %s326, %s327
      %p338 = scmp.eq.s32.totalorder %s37, 0
      %p339 = por %p337, %p338
      %p340 = scmp.ne.s32.totalorder %s326, %s327
      %p341 = scmp.eq.s32.totalorder %s38, 1
      %p342 = por %p340, %p341
      %p344 = scmp.ne.s32.totalorder %s327, %s343
      %p345 = scmp.eq.s32.totalorder %s38, 0
      %p346 = por %p344, %p345
      %s347 = ssub.s32 %s32, %s39
      %p348 = scmp.eq.s32.totalorder %s347, 0
      %s350 = sadd.s32 %s349, 1
      %s351 = scalar_select %p348, %s349, %s350
      %p354 = pneg %p348
      %p355 = scmp.eq.s32.totalorder %s32, 1
      %p356 = por %p354, %p355
      %p357 = scmp.ne.s32.totalorder %s349, %s352
      %p358 = scmp.eq.s32.totalorder %s32, 0
      %p359 = por %p357, %p358
      %p360 = scmp.ne.s32.totalorder %s349, %s352
      %p361 = scmp.eq.s32.totalorder %s37, 1
      %p362 = por %p360, %p361
      %p363 = scmp.ne.s32.totalorder %s352, %s353
      %p364 = scmp.eq.s32.totalorder %s37, 0
      %p365 = por %p363, %p364
      %p366 = scmp.ne.s32.totalorder %s352, %s353
      %p367 = scmp.eq.s32.totalorder %s38, 1
      %p368 = por %p366, %p367
      %p370 = scmp.ne.s32.totalorder %s353, %s369
      %p371 = scmp.eq.s32.totalorder %s38, 0
      %p372 = por %p370, %p371
      %s374 = sadd.s32 %s373, 1
      %p377 = scmp.eq.s32.totalorder %s32, 1
      %p378 = scmp.ne.s32.totalorder %s373, %s375
      %p379 = scmp.eq.s32.totalorder %s32, 0
      %p380 = por %p378, %p379
      %p381 = scmp.ne.s32.totalorder %s373, %s375
      %p382 = scmp.eq.s32.totalorder %s37, 1
      %p383 = por %p381, %p382
      %p384 = scmp.ne.s32.totalorder %s375, %s376
      %p385 = scmp.eq.s32.totalorder %s37, 0
      %p386 = por %p384, %p385
      %p387 = scmp.ne.s32.totalorder %s375, %s376
      %p388 = scmp.eq.s32.totalorder %s38, 1
      %p389 = por %p387, %p388
      %p391 = scmp.ne.s32.totalorder %s376, %s390
      %p392 = scmp.eq.s32.totalorder %s38, 0
      %p393 = por %p391, %p392
      %s395 = sadd.s32 %s394, 1
      %p398 = scmp.eq.s32.totalorder %s32, 1
      %p399 = scmp.ne.s32.totalorder %s394, %s396
      %p400 = scmp.eq.s32.totalorder %s32, 0
      %p401 = por %p399, %p400
      %p402 = scmp.ne.s32.totalorder %s394, %s396
      %p403 = scmp.eq.s32.totalorder %s37, 1
      %p404 = por %p402, %p403
      %p405 = scmp.ne.s32.totalorder %s396, %s397
      %p406 = scmp.eq.s32.totalorder %s37, 0
      %p407 = por %p405, %p406
      %p408 = scmp.ne.s32.totalorder %s396, %s397
      %p409 = scmp.eq.s32.totalorder %s38, 1
      %p410 = por %p408, %p409
      %p412 = scmp.ne.s32.totalorder %s397, %s411
      %p413 = scmp.eq.s32.totalorder %s38, 0
      %p414 = por %p412, %p413
      %s416 = sadd.s32 %s415, 1
      %p419 = scmp.eq.s32.totalorder %s32, 1
      %p420 = scmp.ne.s32.totalorder %s415, %s417
      %p421 = scmp.eq.s32.totalorder %s32, 0
      %p422 = por %p420, %p421
      %p423 = scmp.ne.s32.totalorder %s415, %s417
      %p424 = scmp.eq.s32.totalorder %s37, 1
      %p425 = por %p423, %p424
      %p426 = scmp.ne.s32.totalorder %s417, %s418
      %p427 = scmp.eq.s32.totalorder %s37, 0
      %p428 = por %p426, %p427
      %p429 = scmp.ne.s32.totalorder %s417, %s418
      %p430 = scmp.eq.s32.totalorder %s38, 1
      %p431 = por %p429, %p430
      %p433 = scmp.ne.s32.totalorder %s418, %s432
      %p434 = scmp.eq.s32.totalorder %s38, 0
      %p435 = por %p433, %p434
      %p436 = scmp.le.s32.totalorder 1, %s32
      %p437 = scmp.lt.s32.totalorder %s32, 3
      %p438 = pnand %p436, %p437
      %p439 = pneg %p438
      // Predicated region
      $region9: #{tpu_custom_call.1} parent=5 // pred_check
        _
      $region10: #{tpu_custom_call.1} parent=5 // pred_check_branch
        %441 = sbr.rel (%p438) target = $region12
      $region11: #{tpu_custom_call.1} parent=5 // pred_region
        %s442 = ssub.s32 %s32, 1
        // Predicated region
        $region13: #{tpu_custom_call.1} parent=11 // pred_check
          %p443 = pneg %p53
        $region14: #{tpu_custom_call.1} parent=11 // pred_check_branch
          %445 = sbr.rel (%p443) target = $region16
        $region15: #{tpu_custom_call.1} parent=11 // pred_region
          %s447 = ssub.s32 512, 512
          %448 = vsyncadd [#allocation4], %s447
          %s449 = sshll.u32 [#allocation3], 4
          %s450 = int_to_ptr.vmem [resolvable:$true] %s449
          %455 = dma.hbm_to_vmem [thread:$0]  %s0, 512, %s450, [#allocation4], 128, 128, 8
        $region16: #{tpu_custom_call.1} parent=11 // pred_fallthru
          _
        // Predicated region
        $region17: #{tpu_custom_call.1} parent=11 // pred_check
          %p456 = pneg %p386
        $region18: #{tpu_custom_call.1} parent=11 // pred_check_branch
          %458 = sbr.rel (%p456) target = $region20
        $region19: #{tpu_custom_call.1} parent=11 // pred_region
          _
        $region20: #{tpu_custom_call.1} parent=11 // pred_fallthru
          _
        // Predicated region
        $region21: #{tpu_custom_call.1} parent=11 // pred_check
          %p459 = pneg %p407
        $region22: #{tpu_custom_call.1} parent=11 // pred_check_branch
          %461 = sbr.rel (%p459) target = $region24
        $region23: #{tpu_custom_call.1} parent=11 // pred_region
          _
        $region24: #{tpu_custom_call.1} parent=11 // pred_fallthru
          _
      $region12: #{tpu_custom_call.1} parent=5 // pred_fallthru
        _
      %p462 = scmp.lt.s32.totalorder %s32, 2
      // Predicated region
      $region25: #{tpu_custom_call.1} parent=5 // pred_check
        %p463 = pneg %p462
      $region26: #{tpu_custom_call.1} parent=5 // pred_check_branch
        %465 = sbr.rel (%p463) target = $region28
      $region27: #{tpu_custom_call.1} parent=5 // pred_region
        // Predicated region
        $region29: #{tpu_custom_call.1} parent=27 // pred_check
          %p466 = pneg %p73
        $region30: #{tpu_custom_call.1} parent=27 // pred_check_branch
          %468 = sbr.rel (%p466) target = $region32
        $region31: #{tpu_custom_call.1} parent=27 // pred_region
          %s469 = sand.u32 %s32, 1
          %s470 = scalar_lea.sflag [#allocation7], %s469
          %s471 = sand.u32 %s63, 1
          %s472 = scalar_lea.vmem [#allocation6], %s471
          %s474 = ssub.s32 16, 16
          %475 = vsyncadd %s470, %s474
          %s476 = smul.addr %s32, 16
          %s477 = scalar_lea.hbm %s1, %s476
          %s479 = sshll.u32 %s472, 4
          %s480 = int_to_ptr.vmem [resolvable:$true] %s479
          %482 = dma.hbm_to_vmem [thread:$0]  %s477, 16, %s480, %s470
        $region32: #{tpu_custom_call.1} parent=27 // pred_fallthru
          _
        // Predicated region
        $region33: #{tpu_custom_call.1} parent=27 // pred_check
          %p483 = pneg %p99
        $region34: #{tpu_custom_call.1} parent=27 // pred_check_branch
          %485 = sbr.rel (%p483) target = $region36
        $region35: #{tpu_custom_call.1} parent=27 // pred_region
          %s486 = sand.u32 %s32, 1
          %s487 = scalar_lea.sflag [#allocation7], %s486
          %s488 = sand.u32 %s89, 1
          %s489 = scalar_lea.vmem [#allocation8], %s488
          %s491 = ssub.s32 16, 16
          %492 = vsyncadd %s487, %s491
          %s493 = smul.addr %s32, 16
          %s494 = scalar_lea.hbm %s2, %s493
          %s496 = sshll.u32 %s489, 4
          %s497 = int_to_ptr.vmem [resolvable:$true] %s496
          %499 = dma.hbm_to_vmem [thread:$0]  %s494, 16, %s497, %s487
        $region36: #{tpu_custom_call.1} parent=27 // pred_fallthru
          _
        // Predicated region
        $region37: #{tpu_custom_call.1} parent=27 // pred_check
          %p500 = pneg %p125
        $region38: #{tpu_custom_call.1} parent=27 // pred_check_branch
          %502 = sbr.rel (%p500) target = $region40
        $region39: #{tpu_custom_call.1} parent=27 // pred_region
          %s503 = sand.u32 %s32, 1
          %s504 = scalar_lea.sflag [#allocation10], %s503
          %s505 = sand.u32 %s115, 1
          %s506 = smul.addr %s505, 192
          %s507 = scalar_lea.vmem [#allocation9], %s506
          %s509 = ssub.s32 3072, 3072
          %510 = vsyncadd %s504, %s509
          %s511 = smul.addr %s32, 48
          %s512 = smul.addr %s511, 64
          %s513 = scalar_lea.hbm %s3, %s512
          %s514 = sshll.u32 %s507, 4
          %s515 = int_to_ptr.vmem [resolvable:$true] %s514
          %520 = dma.hbm_to_vmem [thread:$0]  %s513, 3072, %s515, %s504, 192, 192, 12
        $region40: #{tpu_custom_call.1} parent=27 // pred_fallthru
          _
        // Predicated region
        $region41: #{tpu_custom_call.1} parent=27 // pred_check
          %p521 = pneg %p151
        $region42: #{tpu_custom_call.1} parent=27 // pred_check_branch
          %523 = sbr.rel (%p521) target = $region44
        $region43: #{tpu_custom_call.1} parent=27 // pred_region
          %p524 = scmp.lt.s32.totalorder %s32, 1
          %s525 = scalar_select %p524, %s32, 1
          %s526 = smul.addr %s525, 3
          %s527 = scalar_lea.vmem %s4, %s526
        $region44: #{tpu_custom_call.1} parent=27 // pred_fallthru
          _
        // Predicated region
        $region45: #{tpu_custom_call.1} parent=27 // pred_check
          %p528 = pneg %p177
        $region46: #{tpu_custom_call.1} parent=27 // pred_check_branch
          %530 = sbr.rel (%p528) target = $region48
        $region47: #{tpu_custom_call.1} parent=27 // pred_region
          %s531 = sand.u32 %s32, 1
          %s532 = scalar_lea.sflag [#allocation10], %s531
          %s533 = sand.u32 %s167, 1
          %s534 = smul.addr %s533, 64
          %s535 = scalar_lea.vmem [#allocation11], %s534
          %s537 = ssub.s32 1024, 1024
          %538 = vsyncadd %s532, %s537
          %s539 = smul.addr %s32, 16
          %s540 = smul.addr %s539, 64
          %s541 = scalar_lea.hbm %s5, %s540
          %s542 = sshll.u32 %s535, 4
          %s543 = int_to_ptr.vmem [resolvable:$true] %s542
          %548 = dma.hbm_to_vmem [thread:$0]  %s541, 1024, %s543, %s532, 64, 64, 4
        $region48: #{tpu_custom_call.1} parent=27 // pred_fallthru
          _
        // Predicated region
        $region49: #{tpu_custom_call.1} parent=27 // pred_check
          %p549 = pneg %p203
        $region50: #{tpu_custom_call.1} parent=27 // pred_check_branch
          %551 = sbr.rel (%p549) target = $region52
        $region51: #{tpu_custom_call.1} parent=27 // pred_region
          %p552 = scmp.lt.s32.totalorder %s32, 1
          %s553 = scalar_select %p552, %s32, 1
          %s554 = scalar_lea.vmem %s6, %s553
        $region52: #{tpu_custom_call.1} parent=27 // pred_fallthru
          _
        // Predicated region
        $region53: #{tpu_custom_call.1} parent=27 // pred_check
          %p555 = pneg %p229
        $region54: #{tpu_custom_call.1} parent=27 // pred_check_branch
          %557 = sbr.rel (%p555) target = $region56
        $region55: #{tpu_custom_call.1} parent=27 // pred_region
          %p558 = scmp.lt.s32.totalorder %s32, 1
          %s559 = scalar_select %p558, %s32, 1
          %s560 = scalar_lea.vmem %s7, %s559
        $region56: #{tpu_custom_call.1} parent=27 // pred_fallthru
          _
        // Predicated region
        $region57: #{tpu_custom_call.1} parent=27 // pred_check
          %p561 = pneg %p255
        $region58: #{tpu_custom_call.1} parent=27 // pred_check_branch
          %563 = sbr.rel (%p561) target = $region60
        $region59: #{tpu_custom_call.1} parent=27 // pred_region
          %p564 = scmp.lt.s32.totalorder %s32, 1
          %s565 = scalar_select %p564, %s32, 1
          %s566 = scalar_lea.vmem %s8, %s565
        $region60: #{tpu_custom_call.1} parent=27 // pred_fallthru
          _
        // Predicated region
        $region61: #{tpu_custom_call.1} parent=27 // pred_check
          %p567 = pneg %p281
        $region62: #{tpu_custom_call.1} parent=27 // pred_check_branch
          %569 = sbr.rel (%p567) target = $region64
        $region63: #{tpu_custom_call.1} parent=27 // pred_region
          %s570 = sand.u32 %s32, 1
          %s571 = scalar_lea.sflag [#allocation13], %s570
          %s572 = sand.u32 %s271, 1
          %s573 = smul.addr %s572, 256
          %s574 = scalar_lea.vmem [#allocation12], %s573
          %s576 = ssub.s32 4096, 4096
          %577 = vsyncadd %s571, %s576
          %s578 = smul.addr %s32, 64
          %s579 = smul.addr %s578, 64
          %s580 = scalar_lea.hbm %s9, %s579
          %s581 = sshll.u32 %s574, 4
          %s582 = int_to_ptr.vmem [resolvable:$true] %s581
          %587 = dma.hbm_to_vmem [thread:$0]  %s580, 4096, %s582, %s571, 256, 256, 16
        $region64: #{tpu_custom_call.1} parent=27 // pred_fallthru
          _
        // Predicated region
        $region65: #{tpu_custom_call.1} parent=27 // pred_check
          %p588 = pneg %p307
        $region66: #{tpu_custom_call.1} parent=27 // pred_check_branch
          %590 = sbr.rel (%p588) target = $region68
        $region67: #{tpu_custom_call.1} parent=27 // pred_region
          %p591 = scmp.lt.s32.totalorder %s32, 1
          %s592 = scalar_select %p591, %s32, 1
          %s593 = smul.addr %s592, 4
          %s594 = scalar_lea.vmem %s10, %s593
        $region68: #{tpu_custom_call.1} parent=27 // pred_fallthru
          _
        // Predicated region
        $region69: #{tpu_custom_call.1} parent=27 // pred_check
          %p595 = pneg %p333
        $region70: #{tpu_custom_call.1} parent=27 // pred_check_branch
          %597 = sbr.rel (%p595) target = $region72
        $region71: #{tpu_custom_call.1} parent=27 // pred_region
          %s598 = sand.u32 %s32, 1
          %s599 = scalar_lea.sflag [#allocation13], %s598
          %s600 = sand.u32 %s323, 1
          %s601 = smul.addr %s600, 256
          %s602 = scalar_lea.vmem [#allocation14], %s601
          %s604 = ssub.s32 4096, 4096
          %605 = vsyncadd %s599, %s604
          %s606 = smul.addr %s32, 64
          %s607 = smul.addr %s606, 64
          %s608 = scalar_lea.hbm %s11, %s607
          %s609 = sshll.u32 %s602, 4
          %s610 = int_to_ptr.vmem [resolvable:$true] %s609
          %615 = dma.hbm_to_vmem [thread:$0]  %s608, 4096, %s610, %s599, 64, 64, 4
        $region72: #{tpu_custom_call.1} parent=27 // pred_fallthru
          _
        // Predicated region
        $region73: #{tpu_custom_call.1} parent=27 // pred_check
          %p616 = pneg %p359
        $region74: #{tpu_custom_call.1} parent=27 // pred_check_branch
          %618 = sbr.rel (%p616) target = $region76
        $region75: #{tpu_custom_call.1} parent=27 // pred_region
          %p619 = scmp.lt.s32.totalorder %s32, 1
          %s620 = scalar_select %p619, %s32, 1
          %s621 = scalar_lea.vmem %s12, %s620
        $region76: #{tpu_custom_call.1} parent=27 // pred_fallthru
          _
      $region28: #{tpu_custom_call.1} parent=5 // pred_fallthru
        _
      %p622 = scmp.le.s32.totalorder 1, %s32
      %p623 = scmp.lt.s32.totalorder %s32, 3
      %p624 = pnand %p622, %p623
      %p625 = pneg %p624
      // Predicated region
      $region77: #{tpu_custom_call.1} parent=5 // pred_check
        _
      $region78: #{tpu_custom_call.1} parent=5 // pred_check_branch
        %627 = sbr.rel (%p624) target = $region80
      $region79: #{tpu_custom_call.1} parent=5 // pred_region
        %s628 = ssub.s32 %s32, 1
        // Predicated region
        $region81: #{tpu_custom_call.1} parent=79 // pred_check
          %p629 = pneg %p53
        $region82: #{tpu_custom_call.1} parent=79 // pred_check_branch
          %631 = sbr.rel (%p629) target = $region84
        $region83: #{tpu_custom_call.1} parent=79 // pred_region
          %632 = dma.done [#allocation4], 512
        $region84: #{tpu_custom_call.1} parent=79 // pred_fallthru
          _
        %s633 = sand.u32 %s37, 1
        %s634 = scalar_lea.sflag [#allocation7], %s633
        %s635 = sand.u32 %s66, 1
        %s636 = scalar_lea.vmem [#allocation6], %s635
        // Predicated region
        $region85: #{tpu_custom_call.1} parent=79 // pred_check
          %p637 = pneg %p79
        $region86: #{tpu_custom_call.1} parent=79 // pred_check_branch
          %639 = sbr.rel (%p637) target = $region88
        $region87: #{tpu_custom_call.1} parent=79 // pred_region
          %640 = dma.done %s634, 16
        $region88: #{tpu_custom_call.1} parent=79 // pred_fallthru
          _
        %s641 = sand.u32 %s37, 1
        %s642 = scalar_lea.sflag [#allocation7], %s641
        %s643 = sand.u32 %s92, 1
        %s644 = scalar_lea.vmem [#allocation8], %s643
        // Predicated region
        $region89: #{tpu_custom_call.1} parent=79 // pred_check
          %p645 = pneg %p105
        $region90: #{tpu_custom_call.1} parent=79 // pred_check_branch
          %647 = sbr.rel (%p645) target = $region92
        $region91: #{tpu_custom_call.1} parent=79 // pred_region
          %648 = dma.done %s642, 16
        $region92: #{tpu_custom_call.1} parent=79 // pred_fallthru
          _
        %s649 = sand.u32 %s37, 1
        %s650 = scalar_lea.sflag [#allocation10], %s649
        %s651 = sand.u32 %s118, 1
        %s652 = smul.addr %s651, 192
        %s653 = scalar_lea.vmem [#allocation9], %s652
        // Predicated region
        $region93: #{tpu_custom_call.1} parent=79 // pred_check
          %p654 = pneg %p131
        $region94: #{tpu_custom_call.1} parent=79 // pred_check_branch
          %656 = sbr.rel (%p654) target = $region96
        $region95: #{tpu_custom_call.1} parent=79 // pred_region
          %657 = dma.done %s650, 3072
        $region96: #{tpu_custom_call.1} parent=79 // pred_fallthru
          _
        %s658 = sand.u32 %s37, 1
        %s659 = scalar_lea.sflag [#allocation10], %s658
        %s660 = sand.u32 %s170, 1
        %s661 = smul.addr %s660, 64
        %s662 = scalar_lea.vmem [#allocation11], %s661
        // Predicated region
        $region97: #{tpu_custom_call.1} parent=79 // pred_check
          %p663 = pneg %p183
        $region98: #{tpu_custom_call.1} parent=79 // pred_check_branch
          %665 = sbr.rel (%p663) target = $region100
        $region99: #{tpu_custom_call.1} parent=79 // pred_region
          %666 = dma.done %s659, 1024
        $region100: #{tpu_custom_call.1} parent=79 // pred_fallthru
          _
        %s667 = sand.u32 %s37, 1
        %s668 = scalar_lea.sflag [#allocation13], %s667
        %s669 = sand.u32 %s274, 1
        %s670 = smul.addr %s669, 256
        %s671 = scalar_lea.vmem [#allocation12], %s670
        // Predicated region
        $region101: #{tpu_custom_call.1} parent=79 // pred_check
          %p672 = pneg %p287
        $region102: #{tpu_custom_call.1} parent=79 // pred_check_branch
          %674 = sbr.rel (%p672) target = $region104
        $region103: #{tpu_custom_call.1} parent=79 // pred_region
          %675 = dma.done %s668, 4096
        $region104: #{tpu_custom_call.1} parent=79 // pred_fallthru
          _
        %s676 = sand.u32 %s37, 1
        %s677 = scalar_lea.sflag [#allocation13], %s676
        %s678 = sand.u32 %s326, 1
        %s679 = smul.addr %s678, 256
        %s680 = scalar_lea.vmem [#allocation14], %s679
        // Predicated region
        $region105: #{tpu_custom_call.1} parent=79 // pred_check
          %p681 = pneg %p339
        $region106: #{tpu_custom_call.1} parent=79 // pred_check_branch
          %683 = sbr.rel (%p681) target = $region108
        $region107: #{tpu_custom_call.1} parent=79 // pred_region
          %684 = dma.done %s677, 4096
        $region108: #{tpu_custom_call.1} parent=79 // pred_fallthru
          _
        %p685 = pneg %p53
        %p686 = pneg %p50
        %s687 = sand.u32 %s37, 1
        %s688 = scalar_lea.sflag [#allocation7], %s687
        %s689 = sand.u32 %s66, 1
        %s690 = scalar_lea.vmem [#allocation6], %s689
        %p691 = pneg %p79
        %p692 = pneg %p76
        %s693 = sand.u32 %s37, 1
        %s694 = scalar_lea.sflag [#allocation7], %s693
        %s695 = sand.u32 %s92, 1
        %s696 = scalar_lea.vmem [#allocation8], %s695
        %p697 = pneg %p105
        %p698 = pneg %p102
        %s699 = sand.u32 %s37, 1
        %s700 = scalar_lea.sflag [#allocation10], %s699
        %s701 = sand.u32 %s118, 1
        %s702 = smul.addr %s701, 192
        %s703 = scalar_lea.vmem [#allocation9], %s702
        %p704 = pneg %p131
        %p705 = pneg %p128
        %p706 = scmp.lt.s32.totalorder %s37, 1
        %s707 = scalar_select %p706, %s37, 1
        %s708 = smul.addr %s707, 3
        %s709 = scalar_lea.vmem %s4, %s708
        %p710 = pneg %p157
        %p711 = pneg %p154
        %s712 = sand.u32 %s37, 1
        %s713 = scalar_lea.sflag [#allocation10], %s712
        %s714 = sand.u32 %s170, 1
        %s715 = smul.addr %s714, 64
        %s716 = scalar_lea.vmem [#allocation11], %s715
        %p717 = pneg %p183
        %p718 = pneg %p180
        %p719 = scmp.lt.s32.totalorder %s37, 1
        %s720 = scalar_select %p719, %s37, 1
        %s721 = scalar_lea.vmem %s6, %s720
        %p722 = pneg %p209
        %p723 = pneg %p206
        %p724 = scmp.lt.s32.totalorder %s37, 1
        %s725 = scalar_select %p724, %s37, 1
        %s726 = scalar_lea.vmem %s7, %s725
        %p727 = pneg %p235
        %p728 = pneg %p232
        %p729 = scmp.lt.s32.totalorder %s37, 1
        %s730 = scalar_select %p729, %s37, 1
        %s731 = scalar_lea.vmem %s8, %s730
        %p732 = pneg %p261
        %p733 = pneg %p258
        %s734 = sand.u32 %s37, 1
        %s735 = scalar_lea.sflag [#allocation13], %s734
        %s736 = sand.u32 %s274, 1
        %s737 = smul.addr %s736, 256
        %s738 = scalar_lea.vmem [#allocation12], %s737
        %p739 = pneg %p287
        %p740 = pneg %p284
        %p741 = scmp.lt.s32.totalorder %s37, 1
        %s742 = scalar_select %p741, %s37, 1
        %s743 = smul.addr %s742, 4
        %s744 = scalar_lea.vmem %s10, %s743
        %p745 = pneg %p313
        %p746 = pneg %p310
        %s747 = sand.u32 %s37, 1
        %s748 = scalar_lea.sflag [#allocation13], %s747
        %s749 = sand.u32 %s326, 1
        %s750 = smul.addr %s749, 256
        %s751 = scalar_lea.vmem [#allocation14], %s750
        %p752 = pneg %p339
        %p753 = pneg %p336
        %p754 = scmp.lt.s32.totalorder %s37, 1
        %s755 = scalar_select %p754, %s37, 1
        %s756 = scalar_lea.vmem %s12, %s755
        %p757 = pneg %p365
        %p758 = pneg %p362
        %p759 = pneg %p386
        %p760 = pneg %p383
        %p761 = pneg %p407
        %p762 = pneg %p404
        %p763 = pneg %p428
        %p764 = pneg %p425
        %p765 = scmp.lt.s32.totalorder %s37, 1
        %s766 = scalar_select %p765, %s37, 1
        %s767 = smul.addr %s766, 3
        %s768 = scalar_lea.vmem %s4, %s767
        %p769 = scmp.lt.s32.totalorder %s37, 1
        %s770 = scalar_select %p769, %s37, 1
        %s771 = scalar_lea.vmem %s6, %s770
        %p772 = scmp.lt.s32.totalorder %s37, 1
        %s773 = scalar_select %p772, %s37, 1
        %s774 = scalar_lea.vmem %s7, %s773
        %p775 = scmp.lt.s32.totalorder %s37, 1
        %s776 = scalar_select %p775, %s37, 1
        %s777 = scalar_lea.vmem %s8, %s776
        %p778 = scmp.lt.s32.totalorder %s37, 1
        %s779 = scalar_select %p778, %s37, 1
        %s780 = smul.addr %s779, 4
        %s781 = scalar_lea.vmem %s10, %s780
        %p782 = scmp.lt.s32.totalorder %s37, 1
        %s783 = scalar_select %p782, %s37, 1
        %s784 = scalar_lea.vmem %s12, %s783
        %p786 = scmp.eq.s32.totalorder %s37, 0
        // Predicated region
        $region109: #{tpu_custom_call.1} parent=79 // pred_check
          %p787 = pneg %p786
        $region110: #{tpu_custom_call.1} parent=79 // pred_check_branch
          %789 = sbr.rel (%p787) target = $region112
        $region111: #{tpu_custom_call.1} parent=79 // pred_region
          %v790 = vld [vmem:[#allocation3] sm:$0xff]
          %v791 = vld [vmem:[#allocation3 + $0x8] sm:$0xff]
          %v792 = vld [vmem:[#allocation3 + $0x10] sm:$0xff]
          %v793 = vld [vmem:[#allocation3 + $0x18] sm:$0xff]
          %794 = vst [vmem:[#allocation2] sm:$0xff] %v790
          %795 = vst [vmem:[#allocation2 + $0x8] sm:$0xff] %v791
          %796 = vst [vmem:[#allocation2 + $0x10] sm:$0xff] %v792
          %797 = vst [vmem:[#allocation2 + $0x18] sm:$0xff] %v793
        $region112: #{tpu_custom_call.1} parent=79 // pred_fallthru
          _
        %v798 = vld [vmem:[#allocation2] sm:$0xff]
        %v799 = vld [vmem:[#allocation2 + $0x8] sm:$0xff]
        %v800 = vld [vmem:[#allocation2 + $0x10] sm:$0xff]
        %v801 = vld [vmem:[#allocation2 + $0x18] sm:$0xff]
        %v802 = vld [vmem:[%s636] sm:$0x1]
        %v803 = vld [vmem:[%s644] sm:$0x1]
        %804 = vadd.xlane.f32.xlu0 %v798
        %v805 = vpop.xlane.xlu0 %804
        %806 = vadd.xlane.f32.xlu0 %v799
        %v807 = vpop.xlane.xlu0 %806
        %808 = vadd.xlane.f32.xlu0 %v800
        %v809 = vpop.xlane.xlu0 %808
        %810 = vadd.xlane.f32.xlu0 %v801
        %v811 = vpop.xlane.xlu0 %810
        %v812 = vrcp.pop 128.0
        %v813 = vmul.f32 %v805, %v812
        %v814 = vmul.f32 %v807, %v812
        %v815 = vmul.f32 %v809, %v812
        %v816 = vmul.f32 %v811, %v812
        %v817 = vsub.f32 %v798, %v813
        %v818 = vsub.f32 %v799, %v814
        %v819 = vsub.f32 %v800, %v815
        %v820 = vsub.f32 %v801, %v816
        %v821 = vmul.f32 %v817, %v817
        %v822 = vmul.f32 %v818, %v818
        %v823 = vmul.f32 %v819, %v819
        %v824 = vmul.f32 %v820, %v820
        %825 = vadd.xlane.f32.xlu0 %v821
        %v826 = vpop.xlane.xlu0 %825
        %827 = vadd.xlane.f32.xlu0 %v822
        %v828 = vpop.xlane.xlu0 %827
        %829 = vadd.xlane.f32.xlu0 %v823
        %v830 = vpop.xlane.xlu0 %829
        %831 = vadd.xlane.f32.xlu0 %v824
        %v832 = vpop.xlane.xlu0 %831
        %v833 = vmul.f32 %v826, %v812
        %v834 = vmul.f32 %v828, %v812
        %v835 = vmul.f32 %v830, %v812
        %v836 = vmul.f32 %v832, %v812
        %v837 = vadd.f32 %v833, 1e-05
        %v838 = vadd.f32 %v834, 1e-05
        %v839 = vadd.f32 %v835, 1e-05
        %v840 = vadd.f32 %v836, 1e-05
        %v841 = vrsqrt.pop %v837
        %v842 = vrsqrt.pop %v838
        %v843 = vrsqrt.pop %v839
        %v844 = vrsqrt.pop %v840
        %v845 = vmul.f32 %v817, %v841
        %v846 = vmul.f32 %v818, %v842
        %v847 = vmul.f32 %v819, %v843
        %v848 = vmul.f32 %v820, %v844
        %v850 = vlaneseq
        %v851 = vshrl.u32 %v850, 7
        %v852 = vsub.s32 0, %v851
        %v853 = vrot.slane %v802, %v852
        %v855 = vmul.f32 %v845, %v853
        %v856 = vmul.f32 %v846, %v853
        %v857 = vmul.f32 %v847, %v853
        %v858 = vmul.f32 %v848, %v853
        %v860 = vlaneseq
        %v861 = vshrl.u32 %v860, 7
        %v862 = vsub.s32 0, %v861
        %v863 = vrot.slane %v803, %v862
        %v865 = vadd.f32 %v855, %v863
        %v866 = vadd.f32 %v856, %v863
        %v867 = vadd.f32 %v857, %v863
        %v868 = vadd.f32 %v858, %v863
        %v869 = vpack.c.bf16 %v866, %v865
        %v870 = vpack.c.bf16 %v868, %v867
        %v871 = vld [vmem:[%s653] sm:$0xff]
        %v872 = vld [vmem:[%s653 + $0x8] sm:$0xf]
        %v873 = vld [vmem:[%s653 + $0xc] sm:$0xff]
        %v874 = vld [vmem:[%s653 + $0x14] sm:$0xf]
        %v875 = vld [vmem:[%s653 + $0x18] sm:$0xff]
        %v876 = vld [vmem:[%s653 + $0x20] sm:$0xf]
        %v877 = vld [vmem:[%s653 + $0x24] sm:$0xff]
        %v878 = vld [vmem:[%s653 + $0x2c] sm:$0xf]
        %v879 = vld [vmem:[%s653 + $0x30] sm:$0xff]
        %v880 = vld [vmem:[%s653 + $0x38] sm:$0xf]
        %v881 = vld [vmem:[%s653 + $0x3c] sm:$0xff]
        %v882 = vld [vmem:[%s653 + $0x44] sm:$0xf]
        %v883 = vld [vmem:[%s653 + $0x48] sm:$0xff]
        %v884 = vld [vmem:[%s653 + $0x50] sm:$0xf]
        %v885 = vld [vmem:[%s653 + $0x54] sm:$0xff]
        %v886 = vld [vmem:[%s653 + $0x5c] sm:$0xf]
        %v887 = vld [vmem:[%s653 + $0x60] sm:$0xff]
        %v888 = vld [vmem:[%s653 + $0x68] sm:$0xf]
        %v889 = vld [vmem:[%s653 + $0x6c] sm:$0xff]
        %v890 = vld [vmem:[%s653 + $0x74] sm:$0xf]
        %v891 = vld [vmem:[%s653 + $0x78] sm:$0xff]
        %v892 = vld [vmem:[%s653 + $0x80] sm:$0xf]
        %v893 = vld [vmem:[%s653 + $0x84] sm:$0xff]
        %v894 = vld [vmem:[%s653 + $0x8c] sm:$0xf]
        %v895 = vld [vmem:[%s653 + $0x90] sm:$0xff]
        %v896 = vld [vmem:[%s653 + $0x98] sm:$0xf]
        %v897 = vld [vmem:[%s653 + $0x9c] sm:$0xff]
        %v898 = vld [vmem:[%s653 + $0xa4] sm:$0xf]
        %v899 = vld [vmem:[%s653 + $0xa8] sm:$0xff]
        %v900 = vld [vmem:[%s653 + $0xb0] sm:$0xf]
        %v901 = vld [vmem:[%s653 + $0xb4] sm:$0xff]
        %v902 = vld [vmem:[%s653 + $0xbc] sm:$0xf]
        %v903 = vld [vmem:[%s768] sm:$0x7]
        %v905 = vlaneseq
        %v906 = vshrl.u32 %v905, 7
        %v907 = vsub.s32 0, %v906
        %v908 = vrot.slane %v903, %v907
        %v909 = vlaneseq
        %v910 = vshrl.u32 %v909, 7
        %v911 = vsub.s32 1, %v910
        %v912 = vrot.slane %v903, %v911
        %v913 = vlaneseq
        %v914 = vshrl.u32 %v913, 7
        %v915 = vsub.s32 2, %v914
        %v916 = vrot.slane %v903, %v915
        %v952 = vunpack.c.l.b16 %v871
        %v953 = vunpack.c.h.b16 %v871
        %v954 = vunpack.c.l.b16 %v872
        %v955 = vunpack.c.l.b16 %v873
        %v956 = vunpack.c.h.b16 %v873
        %v957 = vunpack.c.l.b16 %v874
        %v958 = vunpack.c.l.b16 %v875
        %v959 = vunpack.c.h.b16 %v875
        %v960 = vunpack.c.l.b16 %v876
        %v961 = vunpack.c.l.b16 %v877
        %v962 = vunpack.c.h.b16 %v877
        %v963 = vunpack.c.l.b16 %v878
        %v964 = vunpack.c.l.b16 %v879
        %v965 = vunpack.c.h.b16 %v879
        %v966 = vunpack.c.l.b16 %v880
        %v967 = vunpack.c.l.b16 %v881
        %v968 = vunpack.c.h.b16 %v881
        %v969 = vunpack.c.l.b16 %v882
        %v970 = vunpack.c.l.b16 %v883
        %v971 = vunpack.c.h.b16 %v883
        %v972 = vunpack.c.l.b16 %v884
        %v973 = vunpack.c.l.b16 %v885
        %v974 = vunpack.c.h.b16 %v885
        %v975 = vunpack.c.l.b16 %v886
        %v976 = vunpack.c.l.b16 %v887
        %v977 = vunpack.c.h.b16 %v887
        %v978 = vunpack.c.l.b16 %v888
        %v979 = vunpack.c.l.b16 %v889
        %v980 = vunpack.c.h.b16 %v889
        %v981 = vunpack.c.l.b16 %v890
        %v982 = vunpack.c.l.b16 %v891
        %v983 = vunpack.c.h.b16 %v891
        %v984 = vunpack.c.l.b16 %v892
        %v985 = vunpack.c.l.b16 %v893
        %v986 = vunpack.c.h.b16 %v893
        %v987 = vunpack.c.l.b16 %v894
        %v988 = vunpack.c.l.b16 %v895
        %v989 = vunpack.c.h.b16 %v895
        %v990 = vunpack.c.l.b16 %v896
        %v991 = vunpack.c.l.b16 %v897
        %v992 = vunpack.c.h.b16 %v897
        %v993 = vunpack.c.l.b16 %v898
        %v994 = vunpack.c.l.b16 %v899
        %v995 = vunpack.c.h.b16 %v899
        %v996 = vunpack.c.l.b16 %v900
        %v997 = vunpack.c.l.b16 %v901
        %v998 = vunpack.c.h.b16 %v901
        %v999 = vunpack.c.l.b16 %v902
        %v1000 = vpack.c.b16 %v955, %v952
        %v1001 = vpack.c.b16 %v956, %v953
        %v1002 = vpack.c.b16 %v957, %v954
        %v1003 = vpack.c.b16 %v961, %v958
        %v1004 = vpack.c.b16 %v962, %v959
        %v1005 = vpack.c.b16 %v963, %v960
        %v1006 = vpack.c.b16 %v967, %v964
        %v1007 = vpack.c.b16 %v968, %v965
        %v1008 = vpack.c.b16 %v969, %v966
        %v1009 = vpack.c.b16 %v973, %v970
        %v1010 = vpack.c.b16 %v974, %v971
        %v1011 = vpack.c.b16 %v975, %v972
        %v1012 = vpack.c.b16 %v979, %v976
        %v1013 = vpack.c.b16 %v980, %v977
        %v1014 = vpack.c.b16 %v981, %v978
        %v1015 = vpack.c.b16 %v985, %v982
        %v1016 = vpack.c.b16 %v986, %v983
        %v1017 = vpack.c.b16 %v987, %v984
        %v1018 = vpack.c.b16 %v991, %v988
        %v1019 = vpack.c.b16 %v992, %v989
        %v1020 = vpack.c.b16 %v993, %v990
        %v1021 = vpack.c.b16 %v997, %v994
        %v1022 = vpack.c.b16 %v998, %v995
        %v1023 = vpack.c.b16 %v999, %v996
        %1048 = vmatprep.subr.bf16.mxu0 %v1001
        %1049 = vmatpush1.bf16.msra.mxu0 %v1000
        %1050 = vmatprep.subr.bf16.mxu0 %v1004
        %1051 = vmatpush1.bf16.msra.mxu0 %v1003
        %1052 = vmatprep.subr.bf16.mxu0 %v1007
        %1053 = vmatpush1.bf16.msra.mxu0 %v1006
        %1054 = vmatprep.subr.bf16.mxu0 %v1010
        %1055 = vmatpush1.bf16.msra.mxu0 %v1009
        %1056 = vmatprep.subr.bf16.mxu0 %v1013
        %1057 = vmatpush1.bf16.msra.mxu0 %v1012
        %1058 = vmatprep.subr.bf16.mxu0 %v1016
        %1059 = vmatpush1.bf16.msra.mxu0 %v1015
        %1060 = vmatprep.subr.bf16.mxu0 %v1019
        %1061 = vmatpush1.bf16.msra.mxu0 %v1018
        %1062 = vmatprep.subr.bf16.mxu0 %v1022
        %1063 = vmatpush1.bf16.msra.mxu0 %v1021
        %1064 = vmatprep.subr.bf16.mxu0 0
        %1065 = vmatpush1.bf16.msra.mxu0 0
        %1066 = vmatprep.subr.bf16.mxu0 0
        %1067 = vmatpush1.bf16.msra.mxu0 0
        %1068 = vmatprep.subr.bf16.mxu0 0
        %1069 = vmatpush1.bf16.msra.mxu0 0
        %1070 = vmatprep.subr.bf16.mxu0 0
        %1071 = vmatpush1.bf16.msra.mxu0 0
        %1072 = vmatprep.subr.bf16.mxu0 0
        %1073 = vmatpush1.bf16.msra.mxu0 0
        %1074 = vmatprep.subr.bf16.mxu0 0
        %1075 = vmatpush1.bf16.msra.mxu0 0
        %1076 = vmatprep.subr.bf16.mxu0 0
        %1077 = vmatpush1.bf16.msra.mxu0 0
        %1078 = vmatprep.subr.bf16.mxu0 0
        %1079 = vmatpush1.bf16.msra.mxu0 0
        %1080 = vmatprep.mubr.bf16.mxu0 0
        %1081 = vmatmul.mubr.bf16.gmra.mrb[0].mxu0 %v869
        %v1082 = vpop.f32.mrb[0].mxu0
        %v1083 = vadd.f32 %v908, %v1082
        %v1084 = vpop.f32.mrb[0].mxu0
        %v1085 = vadd.f32 %v912, %v1084
        %v1086 = vpop.f32.mrb[0].mxu0
        %v1087 = vadd.f32 %v908, %v1086
        %v1088 = vpop.f32.mrb[0].mxu0
        %v1089 = vadd.f32 %v912, %v1088
        %1090 = vmatprep.mubr.bf16.mxu0 0
        %1091 = vmatmul.mubr.bf16.gmra.mrb[0].mxu0 %v870
        %v1092 = vpop.f32.mrb[0].mxu0
        %v1093 = vadd.f32 %v908, %v1092
        %v1094 = vpop.f32.mrb[0].mxu0
        %v1095 = vadd.f32 %v912, %v1094
        %v1096 = vpop.f32.mrb[0].mxu0
        %v1097 = vadd.f32 %v908, %v1096
        %v1098 = vpop.f32.mrb[0].mxu0
        %v1099 = vadd.f32 %v912, %v1098
        %1100 = vdwg.mxu0
        %1101 = vmatprep.subr.bf16.mxu0 0
        %1102 = vmatpush1.bf16.msra.mxu0 %v1002
        %1103 = vmatprep.subr.bf16.mxu0 0
        %1104 = vmatpush1.bf16.msra.mxu0 %v1005
        %1105 = vmatprep.subr.bf16.mxu0 0
        %1106 = vmatpush1.bf16.msra.mxu0 %v1008
        %1107 = vmatprep.subr.bf16.mxu0 0
        %1108 = vmatpush1.bf16.msra.mxu0 %v1011
        %1109 = vmatprep.subr.bf16.mxu0 0
        %1110 = vmatpush1.bf16.msra.mxu0 %v1014
        %1111 = vmatprep.subr.bf16.mxu0 0
        %1112 = vmatpush1.bf16.msra.mxu0 %v1017
        %1113 = vmatprep.subr.bf16.mxu0 0
        %1114 = vmatpush1.bf16.msra.mxu0 %v1020
        %1115 = vmatprep.subr.bf16.mxu0 0
        %1116 = vmatpush1.bf16.msra.mxu0 %v1023
        %1117 = vmatprep.subr.bf16.mxu0 0
        %1118 = vmatpush1.bf16.msra.mxu0 0
        %1119 = vmatprep.subr.bf16.mxu0 0
        %1120 = vmatpush1.bf16.msra.mxu0 0
        %1121 = vmatprep.subr.bf16.mxu0 0
        %1122 = vmatpush1.bf16.msra.mxu0 0
        %1123 = vmatprep.subr.bf16.mxu0 0
        %1124 = vmatpush1.bf16.msra.mxu0 0
        %1125 = vmatprep.subr.bf16.mxu0 0
        %1126 = vmatpush1.bf16.msra.mxu0 0
        %1127 = vmatprep.subr.bf16.mxu0 0
        %1128 = vmatpush1.bf16.msra.mxu0 0
        %1129 = vmatprep.subr.bf16.mxu0 0
        %1130 = vmatpush1.bf16.msra.mxu0 0
        %1131 = vmatprep.subr.bf16.mxu0 0
        %1132 = vmatpush1.bf16.msra.mxu0 0
        %1133 = vmatprep.mubr.bf16.mxu0 0
        %1134 = vmatmul.mubr.bf16.gmra.mrb[0].mxu0 %v869
        %v1135 = vpop.f32.mrb[0].mxu0
        %v1136 = vadd.f32 %v916, %v1135
        %v1137 = vpop.f32.mrb[0].mxu0
        %v1138 = vpop.f32.mrb[0].mxu0
        %v1139 = vadd.f32 %v916, %v1138
        %v1140 = vpop.f32.mrb[0].mxu0
        %1141 = vmatprep.mubr.bf16.mxu0 0
        %1142 = vmatmul.mubr.bf16.gmra.mrb[0].mxu0 %v870
        %v1143 = vpop.f32.mrb[0].mxu0
        %v1144 = vadd.f32 %v916, %v1143
        %v1145 = vpop.f32.mrb[0].mxu0
        %v1146 = vpop.f32.mrb[0].mxu0
        %v1147 = vadd.f32 %v916, %v1146
        %v1148 = vpop.f32.mrb[0].mxu0
        %1149 = vdwg.mxu0
        %v1150 = vmul.f32 %v1083, 0.17677669
        %v1151 = vmul.f32 %v1087, 0.17677669
        %v1152 = vmul.f32 %v1093, 0.17677669
        %v1153 = vmul.f32 %v1097, 0.17677669
        %v1154 = vpack.c.bf16 %v1151, %v1150
        %v1155 = vpack.c.bf16 %v1153, %v1152
        %1158 = vrot.lane.b32.xlu0 %v1154, 96
        %v1159 = vpop.permute.xlu0 %1158
        %1160 = vrot.lane.b32.xlu0 %v1155, 96
        %v1161 = vpop.permute.xlu0 %1160
        %1162 = vrot.lane.b32.xlu0 %v1154, 64
        %v1163 = vpop.permute.xlu0 %1162
        %1164 = vrot.lane.b32.xlu0 %v1155, 64
        %v1165 = vpop.permute.xlu0 %1164
        %1166 = vrot.lane.b32.xlu0 %v1154, 32
        %v1167 = vpop.permute.xlu0 %1166
        %1168 = vrot.lane.b32.xlu0 %v1155, 32
        %v1169 = vpop.permute.xlu0 %1168
        %v1170 = vpack.c.bf16 %v1089, %v1085
        %v1171 = vpack.c.bf16 %v1099, %v1095
        %1174 = vrot.lane.b32.xlu0 %v1170, 96
        %v1175 = vpop.permute.xlu0 %1174
        %1176 = vrot.lane.b32.xlu0 %v1171, 96
        %v1177 = vpop.permute.xlu0 %1176
        %1178 = vrot.lane.b32.xlu0 %v1170, 64
        %v1179 = vpop.permute.xlu0 %1178
        %1180 = vrot.lane.b32.xlu0 %v1171, 64
        %v1181 = vpop.permute.xlu0 %1180
        %1182 = vrot.lane.b32.xlu0 %v1170, 32
        %v1183 = vpop.permute.xlu0 %1182
        %1184 = vrot.lane.b32.xlu0 %v1171, 32
        %v1185 = vpop.permute.xlu0 %1184
        %v1186 = vpack.c.bf16 %v1139, %v1136
        %v1187 = vpack.c.bf16 %v1147, %v1144
        %1190 = vrot.lane.b32.xlu0 %v1186, 96
        %v1191 = vpop.permute.xlu0 %1190
        %1192 = vrot.lane.b32.xlu0 %v1187, 96
        %v1193 = vpop.permute.xlu0 %1192
        %1196 = vrot.lane.b32.xlu0 %v1186, 64
        %v1197 = vpop.permute.xlu0 %1196
        %1198 = vrot.lane.b32.xlu0 %v1187, 64
        %v1199 = vpop.permute.xlu0 %1198
        %1202 = vrot.lane.b32.xlu0 %v1186, 32
        %v1203 = vpop.permute.xlu0 %1202
        %1204 = vrot.lane.b32.xlu0 %v1187, 32
        %v1205 = vpop.permute.xlu0 %1204
        %vm1208 = vcmask 261120
        %v1210 = vsel %vm1208, %v1154, 0
        %v1213 = vsel %vm1208, %v1170, 0
        %1215 = vmatprep.subr.bf16.mxu0 0
        %1216 = vmatpush1.bf16.xpose.msra.mxu0 %v1213
        %1217 = vmatprep.subr.bf16.mxu0 0
        %1218 = vmatpush1.bf16.xpose.msra.mxu0 0
        %1219 = vmatprep.subr.bf16.mxu0 0
        %1220 = vmatpush1.bf16.xpose.msra.mxu0 0
        %1221 = vmatprep.subr.bf16.mxu0 0
        %1222 = vmatpush1.bf16.xpose.msra.mxu0 0
        %1223 = vmatprep.subr.bf16.mxu0 0
        %1224 = vmatpush1.bf16.xpose.msra.mxu0 0
        %1225 = vmatprep.subr.bf16.mxu0 0
        %1226 = vmatpush1.bf16.xpose.msra.mxu0 0
        %1227 = vmatprep.subr.bf16.mxu0 0
        %1228 = vmatpush1.bf16.xpose.msra.mxu0 0
        %1229 = vmatprep.subr.bf16.mxu0 0
        %1230 = vmatpush1.bf16.xpose.msra.mxu0 0
        %1231 = vmatprep.subr.bf16.mxu0 0
        %1232 = vmatpush1.bf16.xpose.msra.mxu0 0
        %1233 = vmatprep.subr.bf16.mxu0 0
        %1234 = vmatpush1.bf16.xpose.msra.mxu0 0
        %1235 = vmatprep.subr.bf16.mxu0 0
        %1236 = vmatpush1.bf16.xpose.msra.mxu0 0
        %1237 = vmatprep.subr.bf16.mxu0 0
        %1238 = vmatpush1.bf16.xpose.msra.mxu0 0
        %1239 = vmatprep.subr.bf16.mxu0 0
        %1240 = vmatpush1.bf16.xpose.msra.mxu0 0
        %1241 = vmatprep.subr.bf16.mxu0 0
        %1242 = vmatpush1.bf16.xpose.msra.mxu0 0
        %1243 = vmatprep.subr.bf16.mxu0 0
        %1244 = vmatpush1.bf16.xpose.msra.mxu0 0
        %1245 = vmatprep.subr.bf16.mxu0 0
        %1246 = vmatpush1.bf16.xpose.msra.mxu0 0
        %1247 = vmatprep.mubr.bf16.mxu0 0
        %1248 = vmatmul.mubr.bf16.gmra.mrb[0].mxu0 %v1210
        %v1249 = vpop.f32.mrb[0].mxu0
        %v1250 = vadd.f32 0.0, %v1249
        %v1251 = vpop.f32.mrb[0].mxu0
        %v1252 = vpop.f32.mrb[0].mxu0
        %v1253 = vadd.f32 0.0, %v1252
        %v1254 = vpop.f32.mrb[0].mxu0
        %1255 = vdwg.mxu0
        %v1257 = vsel %vm1208, %v1155, 0
        %v1260 = vsel %vm1208, %v1171, 0
        %1262 = vmatprep.subr.bf16.mxu0 0
        %1263 = vmatpush1.bf16.xpose.msra.mxu0 %v1260
        %1264 = vmatprep.subr.bf16.mxu0 0
        %1265 = vmatpush1.bf16.xpose.msra.mxu0 0
        %1266 = vmatprep.subr.bf16.mxu0 0
        %1267 = vmatpush1.bf16.xpose.msra.mxu0 0
        %1268 = vmatprep.subr.bf16.mxu0 0
        %1269 = vmatpush1.bf16.xpose.msra.mxu0 0
        %1270 = vmatprep.subr.bf16.mxu0 0
        %1271 = vmatpush1.bf16.xpose.msra.mxu0 0
        %1272 = vmatprep.subr.bf16.mxu0 0
        %1273 = vmatpush1.bf16.xpose.msra.mxu0 0
        %1274 = vmatprep.subr.bf16.mxu0 0
        %1275 = vmatpush1.bf16.xpose.msra.mxu0 0
        %1276 = vmatprep.subr.bf16.mxu0 0
        %1277 = vmatpush1.bf16.xpose.msra.mxu0 0
        %1278 = vmatprep.subr.bf16.mxu0 0
        %1279 = vmatpush1.bf16.xpose.msra.mxu0 0
        %1280 = vmatprep.subr.bf16.mxu0 0
        %1281 = vmatpush1.bf16.xpose.msra.mxu0 0
        %1282 = vmatprep.subr.bf16.mxu0 0
        %1283 = vmatpush1.bf16.xpose.msra.mxu0 0
        %1284 = vmatprep.subr.bf16.mxu0 0
        %1285 = vmatpush1.bf16.xpose.msra.mxu0 0
        %1286 = vmatprep.subr.bf16.mxu0 0
        %1287 = vmatpush1.bf16.xpose.msra.mxu0 0
        %1288 = vmatprep.subr.bf16.mxu0 0
        %1289 = vmatpush1.bf16.xpose.msra.mxu0 0
        %1290 = vmatprep.subr.bf16.mxu0 0
        %1291 = vmatpush1.bf16.xpose.msra.mxu0 0
        %1292 = vmatprep.subr.bf16.mxu0 0
        %1293 = vmatpush1.bf16.xpose.msra.mxu0 0
        %1294 = vmatprep.mubr.bf16.mxu0 0
        %1295 = vmatmul.mubr.bf16.gmra.mrb[0].mxu0 %v1257
        %v1296 = vpop.f32.mrb[0].mxu0
        %v1297 = vadd.f32 0.0, %v1296
        %v1298 = vpop.f32.mrb[0].mxu0
        %v1299 = vpop.f32.mrb[0].mxu0
        %v1300 = vadd.f32 0.0, %v1299
        %v1301 = vpop.f32.mrb[0].mxu0
        %1302 = vdwg.mxu0
        %v1304 = vsel %vm1208, %v1159, 0
        %v1307 = vsel %vm1208, %v1175, 0
        %1309 = vmatprep.subr.bf16.mxu0 0
        %1310 = vmatpush1.bf16.xpose.msra.mxu0 %v1307
        %1311 = vmatprep.subr.bf16.mxu0 0
        %1312 = vmatpush1.bf16.xpose.msra.mxu0 0
        %1313 = vmatprep.subr.bf16.mxu0 0
        %1314 = vmatpush1.bf16.xpose.msra.mxu0 0
        %1315 = vmatprep.subr.bf16.mxu0 0
        %1316 = vmatpush1.bf16.xpose.msra.mxu0 0
        %1317 = vmatprep.subr.bf16.mxu0 0
        %1318 = vmatpush1.bf16.xpose.msra.mxu0 0
        %1319 = vmatprep.subr.bf16.mxu0 0
        %1320 = vmatpush1.bf16.xpose.msra.mxu0 0
        %1321 = vmatprep.subr.bf16.mxu0 0
        %1322 = vmatpush1.bf16.xpose.msra.mxu0 0
        %1323 = vmatprep.subr.bf16.mxu0 0
        %1324 = vmatpush1.bf16.xpose.msra.mxu0 0
        %1325 = vmatprep.subr.bf16.mxu0 0
        %1326 = vmatpush1.bf16.xpose.msra.mxu0 0
        %1327 = vmatprep.subr.bf16.mxu0 0
        %1328 = vmatpush1.bf16.xpose.msra.mxu0 0
        %1329 = vmatprep.subr.bf16.mxu0 0
        %1330 = vmatpush1.bf16.xpose.msra.mxu0 0
        %1331 = vmatprep.subr.bf16.mxu0 0
        %1332 = vmatpush1.bf16.xpose.msra.mxu0 0
        %1333 = vmatprep.subr.bf16.mxu0 0
        %1334 = vmatpush1.bf16.xpose.msra.mxu0 0
        %1335 = vmatprep.subr.bf16.mxu0 0
        %1336 = vmatpush1.bf16.xpose.msra.mxu0 0
        %1337 = vmatprep.subr.bf16.mxu0 0
        %1338 = vmatpush1.bf16.xpose.msra.mxu0 0
        %1339 = vmatprep.subr.bf16.mxu0 0
        %1340 = vmatpush1.bf16.xpose.msra.mxu0 0
        %1341 = vmatprep.mubr.bf16.mxu0 0
        %1342 = vmatmul.mubr.bf16.gmra.mrb[0].mxu0 %v1304
        %v1343 = vpop.f32.mrb[0].mxu0
        %v1344 = vadd.f32 0.0, %v1343
        %v1345 = vpop.f32.mrb[0].mxu0
        %v1346 = vpop.f32.mrb[0].mxu0
        %v1347 = vadd.f32 0.0, %v1346
        %v1348 = vpop.f32.mrb[0].mxu0
        %1349 = vdwg.mxu0
        %v1351 = vsel %vm1208, %v1161, 0
        %v1354 = vsel %vm1208, %v1177, 0
        %1356 = vmatprep.subr.bf16.mxu0 0
        %1357 = vmatpush1.bf16.xpose.msra.mxu0 %v1354
        %1358 = vmatprep.subr.bf16.mxu0 0
        %1359 = vmatpush1.bf16.xpose.msra.mxu0 0
        %1360 = vmatprep.subr.bf16.mxu0 0
        %1361 = vmatpush1.bf16.xpose.msra.mxu0 0
        %1362 = vmatprep.subr.bf16.mxu0 0
        %1363 = vmatpush1.bf16.xpose.msra.mxu0 0
        %1364 = vmatprep.subr.bf16.mxu0 0
        %1365 = vmatpush1.bf16.xpose.msra.mxu0 0
        %1366 = vmatprep.subr.bf16.mxu0 0
        %1367 = vmatpush1.bf16.xpose.msra.mxu0 0
        %1368 = vmatprep.subr.bf16.mxu0 0
        %1369 = vmatpush1.bf16.xpose.msra.mxu0 0
        %1370 = vmatprep.subr.bf16.mxu0 0
        %1371 = vmatpush1.bf16.xpose.msra.mxu0 0
        %1372 = vmatprep.subr.bf16.mxu0 0
        %1373 = vmatpush1.bf16.xpose.msra.mxu0 0
        %1374 = vmatprep.subr.bf16.mxu0 0
        %1375 = vmatpush1.bf16.xpose.msra.mxu0 0
        %1376 = vmatprep.subr.bf16.mxu0 0
        %1377 = vmatpush1.bf16.xpose.msra.mxu0 0
        %1378 = vmatprep.subr.bf16.mxu0 0
        %1379 = vmatpush1.bf16.xpose.msra.mxu0 0
        %1380 = vmatprep.subr.bf16.mxu0 0
        %1381 = vmatpush1.bf16.xpose.msra.mxu0 0
        %1382 = vmatprep.subr.bf16.mxu0 0
        %1383 = vmatpush1.bf16.xpose.msra.mxu0 0
        %1384 = vmatprep.subr.bf16.mxu0 0
        %1385 = vmatpush1.bf16.xpose.msra.mxu0 0
        %1386 = vmatprep.subr.bf16.mxu0 0
        %1387 = vmatpush1.bf16.xpose.msra.mxu0 0
        %1388 = vmatprep.mubr.bf16.mxu0 0
        %1389 = vmatmul.mubr.bf16.gmra.mrb[0].mxu0 %v1351
        %v1390 = vpop.f32.mrb[0].mxu0
        %v1391 = vadd.f32 0.0, %v1390
        %v1392 = vpop.f32.mrb[0].mxu0
        %v1393 = vpop.f32.mrb[0].mxu0
        %v1394 = vadd.f32 0.0, %v1393
        %v1395 = vpop.f32.mrb[0].mxu0
        %1396 = vdwg.mxu0
        %v1398 = vsel %vm1208, %v1163, 0
        %v1401 = vsel %vm1208, %v1179, 0
        %1403 = vmatprep.subr.bf16.mxu0 0
        %1404 = vmatpush1.bf16.xpose.msra.mxu0 %v1401
        %1405 = vmatprep.subr.bf16.mxu0 0
        %1406 = vmatpush1.bf16.xpose.msra.mxu0 0
        %1407 = vmatprep.subr.bf16.mxu0 0
        %1408 = vmatpush1.bf16.xpose.msra.mxu0 0
        %1409 = vmatprep.subr.bf16.mxu0 0
        %1410 = vmatpush1.bf16.xpose.msra.mxu0 0
        %1411 = vmatprep.subr.bf16.mxu0 0
        %1412 = vmatpush1.bf16.xpose.msra.mxu0 0
        %1413 = vmatprep.subr.bf16.mxu0 0
        %1414 = vmatpush1.bf16.xpose.msra.mxu0 0
        %1415 = vmatprep.subr.bf16.mxu0 0
        %1416 = vmatpush1.bf16.xpose.msra.mxu0 0
        %1417 = vmatprep.subr.bf16.mxu0 0
        %1418 = vmatpush1.bf16.xpose.msra.mxu0 0
        %1419 = vmatprep.subr.bf16.mxu0 0
        %1420 = vmatpush1.bf16.xpose.msra.mxu0 0
        %1421 = vmatprep.subr.bf16.mxu0 0
        %1422 = vmatpush1.bf16.xpose.msra.mxu0 0
        %1423 = vmatprep.subr.bf16.mxu0 0
        %1424 = vmatpush1.bf16.xpose.msra.mxu0 0
        %1425 = vmatprep.subr.bf16.mxu0 0
        %1426 = vmatpush1.bf16.xpose.msra.mxu0 0
        %1427 = vmatprep.subr.bf16.mxu0 0
        %1428 = vmatpush1.bf16.xpose.msra.mxu0 0
        %1429 = vmatprep.subr.bf16.mxu0 0
        %1430 = vmatpush1.bf16.xpose.msra.mxu0 0
        %1431 = vmatprep.subr.bf16.mxu0 0
        %1432 = vmatpush1.bf16.xpose.msra.mxu0 0
        %1433 = vmatprep.subr.bf16.mxu0 0
        %1434 = vmatpush1.bf16.xpose.msra.mxu0 0
        %1435 = vmatprep.mubr.bf16.mxu0 0
        %1436 = vmatmul.mubr.bf16.gmra.mrb[0].mxu0 %v1398
        %v1437 = vpop.f32.mrb[0].mxu0
        %v1438 = vadd.f32 0.0, %v1437
        %v1439 = vpop.f32.mrb[0].mxu0
        %v1440 = vpop.f32.mrb[0].mxu0
        %v1441 = vadd.f32 0.0, %v1440
        %v1442 = vpop.f32.mrb[0].mxu0
        %1443 = vdwg.mxu0
        %v1445 = vsel %vm1208, %v1165, 0
        %v1448 = vsel %vm1208, %v1181, 0
        %1450 = vmatprep.subr.bf16.mxu0 0
        %1451 = vmatpush1.bf16.xpose.msra.mxu0 %v1448
        %1452 = vmatprep.subr.bf16.mxu0 0
        %1453 = vmatpush1.bf16.xpose.msra.mxu0 0
        %1454 = vmatprep.subr.bf16.mxu0 0
        %1455 = vmatpush1.bf16.xpose.msra.mxu0 0
        %1456 = vmatprep.subr.bf16.mxu0 0
        %1457 = vmatpush1.bf16.xpose.msra.mxu0 0
        %1458 = vmatprep.subr.bf16.mxu0 0
        %1459 = vmatpush1.bf16.xpose.msra.mxu0 0
        %1460 = vmatprep.subr.bf16.mxu0 0
        %1461 = vmatpush1.bf16.xpose.msra.mxu0 0
        %1462 = vmatprep.subr.bf16.mxu0 0
        %1463 = vmatpush1.bf16.xpose.msra.mxu0 0
        %1464 = vmatprep.subr.bf16.mxu0 0
        %1465 = vmatpush1.bf16.xpose.msra.mxu0 0
        %1466 = vmatprep.subr.bf16.mxu0 0
        %1467 = vmatpush1.bf16.xpose.msra.mxu0 0
        %1468 = vmatprep.subr.bf16.mxu0 0
        %1469 = vmatpush1.bf16.xpose.msra.mxu0 0
        %1470 = vmatprep.subr.bf16.mxu0 0
        %1471 = vmatpush1.bf16.xpose.msra.mxu0 0
        %1472 = vmatprep.subr.bf16.mxu0 0
        %1473 = vmatpush1.bf16.xpose.msra.mxu0 0
        %1474 = vmatprep.subr.bf16.mxu0 0
        %1475 = vmatpush1.bf16.xpose.msra.mxu0 0
        %1476 = vmatprep.subr.bf16.mxu0 0
        %1477 = vmatpush1.bf16.xpose.msra.mxu0 0
        %1478 = vmatprep.subr.bf16.mxu0 0
        %1479 = vmatpush1.bf16.xpose.msra.mxu0 0
        %1480 = vmatprep.subr.bf16.mxu0 0
        %1481 = vmatpush1.bf16.xpose.msra.mxu0 0
        %1482 = vmatprep.mubr.bf16.mxu0 0
        %1483 = vmatmul.mubr.bf16.gmra.mrb[0].mxu0 %v1445
        %v1484 = vpop.f32.mrb[0].mxu0
        %v1485 = vadd.f32 0.0, %v1484
        %v1486 = vpop.f32.mrb[0].mxu0
        %v1487 = vpop.f32.mrb[0].mxu0
        %v1488 = vadd.f32 0.0, %v1487
        %v1489 = vpop.f32.mrb[0].mxu0
        %1490 = vdwg.mxu0
        %v1492 = vsel %vm1208, %v1167, 0
        %v1495 = vsel %vm1208, %v1183, 0
        %1497 = vmatprep.subr.bf16.mxu0 0
        %1498 = vmatpush1.bf16.xpose.msra.mxu0 %v1495
        %1499 = vmatprep.subr.bf16.mxu0 0
        %1500 = vmatpush1.bf16.xpose.msra.mxu0 0
        %1501 = vmatprep.subr.bf16.mxu0 0
        %1502 = vmatpush1.bf16.xpose.msra.mxu0 0
        %1503 = vmatprep.subr.bf16.mxu0 0
        %1504 = vmatpush1.bf16.xpose.msra.mxu0 0
        %1505 = vmatprep.subr.bf16.mxu0 0
        %1506 = vmatpush1.bf16.xpose.msra.mxu0 0
        %1507 = vmatprep.subr.bf16.mxu0 0
        %1508 = vmatpush1.bf16.xpose.msra.mxu0 0
        %1509 = vmatprep.subr.bf16.mxu0 0
        %1510 = vmatpush1.bf16.xpose.msra.mxu0 0
        %1511 = vmatprep.subr.bf16.mxu0 0
        %1512 = vmatpush1.bf16.xpose.msra.mxu0 0
        %1513 = vmatprep.subr.bf16.mxu0 0
        %1514 = vmatpush1.bf16.xpose.msra.mxu0 0
        %1515 = vmatprep.subr.bf16.mxu0 0
        %1516 = vmatpush1.bf16.xpose.msra.mxu0 0
        %1517 = vmatprep.subr.bf16.mxu0 0
        %1518 = vmatpush1.bf16.xpose.msra.mxu0 0
        %1519 = vmatprep.subr.bf16.mxu0 0
        %1520 = vmatpush1.bf16.xpose.msra.mxu0 0
        %1521 = vmatprep.subr.bf16.mxu0 0
        %1522 = vmatpush1.bf16.xpose.msra.mxu0 0
        %1523 = vmatprep.subr.bf16.mxu0 0
        %1524 = vmatpush1.bf16.xpose.msra.mxu0 0
        %1525 = vmatprep.subr.bf16.mxu0 0
        %1526 = vmatpush1.bf16.xpose.msra.mxu0 0
        %1527 = vmatprep.subr.bf16.mxu0 0
        %1528 = vmatpush1.bf16.xpose.msra.mxu0 0
        %1529 = vmatprep.mubr.bf16.mxu0 0
        %1530 = vmatmul.mubr.bf16.gmra.mrb[0].mxu0 %v1492
        %v1531 = vpop.f32.mrb[0].mxu0
        %v1532 = vadd.f32 0.0, %v1531
        %v1533 = vpop.f32.mrb[0].mxu0
        %v1534 = vpop.f32.mrb[0].mxu0
        %v1535 = vadd.f32 0.0, %v1534
        %v1536 = vpop.f32.mrb[0].mxu0
        %1537 = vdwg.mxu0
        %v1539 = vsel %vm1208, %v1169, 0
        %v1542 = vsel %vm1208, %v1185, 0
        %1544 = vmatprep.subr.bf16.mxu0 0
        %1545 = vmatpush1.bf16.xpose.msra.mxu0 %v1542
        %1546 = vmatprep.subr.bf16.mxu0 0
        %1547 = vmatpush1.bf16.xpose.msra.mxu0 0
        %1548 = vmatprep.subr.bf16.mxu0 0
        %1549 = vmatpush1.bf16.xpose.msra.mxu0 0
        %1550 = vmatprep.subr.bf16.mxu0 0
        %1551 = vmatpush1.bf16.xpose.msra.mxu0 0
        %1552 = vmatprep.subr.bf16.mxu0 0
        %1553 = vmatpush1.bf16.xpose.msra.mxu0 0
        %1554 = vmatprep.subr.bf16.mxu0 0
        %1555 = vmatpush1.bf16.xpose.msra.mxu0 0
        %1556 = vmatprep.subr.bf16.mxu0 0
        %1557 = vmatpush1.bf16.xpose.msra.mxu0 0
        %1558 = vmatprep.subr.bf16.mxu0 0
        %1559 = vmatpush1.bf16.xpose.msra.mxu0 0
        %1560 = vmatprep.subr.bf16.mxu0 0
        %1561 = vmatpush1.bf16.xpose.msra.mxu0 0
        %1562 = vmatprep.subr.bf16.mxu0 0
        %1563 = vmatpush1.bf16.xpose.msra.mxu0 0
        %1564 = vmatprep.subr.bf16.mxu0 0
        %1565 = vmatpush1.bf16.xpose.msra.mxu0 0
        %1566 = vmatprep.subr.bf16.mxu0 0
        %1567 = vmatpush1.bf16.xpose.msra.mxu0 0
        %1568 = vmatprep.subr.bf16.mxu0 0
        %1569 = vmatpush1.bf16.xpose.msra.mxu0 0
        %1570 = vmatprep.subr.bf16.mxu0 0
        %1571 = vmatpush1.bf16.xpose.msra.mxu0 0
        %1572 = vmatprep.subr.bf16.mxu0 0
        %1573 = vmatpush1.bf16.xpose.msra.mxu0 0
        %1574 = vmatprep.subr.bf16.mxu0 0
        %1575 = vmatpush1.bf16.xpose.msra.mxu0 0
        %1576 = vmatprep.mubr.bf16.mxu0 0
        %1577 = vmatmul.mubr.bf16.gmra.mrb[0].mxu0 %v1539
        %v1578 = vpop.f32.mrb[0].mxu0
        %v1579 = vadd.f32 0.0, %v1578
        %v1580 = vpop.f32.mrb[0].mxu0
        %v1581 = vpop.f32.mrb[0].mxu0
        %v1582 = vadd.f32 0.0, %v1581
        %v1583 = vpop.f32.mrb[0].mxu0
        %1584 = vdwg.mxu0
        %vm1585 = vcmask 130048
        %v1586 = vsel %vm1585, %v1250, -inf
        %1587 = vmax.xlane.f32.xlu0 %v1586
        %v1588 = vpop.xlane.xlu0 %1587
        %v1589 = vsel %vm1585, %v1253, -inf
        %1590 = vmax.xlane.f32.xlu0 %v1589
        %v1591 = vpop.xlane.xlu0 %1590
        %v1592 = vsel %vm1585, %v1297, -inf
        %1593 = vmax.xlane.f32.xlu0 %v1592
        %v1594 = vpop.xlane.xlu0 %1593
        %v1595 = vsel %vm1585, %v1300, -inf
        %1596 = vmax.xlane.f32.xlu0 %v1595
        %v1597 = vpop.xlane.xlu0 %1596
        %v1598 = vsel %vm1585, %v1344, -inf
        %1599 = vmax.xlane.f32.xlu0 %v1598
        %v1600 = vpop.xlane.xlu0 %1599
        %v1601 = vsel %vm1585, %v1347, -inf
        %1602 = vmax.xlane.f32.xlu0 %v1601
        %v1603 = vpop.xlane.xlu0 %1602
        %v1604 = vsel %vm1585, %v1391, -inf
        %1605 = vmax.xlane.f32.xlu0 %v1604
        %v1606 = vpop.xlane.xlu0 %1605
        %v1607 = vsel %vm1585, %v1394, -inf
        %1608 = vmax.xlane.f32.xlu0 %v1607
        %v1609 = vpop.xlane.xlu0 %1608
        %v1610 = vsel %vm1585, %v1438, -inf
        %1611 = vmax.xlane.f32.xlu0 %v1610
        %v1612 = vpop.xlane.xlu0 %1611
        %v1613 = vsel %vm1585, %v1441, -inf
        %1614 = vmax.xlane.f32.xlu0 %v1613
        %v1615 = vpop.xlane.xlu0 %1614
        %v1616 = vsel %vm1585, %v1485, -inf
        %1617 = vmax.xlane.f32.xlu0 %v1616
        %v1618 = vpop.xlane.xlu0 %1617
        %v1619 = vsel %vm1585, %v1488, -inf
        %1620 = vmax.xlane.f32.xlu0 %v1619
        %v1621 = vpop.xlane.xlu0 %1620
        %v1622 = vsel %vm1585, %v1532, -inf
        %1623 = vmax.xlane.f32.xlu0 %v1622
        %v1624 = vpop.xlane.xlu0 %1623
        %v1625 = vsel %vm1585, %v1535, -inf
        %1626 = vmax.xlane.f32.xlu0 %v1625
        %v1627 = vpop.xlane.xlu0 %1626
        %v1628 = vsel %vm1585, %v1579, -inf
        %1629 = vmax.xlane.f32.xlu0 %v1628
        %v1630 = vpop.xlane.xlu0 %1629
        %v1631 = vsel %vm1585, %v1582, -inf
        %1632 = vmax.xlane.f32.xlu0 %v1631
        %v1633 = vpop.xlane.xlu0 %1632
        %v1634 = vsub.f32 %v1250, %v1588
        %v1635 = vsub.f32 %v1253, %v1591
        %v1636 = vsub.f32 %v1297, %v1594
        %v1637 = vsub.f32 %v1300, %v1597
        %v1638 = vsub.f32 %v1344, %v1600
        %v1639 = vsub.f32 %v1347, %v1603
        %v1640 = vsub.f32 %v1391, %v1606
        %v1641 = vsub.f32 %v1394, %v1609
        %v1642 = vsub.f32 %v1438, %v1612
        %v1643 = vsub.f32 %v1441, %v1615
        %v1644 = vsub.f32 %v1485, %v1618
        %v1645 = vsub.f32 %v1488, %v1621
        %v1646 = vsub.f32 %v1532, %v1624
        %v1647 = vsub.f32 %v1535, %v1627
        %v1648 = vsub.f32 %v1579, %v1630
        %v1649 = vsub.f32 %v1582, %v1633
        %v1650 = vmul.f32 %v1634, 1.442695
        %v1651 = vpow.pop %v1650
        %v1652 = vmul.f32 %v1635, 1.442695
        %v1653 = vpow.pop %v1652
        %v1654 = vmul.f32 %v1636, 1.442695
        %v1655 = vpow.pop %v1654
        %v1656 = vmul.f32 %v1637, 1.442695
        %v1657 = vpow.pop %v1656
        %v1658 = vmul.f32 %v1638, 1.442695
        %v1659 = vpow.pop %v1658
        %v1660 = vmul.f32 %v1639, 1.442695
        %v1661 = vpow.pop %v1660
        %v1662 = vmul.f32 %v1640, 1.442695
        %v1663 = vpow.pop %v1662
        %v1664 = vmul.f32 %v1641, 1.442695
        %v1665 = vpow.pop %v1664
        %v1666 = vmul.f32 %v1642, 1.442695
        %v1667 = vpow.pop %v1666
        %v1668 = vmul.f32 %v1643, 1.442695
        %v1669 = vpow.pop %v1668
        %v1670 = vmul.f32 %v1644, 1.442695
        %v1671 = vpow.pop %v1670
        %v1672 = vmul.f32 %v1645, 1.442695
        %v1673 = vpow.pop %v1672
        %v1674 = vmul.f32 %v1646, 1.442695
        %v1675 = vpow.pop %v1674
        %v1676 = vmul.f32 %v1647, 1.442695
        %v1677 = vpow.pop %v1676
        %v1678 = vmul.f32 %v1648, 1.442695
        %v1679 = vpow.pop %v1678
        %v1680 = vmul.f32 %v1649, 1.442695
        %v1681 = vpow.pop %v1680
        %v1682 = vsel %vm1585, %v1651, 0.0
        %1683 = vadd.xlane.f32.xlu0 %v1682
        %v1684 = vpop.xlane.xlu0 %1683
        %v1685 = vsel %vm1585, %v1653, 0.0
        %1686 = vadd.xlane.f32.xlu0 %v1685
        %v1687 = vpop.xlane.xlu0 %1686
        %v1688 = vsel %vm1585, %v1655, 0.0
        %1689 = vadd.xlane.f32.xlu0 %v1688
        %v1690 = vpop.xlane.xlu0 %1689
        %v1691 = vsel %vm1585, %v1657, 0.0
        %1692 = vadd.xlane.f32.xlu0 %v1691
        %v1693 = vpop.xlane.xlu0 %1692
        %v1694 = vsel %vm1585, %v1659, 0.0
        %1695 = vadd.xlane.f32.xlu0 %v1694
        %v1696 = vpop.xlane.xlu0 %1695
        %v1697 = vsel %vm1585, %v1661, 0.0
        %1698 = vadd.xlane.f32.xlu0 %v1697
        %v1699 = vpop.xlane.xlu0 %1698
        %v1700 = vsel %vm1585, %v1663, 0.0
        %1701 = vadd.xlane.f32.xlu0 %v1700
        %v1702 = vpop.xlane.xlu0 %1701
        %v1703 = vsel %vm1585, %v1665, 0.0
        %1704 = vadd.xlane.f32.xlu0 %v1703
        %v1705 = vpop.xlane.xlu0 %1704
        %v1706 = vsel %vm1585, %v1667, 0.0
        %1707 = vadd.xlane.f32.xlu0 %v1706
        %v1708 = vpop.xlane.xlu0 %1707
        %v1709 = vsel %vm1585, %v1669, 0.0
        %1710 = vadd.xlane.f32.xlu0 %v1709
        %v1711 = vpop.xlane.xlu0 %1710
        %v1712 = vsel %vm1585, %v1671, 0.0
        %1713 = vadd.xlane.f32.xlu0 %v1712
        %v1714 = vpop.xlane.xlu0 %1713
        %v1715 = vsel %vm1585, %v1673, 0.0
        %1716 = vadd.xlane.f32.xlu0 %v1715
        %v1717 = vpop.xlane.xlu0 %1716
        %v1718 = vsel %vm1585, %v1675, 0.0
        %1719 = vadd.xlane.f32.xlu0 %v1718
        %v1720 = vpop.xlane.xlu0 %1719
        %v1721 = vsel %vm1585, %v1677, 0.0
        %1722 = vadd.xlane.f32.xlu0 %v1721
        %v1723 = vpop.xlane.xlu0 %1722
        %v1724 = vsel %vm1585, %v1679, 0.0
        %1725 = vadd.xlane.f32.xlu0 %v1724
        %v1726 = vpop.xlane.xlu0 %1725
        %v1727 = vsel %vm1585, %v1681, 0.0
        %1728 = vadd.xlane.f32.xlu0 %v1727
        %v1729 = vpop.xlane.xlu0 %1728
        %v1730 = vrcp.pop %v1684
        %v1731 = vrcp.pop %v1687
        %v1732 = vrcp.pop %v1690
        %v1733 = vrcp.pop %v1693
        %v1734 = vrcp.pop %v1696
        %v1735 = vrcp.pop %v1699
        %v1736 = vrcp.pop %v1702
        %v1737 = vrcp.pop %v1705
        %v1738 = vrcp.pop %v1708
        %v1739 = vrcp.pop %v1711
        %v1740 = vrcp.pop %v1714
        %v1741 = vrcp.pop %v1717
        %v1742 = vrcp.pop %v1720
        %v1743 = vrcp.pop %v1723
        %v1744 = vrcp.pop %v1726
        %v1745 = vrcp.pop %v1729
        %v1746 = vmul.f32 %v1651, %v1730
        %v1747 = vmul.f32 %v1653, %v1731
        %v1748 = vmul.f32 %v1655, %v1732
        %v1749 = vmul.f32 %v1657, %v1733
        %v1750 = vmul.f32 %v1659, %v1734
        %v1751 = vmul.f32 %v1661, %v1735
        %v1752 = vmul.f32 %v1663, %v1736
        %v1753 = vmul.f32 %v1665, %v1737
        %v1754 = vmul.f32 %v1667, %v1738
        %v1755 = vmul.f32 %v1669, %v1739
        %v1756 = vmul.f32 %v1671, %v1740
        %v1757 = vmul.f32 %v1673, %v1741
        %v1758 = vmul.f32 %v1675, %v1742
        %v1759 = vmul.f32 %v1677, %v1743
        %v1760 = vmul.f32 %v1679, %v1744
        %v1761 = vmul.f32 %v1681, %v1745
        %v1762 = vpack.c.bf16 %v1747, %v1746
        %v1763 = vpack.c.bf16 %v1749, %v1748
        %v1764 = vpack.c.bf16 %v1751, %v1750
        %v1765 = vpack.c.bf16 %v1753, %v1752
        %v1766 = vpack.c.bf16 %v1755, %v1754
        %v1767 = vpack.c.bf16 %v1757, %v1756
        %v1768 = vpack.c.bf16 %v1759, %v1758
        %v1769 = vpack.c.bf16 %v1761, %v1760
        %v1771 = vsel %vm1585, %v1762, 0
        %1773 = vmatprep.subr.bf16.mxu0 0
        %1774 = vmatpush1.bf16.msra.mxu0 %v1186
        %1775 = vmatprep.subr.bf16.mxu0 0
        %1776 = vmatpush1.bf16.msra.mxu0 0
        %1777 = vmatprep.subr.bf16.mxu0 0
        %1778 = vmatpush1.bf16.msra.mxu0 0
        %1779 = vmatprep.subr.bf16.mxu0 0
        %1780 = vmatpush1.bf16.msra.mxu0 0
        %1781 = vmatprep.subr.bf16.mxu0 0
        %1782 = vmatpush1.bf16.msra.mxu0 0
        %1783 = vmatprep.subr.bf16.mxu0 0
        %1784 = vmatpush1.bf16.msra.mxu0 0
        %1785 = vmatprep.subr.bf16.mxu0 0
        %1786 = vmatpush1.bf16.msra.mxu0 0
        %1787 = vmatprep.subr.bf16.mxu0 0
        %1788 = vmatpush1.bf16.msra.mxu0 0
        %1789 = vmatprep.subr.bf16.mxu0 0
        %1790 = vmatpush1.bf16.msra.mxu0 0
        %1791 = vmatprep.subr.bf16.mxu0 0
        %1792 = vmatpush1.bf16.msra.mxu0 0
        %1793 = vmatprep.subr.bf16.mxu0 0
        %1794 = vmatpush1.bf16.msra.mxu0 0
        %1795 = vmatprep.subr.bf16.mxu0 0
        %1796 = vmatpush1.bf16.msra.mxu0 0
        %1797 = vmatprep.subr.bf16.mxu0 0
        %1798 = vmatpush1.bf16.msra.mxu0 0
        %1799 = vmatprep.subr.bf16.mxu0 0
        %1800 = vmatpush1.bf16.msra.mxu0 0
        %1801 = vmatprep.subr.bf16.mxu0 0
        %1802 = vmatpush1.bf16.msra.mxu0 0
        %1803 = vmatprep.subr.bf16.mxu0 0
        %1804 = vmatpush1.bf16.msra.mxu0 0
        %1805 = vmatprep.mubr.bf16.mxu0 0
        %1806 = vmatmul.mubr.bf16.gmra.mrb[0].mxu0 %v1771
        %v1807 = vpop.f32.mrb[0].mxu0
        %v1808 = vadd.f32 0.0, %v1807
        %v1809 = vpop.f32.mrb[0].mxu0
        %v1810 = vpop.f32.mrb[0].mxu0
        %v1811 = vadd.f32 0.0, %v1810
        %v1812 = vpop.f32.mrb[0].mxu0
        %1813 = vdwg.mxu0
        %v1815 = vsel %vm1585, %v1763, 0
        %1817 = vmatprep.subr.bf16.mxu0 0
        %1818 = vmatpush1.bf16.msra.mxu0 %v1187
        %1819 = vmatprep.subr.bf16.mxu0 0
        %1820 = vmatpush1.bf16.msra.mxu0 0
        %1821 = vmatprep.subr.bf16.mxu0 0
        %1822 = vmatpush1.bf16.msra.mxu0 0
        %1823 = vmatprep.subr.bf16.mxu0 0
        %1824 = vmatpush1.bf16.msra.mxu0 0
        %1825 = vmatprep.subr.bf16.mxu0 0
        %1826 = vmatpush1.bf16.msra.mxu0 0
        %1827 = vmatprep.subr.bf16.mxu0 0
        %1828 = vmatpush1.bf16.msra.mxu0 0
        %1829 = vmatprep.subr.bf16.mxu0 0
        %1830 = vmatpush1.bf16.msra.mxu0 0
        %1831 = vmatprep.subr.bf16.mxu0 0
        %1832 = vmatpush1.bf16.msra.mxu0 0
        %1833 = vmatprep.subr.bf16.mxu0 0
        %1834 = vmatpush1.bf16.msra.mxu0 0
        %1835 = vmatprep.subr.bf16.mxu0 0
        %1836 = vmatpush1.bf16.msra.mxu0 0
        %1837 = vmatprep.subr.bf16.mxu0 0
        %1838 = vmatpush1.bf16.msra.mxu0 0
        %1839 = vmatprep.subr.bf16.mxu0 0
        %1840 = vmatpush1.bf16.msra.mxu0 0
        %1841 = vmatprep.subr.bf16.mxu0 0
        %1842 = vmatpush1.bf16.msra.mxu0 0
        %1843 = vmatprep.subr.bf16.mxu0 0
        %1844 = vmatpush1.bf16.msra.mxu0 0
        %1845 = vmatprep.subr.bf16.mxu0 0
        %1846 = vmatpush1.bf16.msra.mxu0 0
        %1847 = vmatprep.subr.bf16.mxu0 0
        %1848 = vmatpush1.bf16.msra.mxu0 0
        %1849 = vmatprep.mubr.bf16.mxu0 0
        %1850 = vmatmul.mubr.bf16.gmra.mrb[0].mxu0 %v1815
        %v1851 = vpop.f32.mrb[0].mxu0
        %v1852 = vadd.f32 0.0, %v1851
        %v1853 = vpop.f32.mrb[0].mxu0
        %v1854 = vpop.f32.mrb[0].mxu0
        %v1855 = vadd.f32 0.0, %v1854
        %v1856 = vpop.f32.mrb[0].mxu0
        %1857 = vdwg.mxu0
        %v1859 = vsel %vm1585, %v1764, 0
        %1861 = vmatprep.subr.bf16.mxu0 0
        %1862 = vmatpush1.bf16.msra.mxu0 %v1191
        %1863 = vmatprep.subr.bf16.mxu0 0
        %1864 = vmatpush1.bf16.msra.mxu0 0
        %1865 = vmatprep.subr.bf16.mxu0 0
        %1866 = vmatpush1.bf16.msra.mxu0 0
        %1867 = vmatprep.subr.bf16.mxu0 0
        %1868 = vmatpush1.bf16.msra.mxu0 0
        %1869 = vmatprep.subr.bf16.mxu0 0
        %1870 = vmatpush1.bf16.msra.mxu0 0
        %1871 = vmatprep.subr.bf16.mxu0 0
        %1872 = vmatpush1.bf16.msra.mxu0 0
        %1873 = vmatprep.subr.bf16.mxu0 0
        %1874 = vmatpush1.bf16.msra.mxu0 0
        %1875 = vmatprep.subr.bf16.mxu0 0
        %1876 = vmatpush1.bf16.msra.mxu0 0
        %1877 = vmatprep.subr.bf16.mxu0 0
        %1878 = vmatpush1.bf16.msra.mxu0 0
        %1879 = vmatprep.subr.bf16.mxu0 0
        %1880 = vmatpush1.bf16.msra.mxu0 0
        %1881 = vmatprep.subr.bf16.mxu0 0
        %1882 = vmatpush1.bf16.msra.mxu0 0
        %1883 = vmatprep.subr.bf16.mxu0 0
        %1884 = vmatpush1.bf16.msra.mxu0 0
        %1885 = vmatprep.subr.bf16.mxu0 0
        %1886 = vmatpush1.bf16.msra.mxu0 0
        %1887 = vmatprep.subr.bf16.mxu0 0
        %1888 = vmatpush1.bf16.msra.mxu0 0
        %1889 = vmatprep.subr.bf16.mxu0 0
        %1890 = vmatpush1.bf16.msra.mxu0 0
        %1891 = vmatprep.subr.bf16.mxu0 0
        %1892 = vmatpush1.bf16.msra.mxu0 0
        %1893 = vmatprep.mubr.bf16.mxu0 0
        %1894 = vmatmul.mubr.bf16.gmra.mrb[0].mxu0 %v1859
        %v1895 = vpop.f32.mrb[0].mxu0
        %v1896 = vadd.f32 0.0, %v1895
        %v1897 = vpop.f32.mrb[0].mxu0
        %v1898 = vpop.f32.mrb[0].mxu0
        %v1899 = vadd.f32 0.0, %v1898
        %v1900 = vpop.f32.mrb[0].mxu0
        %1901 = vdwg.mxu0
        %v1903 = vsel %vm1585, %v1765, 0
        %1905 = vmatprep.subr.bf16.mxu0 0
        %1906 = vmatpush1.bf16.msra.mxu0 %v1193
        %1907 = vmatprep.subr.bf16.mxu0 0
        %1908 = vmatpush1.bf16.msra.mxu0 0
        %1909 = vmatprep.subr.bf16.mxu0 0
        %1910 = vmatpush1.bf16.msra.mxu0 0
        %1911 = vmatprep.subr.bf16.mxu0 0
        %1912 = vmatpush1.bf16.msra.mxu0 0
        %1913 = vmatprep.subr.bf16.mxu0 0
        %1914 = vmatpush1.bf16.msra.mxu0 0
        %1915 = vmatprep.subr.bf16.mxu0 0
        %1916 = vmatpush1.bf16.msra.mxu0 0
        %1917 = vmatprep.subr.bf16.mxu0 0
        %1918 = vmatpush1.bf16.msra.mxu0 0
        %1919 = vmatprep.subr.bf16.mxu0 0
        %1920 = vmatpush1.bf16.msra.mxu0 0
        %1921 = vmatprep.subr.bf16.mxu0 0
        %1922 = vmatpush1.bf16.msra.mxu0 0
        %1923 = vmatprep.subr.bf16.mxu0 0
        %1924 = vmatpush1.bf16.msra.mxu0 0
        %1925 = vmatprep.subr.bf16.mxu0 0
        %1926 = vmatpush1.bf16.msra.mxu0 0
        %1927 = vmatprep.subr.bf16.mxu0 0
        %1928 = vmatpush1.bf16.msra.mxu0 0
        %1929 = vmatprep.subr.bf16.mxu0 0
        %1930 = vmatpush1.bf16.msra.mxu0 0
        %1931 = vmatprep.subr.bf16.mxu0 0
        %1932 = vmatpush1.bf16.msra.mxu0 0
        %1933 = vmatprep.subr.bf16.mxu0 0
        %1934 = vmatpush1.bf16.msra.mxu0 0
        %1935 = vmatprep.subr.bf16.mxu0 0
        %1936 = vmatpush1.bf16.msra.mxu0 0
        %1937 = vmatprep.mubr.bf16.mxu0 0
        %1938 = vmatmul.mubr.bf16.gmra.mrb[0].mxu0 %v1903
        %v1939 = vpop.f32.mrb[0].mxu0
        %v1940 = vadd.f32 0.0, %v1939
        %v1941 = vpop.f32.mrb[0].mxu0
        %v1942 = vpop.f32.mrb[0].mxu0
        %v1943 = vadd.f32 0.0, %v1942
        %v1944 = vpop.f32.mrb[0].mxu0
        %1945 = vdwg.mxu0
        %v1947 = vsel %vm1585, %v1766, 0
        %1949 = vmatprep.subr.bf16.mxu0 0
        %1950 = vmatpush1.bf16.msra.mxu0 %v1197
        %1951 = vmatprep.subr.bf16.mxu0 0
        %1952 = vmatpush1.bf16.msra.mxu0 0
        %1953 = vmatprep.subr.bf16.mxu0 0
        %1954 = vmatpush1.bf16.msra.mxu0 0
        %1955 = vmatprep.subr.bf16.mxu0 0
        %1956 = vmatpush1.bf16.msra.mxu0 0
        %1957 = vmatprep.subr.bf16.mxu0 0
        %1958 = vmatpush1.bf16.msra.mxu0 0
        %1959 = vmatprep.subr.bf16.mxu0 0
        %1960 = vmatpush1.bf16.msra.mxu0 0
        %1961 = vmatprep.subr.bf16.mxu0 0
        %1962 = vmatpush1.bf16.msra.mxu0 0
        %1963 = vmatprep.subr.bf16.mxu0 0
        %1964 = vmatpush1.bf16.msra.mxu0 0
        %1965 = vmatprep.subr.bf16.mxu0 0
        %1966 = vmatpush1.bf16.msra.mxu0 0
        %1967 = vmatprep.subr.bf16.mxu0 0
        %1968 = vmatpush1.bf16.msra.mxu0 0
        %1969 = vmatprep.subr.bf16.mxu0 0
        %1970 = vmatpush1.bf16.msra.mxu0 0
        %1971 = vmatprep.subr.bf16.mxu0 0
        %1972 = vmatpush1.bf16.msra.mxu0 0
        %1973 = vmatprep.subr.bf16.mxu0 0
        %1974 = vmatpush1.bf16.msra.mxu0 0
        %1975 = vmatprep.subr.bf16.mxu0 0
        %1976 = vmatpush1.bf16.msra.mxu0 0
        %1977 = vmatprep.subr.bf16.mxu0 0
        %1978 = vmatpush1.bf16.msra.mxu0 0
        %1979 = vmatprep.subr.bf16.mxu0 0
        %1980 = vmatpush1.bf16.msra.mxu0 0
        %1981 = vmatprep.mubr.bf16.mxu0 0
        %1982 = vmatmul.mubr.bf16.gmra.mrb[0].mxu0 %v1947
        %v1983 = vpop.f32.mrb[0].mxu0
        %v1984 = vadd.f32 0.0, %v1983
        %v1985 = vpop.f32.mrb[0].mxu0
        %v1986 = vpop.f32.mrb[0].mxu0
        %v1987 = vadd.f32 0.0, %v1986
        %v1988 = vpop.f32.mrb[0].mxu0
        %1989 = vdwg.mxu0
        %v1991 = vsel %vm1585, %v1767, 0
        %1993 = vmatprep.subr.bf16.mxu0 0
        %1994 = vmatpush1.bf16.msra.mxu0 %v1199
        %1995 = vmatprep.subr.bf16.mxu0 0
        %1996 = vmatpush1.bf16.msra.mxu0 0
        %1997 = vmatprep.subr.bf16.mxu0 0
        %1998 = vmatpush1.bf16.msra.mxu0 0
        %1999 = vmatprep.subr.bf16.mxu0 0
        %2000 = vmatpush1.bf16.msra.mxu0 0
        %2001 = vmatprep.subr.bf16.mxu0 0
        %2002 = vmatpush1.bf16.msra.mxu0 0
        %2003 = vmatprep.subr.bf16.mxu0 0
        %2004 = vmatpush1.bf16.msra.mxu0 0
        %2005 = vmatprep.subr.bf16.mxu0 0
        %2006 = vmatpush1.bf16.msra.mxu0 0
        %2007 = vmatprep.subr.bf16.mxu0 0
        %2008 = vmatpush1.bf16.msra.mxu0 0
        %2009 = vmatprep.subr.bf16.mxu0 0
        %2010 = vmatpush1.bf16.msra.mxu0 0
        %2011 = vmatprep.subr.bf16.mxu0 0
        %2012 = vmatpush1.bf16.msra.mxu0 0
        %2013 = vmatprep.subr.bf16.mxu0 0
        %2014 = vmatpush1.bf16.msra.mxu0 0
        %2015 = vmatprep.subr.bf16.mxu0 0
        %2016 = vmatpush1.bf16.msra.mxu0 0
        %2017 = vmatprep.subr.bf16.mxu0 0
        %2018 = vmatpush1.bf16.msra.mxu0 0
        %2019 = vmatprep.subr.bf16.mxu0 0
        %2020 = vmatpush1.bf16.msra.mxu0 0
        %2021 = vmatprep.subr.bf16.mxu0 0
        %2022 = vmatpush1.bf16.msra.mxu0 0
        %2023 = vmatprep.subr.bf16.mxu0 0
        %2024 = vmatpush1.bf16.msra.mxu0 0
        %2025 = vmatprep.mubr.bf16.mxu0 0
        %2026 = vmatmul.mubr.bf16.gmra.mrb[0].mxu0 %v1991
        %v2027 = vpop.f32.mrb[0].mxu0
        %v2028 = vadd.f32 0.0, %v2027
        %v2029 = vpop.f32.mrb[0].mxu0
        %v2030 = vpop.f32.mrb[0].mxu0
        %v2031 = vadd.f32 0.0, %v2030
        %v2032 = vpop.f32.mrb[0].mxu0
        %2033 = vdwg.mxu0
        %v2035 = vsel %vm1585, %v1768, 0
        %2037 = vmatprep.subr.bf16.mxu0 0
        %2038 = vmatpush1.bf16.msra.mxu0 %v1203
        %2039 = vmatprep.subr.bf16.mxu0 0
        %2040 = vmatpush1.bf16.msra.mxu0 0
        %2041 = vmatprep.subr.bf16.mxu0 0
        %2042 = vmatpush1.bf16.msra.mxu0 0
        %2043 = vmatprep.subr.bf16.mxu0 0
        %2044 = vmatpush1.bf16.msra.mxu0 0
        %2045 = vmatprep.subr.bf16.mxu0 0
        %2046 = vmatpush1.bf16.msra.mxu0 0
        %2047 = vmatprep.subr.bf16.mxu0 0
        %2048 = vmatpush1.bf16.msra.mxu0 0
        %2049 = vmatprep.subr.bf16.mxu0 0
        %2050 = vmatpush1.bf16.msra.mxu0 0
        %2051 = vmatprep.subr.bf16.mxu0 0
        %2052 = vmatpush1.bf16.msra.mxu0 0
        %2053 = vmatprep.subr.bf16.mxu0 0
        %2054 = vmatpush1.bf16.msra.mxu0 0
        %2055 = vmatprep.subr.bf16.mxu0 0
        %2056 = vmatpush1.bf16.msra.mxu0 0
        %2057 = vmatprep.subr.bf16.mxu0 0
        %2058 = vmatpush1.bf16.msra.mxu0 0
        %2059 = vmatprep.subr.bf16.mxu0 0
        %2060 = vmatpush1.bf16.msra.mxu0 0
        %2061 = vmatprep.subr.bf16.mxu0 0
        %2062 = vmatpush1.bf16.msra.mxu0 0
        %2063 = vmatprep.subr.bf16.mxu0 0
        %2064 = vmatpush1.bf16.msra.mxu0 0
        %2065 = vmatprep.subr.bf16.mxu0 0
        %2066 = vmatpush1.bf16.msra.mxu0 0
        %2067 = vmatprep.subr.bf16.mxu0 0
        %2068 = vmatpush1.bf16.msra.mxu0 0
        %2069 = vmatprep.mubr.bf16.mxu0 0
        %2070 = vmatmul.mubr.bf16.gmra.mrb[0].mxu0 %v2035
        %v2071 = vpop.f32.mrb[0].mxu0
        %v2072 = vadd.f32 0.0, %v2071
        %v2073 = vpop.f32.mrb[0].mxu0
        %v2074 = vpop.f32.mrb[0].mxu0
        %v2075 = vadd.f32 0.0, %v2074
        %v2076 = vpop.f32.mrb[0].mxu0
        %2077 = vdwg.mxu0
        %v2079 = vsel %vm1585, %v1769, 0
        %2081 = vmatprep.subr.bf16.mxu0 0
        %2082 = vmatpush1.bf16.msra.mxu0 %v1205
        %2083 = vmatprep.subr.bf16.mxu0 0
        %2084 = vmatpush1.bf16.msra.mxu0 0
        %2085 = vmatprep.subr.bf16.mxu0 0
        %2086 = vmatpush1.bf16.msra.mxu0 0
        %2087 = vmatprep.subr.bf16.mxu0 0
        %2088 = vmatpush1.bf16.msra.mxu0 0
        %2089 = vmatprep.subr.bf16.mxu0 0
        %2090 = vmatpush1.bf16.msra.mxu0 0
        %2091 = vmatprep.subr.bf16.mxu0 0
        %2092 = vmatpush1.bf16.msra.mxu0 0
        %2093 = vmatprep.subr.bf16.mxu0 0
        %2094 = vmatpush1.bf16.msra.mxu0 0
        %2095 = vmatprep.subr.bf16.mxu0 0
        %2096 = vmatpush1.bf16.msra.mxu0 0
        %2097 = vmatprep.subr.bf16.mxu0 0
        %2098 = vmatpush1.bf16.msra.mxu0 0
        %2099 = vmatprep.subr.bf16.mxu0 0
        %2100 = vmatpush1.bf16.msra.mxu0 0
        %2101 = vmatprep.subr.bf16.mxu0 0
        %2102 = vmatpush1.bf16.msra.mxu0 0
        %2103 = vmatprep.subr.bf16.mxu0 0
        %2104 = vmatpush1.bf16.msra.mxu0 0
        %2105 = vmatprep.subr.bf16.mxu0 0
        %2106 = vmatpush1.bf16.msra.mxu0 0
        %2107 = vmatprep.subr.bf16.mxu0 0
        %2108 = vmatpush1.bf16.msra.mxu0 0
        %2109 = vmatprep.subr.bf16.mxu0 0
        %2110 = vmatpush1.bf16.msra.mxu0 0
        %2111 = vmatprep.subr.bf16.mxu0 0
        %2112 = vmatpush1.bf16.msra.mxu0 0
        %2113 = vmatprep.mubr.bf16.mxu0 0
        %2114 = vmatmul.mubr.bf16.gmra.mrb[0].mxu0 %v2079
        %v2115 = vpop.f32.mrb[0].mxu0
        %v2116 = vadd.f32 0.0, %v2115
        %v2117 = vpop.f32.mrb[0].mxu0
        %v2118 = vpop.f32.mrb[0].mxu0
        %v2119 = vadd.f32 0.0, %v2118
        %v2120 = vpop.f32.mrb[0].mxu0
        %2121 = vdwg.mxu0
        %2126 = vrot.lane.b32.xlu0 %v1896, 32
        %v2127 = vpop.permute.xlu0 %2126
        %2128 = vrot.lane.b32.xlu0 %v1899, 32
        %v2129 = vpop.permute.xlu0 %2128
        %2130 = vrot.lane.b32.xlu0 %v1940, 32
        %v2131 = vpop.permute.xlu0 %2130
        %2132 = vrot.lane.b32.xlu0 %v1943, 32
        %v2133 = vpop.permute.xlu0 %2132
        %2142 = vrot.lane.b32.xlu0 %v1984, 64
        %v2143 = vpop.permute.xlu0 %2142
        %2144 = vrot.lane.b32.xlu0 %v1987, 64
        %v2145 = vpop.permute.xlu0 %2144
        %2146 = vrot.lane.b32.xlu0 %v2028, 64
        %v2147 = vpop.permute.xlu0 %2146
        %2148 = vrot.lane.b32.xlu0 %v2031, 64
        %v2149 = vpop.permute.xlu0 %2148
        %2158 = vrot.lane.b32.xlu0 %v2072, 96
        %v2159 = vpop.permute.xlu0 %2158
        %2160 = vrot.lane.b32.xlu0 %v2075, 96
        %v2161 = vpop.permute.xlu0 %2160
        %2162 = vrot.lane.b32.xlu0 %v2116, 96
        %v2163 = vpop.permute.xlu0 %2162
        %2164 = vrot.lane.b32.xlu0 %v2119, 96
        %v2165 = vpop.permute.xlu0 %2164
        %v2170 = vsel %vm1208, %v1808, %v2127
        %v2171 = vsel %vm1208, %v1811, %v2129
        %v2172 = vsel %vm1208, %v1852, %v2131
        %v2173 = vsel %vm1208, %v1855, %v2133
        %vm2174 = vcmask 523264
        %v2175 = vsel %vm2174, %v2170, %v2143
        %v2176 = vsel %vm2174, %v2171, %v2145
        %v2177 = vsel %vm2174, %v2172, %v2147
        %v2178 = vsel %vm2174, %v2173, %v2149
        %vm2179 = vcmask 785408
        %v2180 = vsel %vm2179, %v2175, %v2159
        %v2181 = vsel %vm2179, %v2176, %v2161
        %v2182 = vsel %vm2179, %v2177, %v2163
        %v2183 = vsel %vm2179, %v2178, %v2165
        %v2184 = vpack.c.bf16 %v2181, %v2180
        %v2185 = vpack.c.bf16 %v2183, %v2182
        %v2186 = vld [vmem:[%s662] sm:$0xf]
        %v2187 = vld [vmem:[%s662 + $0x4] sm:$0xf]
        %v2188 = vld [vmem:[%s662 + $0x8] sm:$0xf]
        %v2189 = vld [vmem:[%s662 + $0xc] sm:$0xf]
        %v2190 = vld [vmem:[%s662 + $0x10] sm:$0xf]
        %v2191 = vld [vmem:[%s662 + $0x14] sm:$0xf]
        %v2192 = vld [vmem:[%s662 + $0x18] sm:$0xf]
        %v2193 = vld [vmem:[%s662 + $0x1c] sm:$0xf]
        %v2194 = vld [vmem:[%s662 + $0x20] sm:$0xf]
        %v2195 = vld [vmem:[%s662 + $0x24] sm:$0xf]
        %v2196 = vld [vmem:[%s662 + $0x28] sm:$0xf]
        %v2197 = vld [vmem:[%s662 + $0x2c] sm:$0xf]
        %v2198 = vld [vmem:[%s662 + $0x30] sm:$0xf]
        %v2199 = vld [vmem:[%s662 + $0x34] sm:$0xf]
        %v2200 = vld [vmem:[%s662 + $0x38] sm:$0xf]
        %v2201 = vld [vmem:[%s662 + $0x3c] sm:$0xf]
        %v2202 = vld [vmem:[%s771] sm:$0x1]
        %v2204 = vlaneseq
        %v2205 = vshrl.u32 %v2204, 7
        %v2206 = vsub.s32 0, %v2205
        %v2207 = vrot.slane %v2202, %v2206
        %v2225 = vunpack.c.l.b16 %v2186
        %v2226 = vunpack.c.l.b16 %v2187
        %v2227 = vunpack.c.l.b16 %v2188
        %v2228 = vunpack.c.l.b16 %v2189
        %v2229 = vunpack.c.l.b16 %v2190
        %v2230 = vunpack.c.l.b16 %v2191
        %v2231 = vunpack.c.l.b16 %v2192
        %v2232 = vunpack.c.l.b16 %v2193
        %v2233 = vunpack.c.l.b16 %v2194
        %v2234 = vunpack.c.l.b16 %v2195
        %v2235 = vunpack.c.l.b16 %v2196
        %v2236 = vunpack.c.l.b16 %v2197
        %v2237 = vunpack.c.l.b16 %v2198
        %v2238 = vunpack.c.l.b16 %v2199
        %v2239 = vunpack.c.l.b16 %v2200
        %v2240 = vunpack.c.l.b16 %v2201
        %v2241 = vpack.c.b16 %v2226, %v2225
        %v2242 = vpack.c.b16 %v2228, %v2227
        %v2243 = vpack.c.b16 %v2230, %v2229
        %v2244 = vpack.c.b16 %v2232, %v2231
        %v2245 = vpack.c.b16 %v2234, %v2233
        %v2246 = vpack.c.b16 %v2236, %v2235
        %v2247 = vpack.c.b16 %v2238, %v2237
        %v2248 = vpack.c.b16 %v2240, %v2239
        %2257 = vmatprep.subr.bf16.mxu0 0
        %2258 = vmatpush1.bf16.msra.mxu0 %v2241
        %2259 = vmatprep.subr.bf16.mxu0 0
        %2260 = vmatpush1.bf16.msra.mxu0 %v2242
        %2261 = vmatprep.subr.bf16.mxu0 0
        %2262 = vmatpush1.bf16.msra.mxu0 %v2243
        %2263 = vmatprep.subr.bf16.mxu0 0
        %2264 = vmatpush1.bf16.msra.mxu0 %v2244
        %2265 = vmatprep.subr.bf16.mxu0 0
        %2266 = vmatpush1.bf16.msra.mxu0 %v2245
        %2267 = vmatprep.subr.bf16.mxu0 0
        %2268 = vmatpush1.bf16.msra.mxu0 %v2246
        %2269 = vmatprep.subr.bf16.mxu0 0
        %2270 = vmatpush1.bf16.msra.mxu0 %v2247
        %2271 = vmatprep.subr.bf16.mxu0 0
        %2272 = vmatpush1.bf16.msra.mxu0 %v2248
        %2273 = vmatprep.subr.bf16.mxu0 0
        %2274 = vmatpush1.bf16.msra.mxu0 0
        %2275 = vmatprep.subr.bf16.mxu0 0
        %2276 = vmatpush1.bf16.msra.mxu0 0
        %2277 = vmatprep.subr.bf16.mxu0 0
        %2278 = vmatpush1.bf16.msra.mxu0 0
        %2279 = vmatprep.subr.bf16.mxu0 0
        %2280 = vmatpush1.bf16.msra.mxu0 0
        %2281 = vmatprep.subr.bf16.mxu0 0
        %2282 = vmatpush1.bf16.msra.mxu0 0
        %2283 = vmatprep.subr.bf16.mxu0 0
        %2284 = vmatpush1.bf16.msra.mxu0 0
        %2285 = vmatprep.subr.bf16.mxu0 0
        %2286 = vmatpush1.bf16.msra.mxu0 0
        %2287 = vmatprep.subr.bf16.mxu0 0
        %2288 = vmatpush1.bf16.msra.mxu0 0
        %2289 = vmatprep.mubr.bf16.mxu0 0
        %2290 = vmatmul.mubr.bf16.gmra.mrb[0].mxu0 %v2184
        %v2291 = vpop.f32.mrb[0].mxu0
        %v2292 = vadd.f32 %v2207, %v2291
        %v2293 = vpop.f32.mrb[0].mxu0
        %v2294 = vpop.f32.mrb[0].mxu0
        %v2295 = vadd.f32 %v2207, %v2294
        %v2296 = vpop.f32.mrb[0].mxu0
        %2297 = vmatprep.mubr.bf16.mxu0 0
        %2298 = vmatmul.mubr.bf16.gmra.mrb[0].mxu0 %v2185
        %v2299 = vpop.f32.mrb[0].mxu0
        %v2300 = vadd.f32 %v2207, %v2299
        %v2301 = vpop.f32.mrb[0].mxu0
        %v2302 = vpop.f32.mrb[0].mxu0
        %v2303 = vadd.f32 %v2207, %v2302
        %v2304 = vpop.f32.mrb[0].mxu0
        %2305 = vdwg.mxu0
        %v2306 = vadd.f32 %v798, %v2292
        %v2307 = vadd.f32 %v799, %v2295
        %v2308 = vadd.f32 %v800, %v2300
        %v2309 = vadd.f32 %v801, %v2303
        %v2310 = vld [vmem:[%s774] sm:$0x1]
        %v2311 = vld [vmem:[%s777] sm:$0x1]
        %2312 = vadd.xlane.f32.xlu0 %v2306
        %v2313 = vpop.xlane.xlu0 %2312
        %2314 = vadd.xlane.f32.xlu0 %v2307
        %v2315 = vpop.xlane.xlu0 %2314
        %2316 = vadd.xlane.f32.xlu0 %v2308
        %v2317 = vpop.xlane.xlu0 %2316
        %2318 = vadd.xlane.f32.xlu0 %v2309
        %v2319 = vpop.xlane.xlu0 %2318
        %v2320 = vmul.f32 %v2313, %v812
        %v2321 = vmul.f32 %v2315, %v812
        %v2322 = vmul.f32 %v2317, %v812
        %v2323 = vmul.f32 %v2319, %v812
        %v2324 = vsub.f32 %v2306, %v2320
        %v2325 = vsub.f32 %v2307, %v2321
        %v2326 = vsub.f32 %v2308, %v2322
        %v2327 = vsub.f32 %v2309, %v2323
        %v2328 = vmul.f32 %v2324, %v2324
        %v2329 = vmul.f32 %v2325, %v2325
        %v2330 = vmul.f32 %v2326, %v2326
        %v2331 = vmul.f32 %v2327, %v2327
        %2332 = vadd.xlane.f32.xlu0 %v2328
        %v2333 = vpop.xlane.xlu0 %2332
        %2334 = vadd.xlane.f32.xlu0 %v2329
        %v2335 = vpop.xlane.xlu0 %2334
        %2336 = vadd.xlane.f32.xlu0 %v2330
        %v2337 = vpop.xlane.xlu0 %2336
        %2338 = vadd.xlane.f32.xlu0 %v2331
        %v2339 = vpop.xlane.xlu0 %2338
        %v2340 = vmul.f32 %v2333, %v812
        %v2341 = vmul.f32 %v2335, %v812
        %v2342 = vmul.f32 %v2337, %v812
        %v2343 = vmul.f32 %v2339, %v812
        %v2344 = vadd.f32 %v2340, 1e-05
        %v2345 = vadd.f32 %v2341, 1e-05
        %v2346 = vadd.f32 %v2342, 1e-05
        %v2347 = vadd.f32 %v2343, 1e-05
        %v2348 = vrsqrt.pop %v2344
        %v2349 = vrsqrt.pop %v2345
        %v2350 = vrsqrt.pop %v2346
        %v2351 = vrsqrt.pop %v2347
        %v2352 = vmul.f32 %v2324, %v2348
        %v2353 = vmul.f32 %v2325, %v2349
        %v2354 = vmul.f32 %v2326, %v2350
        %v2355 = vmul.f32 %v2327, %v2351
        %v2357 = vlaneseq
        %v2358 = vshrl.u32 %v2357, 7
        %v2359 = vsub.s32 0, %v2358
        %v2360 = vrot.slane %v2310, %v2359
        %v2362 = vmul.f32 %v2352, %v2360
        %v2363 = vmul.f32 %v2353, %v2360
        %v2364 = vmul.f32 %v2354, %v2360
        %v2365 = vmul.f32 %v2355, %v2360
        %v2367 = vlaneseq
        %v2368 = vshrl.u32 %v2367, 7
        %v2369 = vsub.s32 0, %v2368
        %v2370 = vrot.slane %v2311, %v2369
        %v2372 = vadd.f32 %v2362, %v2370
        %v2373 = vadd.f32 %v2363, %v2370
        %v2374 = vadd.f32 %v2364, %v2370
        %v2375 = vadd.f32 %v2365, %v2370
        %v2376 = vpack.c.bf16 %v2373, %v2372
        %v2377 = vpack.c.bf16 %v2375, %v2374
        %v2378 = vld [vmem:[%s671] sm:$0xff]
        %v2379 = vld [vmem:[%s671 + $0x8] sm:$0xff]
        %v2380 = vld [vmem:[%s671 + $0x10] sm:$0xff]
        %v2381 = vld [vmem:[%s671 + $0x18] sm:$0xff]
        %v2382 = vld [vmem:[%s671 + $0x20] sm:$0xff]
        %v2383 = vld [vmem:[%s671 + $0x28] sm:$0xff]
        %v2384 = vld [vmem:[%s671 + $0x30] sm:$0xff]
        %v2385 = vld [vmem:[%s671 + $0x38] sm:$0xff]
        %v2386 = vld [vmem:[%s671 + $0x40] sm:$0xff]
        %v2387 = vld [vmem:[%s671 + $0x48] sm:$0xff]
        %v2388 = vld [vmem:[%s671 + $0x50] sm:$0xff]
        %v2389 = vld [vmem:[%s671 + $0x58] sm:$0xff]
        %v2390 = vld [vmem:[%s671 + $0x60] sm:$0xff]
        %v2391 = vld [vmem:[%s671 + $0x68] sm:$0xff]
        %v2392 = vld [vmem:[%s671 + $0x70] sm:$0xff]
        %v2393 = vld [vmem:[%s671 + $0x78] sm:$0xff]
        %v2394 = vld [vmem:[%s671 + $0x80] sm:$0xff]
        %v2395 = vld [vmem:[%s671 + $0x88] sm:$0xff]
        %v2396 = vld [vmem:[%s671 + $0x90] sm:$0xff]
        %v2397 = vld [vmem:[%s671 + $0x98] sm:$0xff]
        %v2398 = vld [vmem:[%s671 + $0xa0] sm:$0xff]
        %v2399 = vld [vmem:[%s671 + $0xa8] sm:$0xff]
        %v2400 = vld [vmem:[%s671 + $0xb0] sm:$0xff]
        %v2401 = vld [vmem:[%s671 + $0xb8] sm:$0xff]
        %v2402 = vld [vmem:[%s671 + $0xc0] sm:$0xff]
        %v2403 = vld [vmem:[%s671 + $0xc8] sm:$0xff]
        %v2404 = vld [vmem:[%s671 + $0xd0] sm:$0xff]
        %v2405 = vld [vmem:[%s671 + $0xd8] sm:$0xff]
        %v2406 = vld [vmem:[%s671 + $0xe0] sm:$0xff]
        %v2407 = vld [vmem:[%s671 + $0xe8] sm:$0xff]
        %v2408 = vld [vmem:[%s671 + $0xf0] sm:$0xff]
        %v2409 = vld [vmem:[%s671 + $0xf8] sm:$0xff]
        %v2410 = vld [vmem:[%s781] sm:$0xf]
        %v2412 = vlaneseq
        %v2413 = vshrl.u32 %v2412, 7
        %v2414 = vsub.s32 0, %v2413
        %v2415 = vrot.slane %v2410, %v2414
        %v2416 = vlaneseq
        %v2417 = vshrl.u32 %v2416, 7
        %v2418 = vsub.s32 1, %v2417
        %v2419 = vrot.slane %v2410, %v2418
        %v2420 = vlaneseq
        %v2421 = vshrl.u32 %v2420, 7
        %v2422 = vsub.s32 2, %v2421
        %v2423 = vrot.slane %v2410, %v2422
        %v2424 = vlaneseq
        %v2425 = vshrl.u32 %v2424, 7
        %v2426 = vsub.s32 3, %v2425
        %v2427 = vrot.slane %v2410, %v2426
        %v2464 = vunpack.c.l.b16 %v2378
        %v2465 = vunpack.c.h.b16 %v2378
        %v2466 = vunpack.c.l.b16 %v2379
        %v2467 = vunpack.c.h.b16 %v2379
        %v2468 = vunpack.c.l.b16 %v2380
        %v2469 = vunpack.c.h.b16 %v2380
        %v2470 = vunpack.c.l.b16 %v2381
        %v2471 = vunpack.c.h.b16 %v2381
        %v2472 = vunpack.c.l.b16 %v2382
        %v2473 = vunpack.c.h.b16 %v2382
        %v2474 = vunpack.c.l.b16 %v2383
        %v2475 = vunpack.c.h.b16 %v2383
        %v2476 = vunpack.c.l.b16 %v2384
        %v2477 = vunpack.c.h.b16 %v2384
        %v2478 = vunpack.c.l.b16 %v2385
        %v2479 = vunpack.c.h.b16 %v2385
        %v2480 = vunpack.c.l.b16 %v2386
        %v2481 = vunpack.c.h.b16 %v2386
        %v2482 = vunpack.c.l.b16 %v2387
        %v2483 = vunpack.c.h.b16 %v2387
        %v2484 = vunpack.c.l.b16 %v2388
        %v2485 = vunpack.c.h.b16 %v2388
        %v2486 = vunpack.c.l.b16 %v2389
        %v2487 = vunpack.c.h.b16 %v2389
        %v2488 = vunpack.c.l.b16 %v2390
        %v2489 = vunpack.c.h.b16 %v2390
        %v2490 = vunpack.c.l.b16 %v2391
        %v2491 = vunpack.c.h.b16 %v2391
        %v2492 = vunpack.c.l.b16 %v2392
        %v2493 = vunpack.c.h.b16 %v2392
        %v2494 = vunpack.c.l.b16 %v2393
        %v2495 = vunpack.c.h.b16 %v2393
        %v2496 = vunpack.c.l.b16 %v2394
        %v2497 = vunpack.c.h.b16 %v2394
        %v2498 = vunpack.c.l.b16 %v2395
        %v2499 = vunpack.c.h.b16 %v2395
        %v2500 = vunpack.c.l.b16 %v2396
        %v2501 = vunpack.c.h.b16 %v2396
        %v2502 = vunpack.c.l.b16 %v2397
        %v2503 = vunpack.c.h.b16 %v2397
        %v2504 = vunpack.c.l.b16 %v2398
        %v2505 = vunpack.c.h.b16 %v2398
        %v2506 = vunpack.c.l.b16 %v2399
        %v2507 = vunpack.c.h.b16 %v2399
        %v2508 = vunpack.c.l.b16 %v2400
        %v2509 = vunpack.c.h.b16 %v2400
        %v2510 = vunpack.c.l.b16 %v2401
        %v2511 = vunpack.c.h.b16 %v2401
        %v2512 = vunpack.c.l.b16 %v2402
        %v2513 = vunpack.c.h.b16 %v2402
        %v2514 = vunpack.c.l.b16 %v2403
        %v2515 = vunpack.c.h.b16 %v2403
        %v2516 = vunpack.c.l.b16 %v2404
        %v2517 = vunpack.c.h.b16 %v2404
        %v2518 = vunpack.c.l.b16 %v2405
        %v2519 = vunpack.c.h.b16 %v2405
        %v2520 = vunpack.c.l.b16 %v2406
        %v2521 = vunpack.c.h.b16 %v2406
        %v2522 = vunpack.c.l.b16 %v2407
        %v2523 = vunpack.c.h.b16 %v2407
        %v2524 = vunpack.c.l.b16 %v2408
        %v2525 = vunpack.c.h.b16 %v2408
        %v2526 = vunpack.c.l.b16 %v2409
        %v2527 = vunpack.c.h.b16 %v2409
        %v2528 = vpack.c.b16 %v2468, %v2464
        %v2529 = vpack.c.b16 %v2469, %v2465
        %v2530 = vpack.c.b16 %v2470, %v2466
        %v2531 = vpack.c.b16 %v2471, %v2467
        %v2532 = vpack.c.b16 %v2476, %v2472
        %v2533 = vpack.c.b16 %v2477, %v2473
        %v2534 = vpack.c.b16 %v2478, %v2474
        %v2535 = vpack.c.b16 %v2479, %v2475
        %v2536 = vpack.c.b16 %v2484, %v2480
        %v2537 = vpack.c.b16 %v2485, %v2481
        %v2538 = vpack.c.b16 %v2486, %v2482
        %v2539 = vpack.c.b16 %v2487, %v2483
        %v2540 = vpack.c.b16 %v2492, %v2488
        %v2541 = vpack.c.b16 %v2493, %v2489
        %v2542 = vpack.c.b16 %v2494, %v2490
        %v2543 = vpack.c.b16 %v2495, %v2491
        %v2544 = vpack.c.b16 %v2500, %v2496
        %v2545 = vpack.c.b16 %v2501, %v2497
        %v2546 = vpack.c.b16 %v2502, %v2498
        %v2547 = vpack.c.b16 %v2503, %v2499
        %v2548 = vpack.c.b16 %v2508, %v2504
        %v2549 = vpack.c.b16 %v2509, %v2505
        %v2550 = vpack.c.b16 %v2510, %v2506
        %v2551 = vpack.c.b16 %v2511, %v2507
        %v2552 = vpack.c.b16 %v2516, %v2512
        %v2553 = vpack.c.b16 %v2517, %v2513
        %v2554 = vpack.c.b16 %v2518, %v2514
        %v2555 = vpack.c.b16 %v2519, %v2515
        %v2556 = vpack.c.b16 %v2524, %v2520
        %v2557 = vpack.c.b16 %v2525, %v2521
        %v2558 = vpack.c.b16 %v2526, %v2522
        %v2559 = vpack.c.b16 %v2527, %v2523
        %2592 = vmatprep.subr.bf16.mxu0 %v2529
        %2593 = vmatpush1.bf16.msra.mxu0 %v2528
        %2594 = vmatprep.subr.bf16.mxu0 %v2533
        %2595 = vmatpush1.bf16.msra.mxu0 %v2532
        %2596 = vmatprep.subr.bf16.mxu0 %v2537
        %2597 = vmatpush1.bf16.msra.mxu0 %v2536
        %2598 = vmatprep.subr.bf16.mxu0 %v2541
        %2599 = vmatpush1.bf16.msra.mxu0 %v2540
        %2600 = vmatprep.subr.bf16.mxu0 %v2545
        %2601 = vmatpush1.bf16.msra.mxu0 %v2544
        %2602 = vmatprep.subr.bf16.mxu0 %v2549
        %2603 = vmatpush1.bf16.msra.mxu0 %v2548
        %2604 = vmatprep.subr.bf16.mxu0 %v2553
        %2605 = vmatpush1.bf16.msra.mxu0 %v2552
        %2606 = vmatprep.subr.bf16.mxu0 %v2557
        %2607 = vmatpush1.bf16.msra.mxu0 %v2556
        %2608 = vmatprep.subr.bf16.mxu0 0
        %2609 = vmatpush1.bf16.msra.mxu0 0
        %2610 = vmatprep.subr.bf16.mxu0 0
        %2611 = vmatpush1.bf16.msra.mxu0 0
        %2612 = vmatprep.subr.bf16.mxu0 0
        %2613 = vmatpush1.bf16.msra.mxu0 0
        %2614 = vmatprep.subr.bf16.mxu0 0
        %2615 = vmatpush1.bf16.msra.mxu0 0
        %2616 = vmatprep.subr.bf16.mxu0 0
        %2617 = vmatpush1.bf16.msra.mxu0 0
        %2618 = vmatprep.subr.bf16.mxu0 0
        %2619 = vmatpush1.bf16.msra.mxu0 0
        %2620 = vmatprep.subr.bf16.mxu0 0
        %2621 = vmatpush1.bf16.msra.mxu0 0
        %2622 = vmatprep.subr.bf16.mxu0 0
        %2623 = vmatpush1.bf16.msra.mxu0 0
        %2624 = vmatprep.mubr.bf16.mxu0 0
        %2625 = vmatmul.mubr.bf16.gmra.mrb[0].mxu0 %v2376
        %v2626 = vpop.f32.mrb[0].mxu0
        %v2627 = vadd.f32 %v2415, %v2626
        %v2628 = vpop.f32.mrb[0].mxu0
        %v2629 = vadd.f32 %v2419, %v2628
        %v2630 = vpop.f32.mrb[0].mxu0
        %v2631 = vadd.f32 %v2415, %v2630
        %v2632 = vpop.f32.mrb[0].mxu0
        %v2633 = vadd.f32 %v2419, %v2632
        %2634 = vmatprep.mubr.bf16.mxu0 0
        %2635 = vmatmul.mubr.bf16.gmra.mrb[0].mxu0 %v2377
        %v2636 = vpop.f32.mrb[0].mxu0
        %v2637 = vadd.f32 %v2415, %v2636
        %v2638 = vpop.f32.mrb[0].mxu0
        %v2639 = vadd.f32 %v2419, %v2638
        %v2640 = vpop.f32.mrb[0].mxu0
        %v2641 = vadd.f32 %v2415, %v2640
        %v2642 = vpop.f32.mrb[0].mxu0
        %v2643 = vadd.f32 %v2419, %v2642
        %2644 = vdwg.mxu0
        %2645 = vmatprep.subr.bf16.mxu0 %v2531
        %2646 = vmatpush1.bf16.msra.mxu0 %v2530
        %2647 = vmatprep.subr.bf16.mxu0 %v2535
        %2648 = vmatpush1.bf16.msra.mxu0 %v2534
        %2649 = vmatprep.subr.bf16.mxu0 %v2539
        %2650 = vmatpush1.bf16.msra.mxu0 %v2538
        %2651 = vmatprep.subr.bf16.mxu0 %v2543
        %2652 = vmatpush1.bf16.msra.mxu0 %v2542
        %2653 = vmatprep.subr.bf16.mxu0 %v2547
        %2654 = vmatpush1.bf16.msra.mxu0 %v2546
        %2655 = vmatprep.subr.bf16.mxu0 %v2551
        %2656 = vmatpush1.bf16.msra.mxu0 %v2550
        %2657 = vmatprep.subr.bf16.mxu0 %v2555
        %2658 = vmatpush1.bf16.msra.mxu0 %v2554
        %2659 = vmatprep.subr.bf16.mxu0 %v2559
        %2660 = vmatpush1.bf16.msra.mxu0 %v2558
        %2661 = vmatprep.subr.bf16.mxu0 0
        %2662 = vmatpush1.bf16.msra.mxu0 0
        %2663 = vmatprep.subr.bf16.mxu0 0
        %2664 = vmatpush1.bf16.msra.mxu0 0
        %2665 = vmatprep.subr.bf16.mxu0 0
        %2666 = vmatpush1.bf16.msra.mxu0 0
        %2667 = vmatprep.subr.bf16.mxu0 0
        %2668 = vmatpush1.bf16.msra.mxu0 0
        %2669 = vmatprep.subr.bf16.mxu0 0
        %2670 = vmatpush1.bf16.msra.mxu0 0
        %2671 = vmatprep.subr.bf16.mxu0 0
        %2672 = vmatpush1.bf16.msra.mxu0 0
        %2673 = vmatprep.subr.bf16.mxu0 0
        %2674 = vmatpush1.bf16.msra.mxu0 0
        %2675 = vmatprep.subr.bf16.mxu0 0
        %2676 = vmatpush1.bf16.msra.mxu0 0
        %2677 = vmatprep.mubr.bf16.mxu0 0
        %2678 = vmatmul.mubr.bf16.gmra.mrb[0].mxu0 %v2376
        %v2679 = vpop.f32.mrb[0].mxu0
        %v2680 = vadd.f32 %v2423, %v2679
        %v2681 = vpop.f32.mrb[0].mxu0
        %v2682 = vadd.f32 %v2427, %v2681
        %v2683 = vpop.f32.mrb[0].mxu0
        %v2684 = vadd.f32 %v2423, %v2683
        %v2685 = vpop.f32.mrb[0].mxu0
        %v2686 = vadd.f32 %v2427, %v2685
        %2687 = vmatprep.mubr.bf16.mxu0 0
        %2688 = vmatmul.mubr.bf16.gmra.mrb[0].mxu0 %v2377
        %v2689 = vpop.f32.mrb[0].mxu0
        %v2690 = vadd.f32 %v2423, %v2689
        %v2691 = vpop.f32.mrb[0].mxu0
        %v2692 = vadd.f32 %v2427, %v2691
        %v2693 = vpop.f32.mrb[0].mxu0
        %v2694 = vadd.f32 %v2423, %v2693
        %v2695 = vpop.f32.mrb[0].mxu0
        %v2696 = vadd.f32 %v2427, %v2695
        %2697 = vdwg.mxu0
        %v2698 = vmul.f32 %v2627, 0.5
        %v2699 = vmul.f32 %v2629, 0.5
        %v2700 = vmul.f32 %v2680, 0.5
        %v2701 = vmul.f32 %v2682, 0.5
        %v2702 = vmul.f32 %v2631, 0.5
        %v2703 = vmul.f32 %v2633, 0.5
        %v2704 = vmul.f32 %v2684, 0.5
        %v2705 = vmul.f32 %v2686, 0.5
        %v2706 = vmul.f32 %v2637, 0.5
        %v2707 = vmul.f32 %v2639, 0.5
        %v2708 = vmul.f32 %v2690, 0.5
        %v2709 = vmul.f32 %v2692, 0.5
        %v2710 = vmul.f32 %v2641, 0.5
        %v2711 = vmul.f32 %v2643, 0.5
        %v2712 = vmul.f32 %v2694, 0.5
        %v2713 = vmul.f32 %v2696, 0.5
        %v2714 = vmul.f32 %v2627, 0.70710677
        %v2715 = vmul.f32 %v2629, 0.70710677
        %v2716 = vmul.f32 %v2680, 0.70710677
        %v2717 = vmul.f32 %v2682, 0.70710677
        %v2718 = vmul.f32 %v2631, 0.70710677
        %v2719 = vmul.f32 %v2633, 0.70710677
        %v2720 = vmul.f32 %v2684, 0.70710677
        %v2721 = vmul.f32 %v2686, 0.70710677
        %v2722 = vmul.f32 %v2637, 0.70710677
        %v2723 = vmul.f32 %v2639, 0.70710677
        %v2724 = vmul.f32 %v2690, 0.70710677
        %v2725 = vmul.f32 %v2692, 0.70710677
        %v2726 = vmul.f32 %v2641, 0.70710677
        %v2727 = vmul.f32 %v2643, 0.70710677
        %v2728 = vmul.f32 %v2694, 0.70710677
        %v2729 = vmul.f32 %v2696, 0.70710677
        %v2730 = verf.f32.pop %v2714
        %v2731 = verf.f32.pop %v2715
        %v2732 = verf.f32.pop %v2716
        %v2733 = verf.f32.pop %v2717
        %v2734 = verf.f32.pop %v2718
        %v2735 = verf.f32.pop %v2719
        %v2736 = verf.f32.pop %v2720
        %v2737 = verf.f32.pop %v2721
        %v2738 = verf.f32.pop %v2722
        %v2739 = verf.f32.pop %v2723
        %v2740 = verf.f32.pop %v2724
        %v2741 = verf.f32.pop %v2725
        %v2742 = verf.f32.pop %v2726
        %v2743 = verf.f32.pop %v2727
        %v2744 = verf.f32.pop %v2728
        %v2745 = verf.f32.pop %v2729
        %v2746 = vadd.f32 %v2730, 1.0
        %v2747 = vadd.f32 %v2731, 1.0
        %v2748 = vadd.f32 %v2732, 1.0
        %v2749 = vadd.f32 %v2733, 1.0
        %v2750 = vadd.f32 %v2734, 1.0
        %v2751 = vadd.f32 %v2735, 1.0
        %v2752 = vadd.f32 %v2736, 1.0
        %v2753 = vadd.f32 %v2737, 1.0
        %v2754 = vadd.f32 %v2738, 1.0
        %v2755 = vadd.f32 %v2739, 1.0
        %v2756 = vadd.f32 %v2740, 1.0
        %v2757 = vadd.f32 %v2741, 1.0
        %v2758 = vadd.f32 %v2742, 1.0
        %v2759 = vadd.f32 %v2743, 1.0
        %v2760 = vadd.f32 %v2744, 1.0
        %v2761 = vadd.f32 %v2745, 1.0
        %v2762 = vmul.f32 %v2698, %v2746
        %v2763 = vmul.f32 %v2699, %v2747
        %v2764 = vmul.f32 %v2700, %v2748
        %v2765 = vmul.f32 %v2701, %v2749
        %v2766 = vmul.f32 %v2702, %v2750
        %v2767 = vmul.f32 %v2703, %v2751
        %v2768 = vmul.f32 %v2704, %v2752
        %v2769 = vmul.f32 %v2705, %v2753
        %v2770 = vmul.f32 %v2706, %v2754
        %v2771 = vmul.f32 %v2707, %v2755
        %v2772 = vmul.f32 %v2708, %v2756
        %v2773 = vmul.f32 %v2709, %v2757
        %v2774 = vmul.f32 %v2710, %v2758
        %v2775 = vmul.f32 %v2711, %v2759
        %v2776 = vmul.f32 %v2712, %v2760
        %v2777 = vmul.f32 %v2713, %v2761
        %v2778 = vpack.c.bf16 %v2766, %v2762
        %v2779 = vpack.c.bf16 %v2767, %v2763
        %v2780 = vpack.c.bf16 %v2768, %v2764
        %v2781 = vpack.c.bf16 %v2769, %v2765
        %v2782 = vpack.c.bf16 %v2774, %v2770
        %v2783 = vpack.c.bf16 %v2775, %v2771
        %v2784 = vpack.c.bf16 %v2776, %v2772
        %v2785 = vpack.c.bf16 %v2777, %v2773
        %v2786 = vld [vmem:[%s680] sm:$0xf]
        %v2787 = vld [vmem:[%s680 + $0x4] sm:$0xf]
        %v2788 = vld [vmem:[%s680 + $0x8] sm:$0xf]
        %v2789 = vld [vmem:[%s680 + $0xc] sm:$0xf]
        %v2790 = vld [vmem:[%s680 + $0x10] sm:$0xf]
        %v2791 = vld [vmem:[%s680 + $0x14] sm:$0xf]
        %v2792 = vld [vmem:[%s680 + $0x18] sm:$0xf]
        %v2793 = vld [vmem:[%s680 + $0x1c] sm:$0xf]
        %v2794 = vld [vmem:[%s680 + $0x20] sm:$0xf]
        %v2795 = vld [vmem:[%s680 + $0x24] sm:$0xf]
        %v2796 = vld [vmem:[%s680 + $0x28] sm:$0xf]
        %v2797 = vld [vmem:[%s680 + $0x2c] sm:$0xf]
        %v2798 = vld [vmem:[%s680 + $0x30] sm:$0xf]
        %v2799 = vld [vmem:[%s680 + $0x34] sm:$0xf]
        %v2800 = vld [vmem:[%s680 + $0x38] sm:$0xf]
        %v2801 = vld [vmem:[%s680 + $0x3c] sm:$0xf]
        %v2802 = vld [vmem:[%s680 + $0x40] sm:$0xf]
        %v2803 = vld [vmem:[%s680 + $0x44] sm:$0xf]
        %v2804 = vld [vmem:[%s680 + $0x48] sm:$0xf]
        %v2805 = vld [vmem:[%s680 + $0x4c] sm:$0xf]
        %v2806 = vld [vmem:[%s680 + $0x50] sm:$0xf]
        %v2807 = vld [vmem:[%s680 + $0x54] sm:$0xf]
        %v2808 = vld [vmem:[%s680 + $0x58] sm:$0xf]
        %v2809 = vld [vmem:[%s680 + $0x5c] sm:$0xf]
        %v2810 = vld [vmem:[%s680 + $0x60] sm:$0xf]
        %v2811 = vld [vmem:[%s680 + $0x64] sm:$0xf]
        %v2812 = vld [vmem:[%s680 + $0x68] sm:$0xf]
        %v2813 = vld [vmem:[%s680 + $0x6c] sm:$0xf]
        %v2814 = vld [vmem:[%s680 + $0x70] sm:$0xf]
        %v2815 = vld [vmem:[%s680 + $0x74] sm:$0xf]
        %v2816 = vld [vmem:[%s680 + $0x78] sm:$0xf]
        %v2817 = vld [vmem:[%s680 + $0x7c] sm:$0xf]
        %v2818 = vld [vmem:[%s680 + $0x80] sm:$0xf]
        %v2819 = vld [vmem:[%s680 + $0x84] sm:$0xf]
        %v2820 = vld [vmem:[%s680 + $0x88] sm:$0xf]
        %v2821 = vld [vmem:[%s680 + $0x8c] sm:$0xf]
        %v2822 = vld [vmem:[%s680 + $0x90] sm:$0xf]
        %v2823 = vld [vmem:[%s680 + $0x94] sm:$0xf]
        %v2824 = vld [vmem:[%s680 + $0x98] sm:$0xf]
        %v2825 = vld [vmem:[%s680 + $0x9c] sm:$0xf]
        %v2826 = vld [vmem:[%s680 + $0xa0] sm:$0xf]
        %v2827 = vld [vmem:[%s680 + $0xa4] sm:$0xf]
        %v2828 = vld [vmem:[%s680 + $0xa8] sm:$0xf]
        %v2829 = vld [vmem:[%s680 + $0xac] sm:$0xf]
        %v2830 = vld [vmem:[%s680 + $0xb0] sm:$0xf]
        %v2831 = vld [vmem:[%s680 + $0xb4] sm:$0xf]
        %v2832 = vld [vmem:[%s680 + $0xb8] sm:$0xf]
        %v2833 = vld [vmem:[%s680 + $0xbc] sm:$0xf]
        %v2834 = vld [vmem:[%s680 + $0xc0] sm:$0xf]
        %v2835 = vld [vmem:[%s680 + $0xc4] sm:$0xf]
        %v2836 = vld [vmem:[%s680 + $0xc8] sm:$0xf]
        %v2837 = vld [vmem:[%s680 + $0xcc] sm:$0xf]
        %v2838 = vld [vmem:[%s680 + $0xd0] sm:$0xf]
        %v2839 = vld [vmem:[%s680 + $0xd4] sm:$0xf]
        %v2840 = vld [vmem:[%s680 + $0xd8] sm:$0xf]
        %v2841 = vld [vmem:[%s680 + $0xdc] sm:$0xf]
        %v2842 = vld [vmem:[%s680 + $0xe0] sm:$0xf]
        %v2843 = vld [vmem:[%s680 + $0xe4] sm:$0xf]
        %v2844 = vld [vmem:[%s680 + $0xe8] sm:$0xf]
        %v2845 = vld [vmem:[%s680 + $0xec] sm:$0xf]
        %v2846 = vld [vmem:[%s680 + $0xf0] sm:$0xf]
        %v2847 = vld [vmem:[%s680 + $0xf4] sm:$0xf]
        %v2848 = vld [vmem:[%s680 + $0xf8] sm:$0xf]
        %v2849 = vld [vmem:[%s680 + $0xfc] sm:$0xf]
        %v2850 = vld [vmem:[%s784] sm:$0x1]
        %v2852 = vlaneseq
        %v2853 = vshrl.u32 %v2852, 7
        %v2854 = vsub.s32 0, %v2853
        %v2855 = vrot.slane %v2850, %v2854
        %v2921 = vunpack.c.l.b16 %v2786
        %v2922 = vunpack.c.l.b16 %v2787
        %v2923 = vunpack.c.l.b16 %v2788
        %v2924 = vunpack.c.l.b16 %v2789
        %v2925 = vunpack.c.l.b16 %v2790
        %v2926 = vunpack.c.l.b16 %v2791
        %v2927 = vunpack.c.l.b16 %v2792
        %v2928 = vunpack.c.l.b16 %v2793
        %v2929 = vunpack.c.l.b16 %v2794
        %v2930 = vunpack.c.l.b16 %v2795
        %v2931 = vunpack.c.l.b16 %v2796
        %v2932 = vunpack.c.l.b16 %v2797
        %v2933 = vunpack.c.l.b16 %v2798
        %v2934 = vunpack.c.l.b16 %v2799
        %v2935 = vunpack.c.l.b16 %v2800
        %v2936 = vunpack.c.l.b16 %v2801
        %v2937 = vunpack.c.l.b16 %v2802
        %v2938 = vunpack.c.l.b16 %v2803
        %v2939 = vunpack.c.l.b16 %v2804
        %v2940 = vunpack.c.l.b16 %v2805
        %v2941 = vunpack.c.l.b16 %v2806
        %v2942 = vunpack.c.l.b16 %v2807
        %v2943 = vunpack.c.l.b16 %v2808
        %v2944 = vunpack.c.l.b16 %v2809
        %v2945 = vunpack.c.l.b16 %v2810
        %v2946 = vunpack.c.l.b16 %v2811
        %v2947 = vunpack.c.l.b16 %v2812
        %v2948 = vunpack.c.l.b16 %v2813
        %v2949 = vunpack.c.l.b16 %v2814
        %v2950 = vunpack.c.l.b16 %v2815
        %v2951 = vunpack.c.l.b16 %v2816
        %v2952 = vunpack.c.l.b16 %v2817
        %v2953 = vunpack.c.l.b16 %v2818
        %v2954 = vunpack.c.l.b16 %v2819
        %v2955 = vunpack.c.l.b16 %v2820
        %v2956 = vunpack.c.l.b16 %v2821
        %v2957 = vunpack.c.l.b16 %v2822
        %v2958 = vunpack.c.l.b16 %v2823
        %v2959 = vunpack.c.l.b16 %v2824
        %v2960 = vunpack.c.l.b16 %v2825
        %v2961 = vunpack.c.l.b16 %v2826
        %v2962 = vunpack.c.l.b16 %v2827
        %v2963 = vunpack.c.l.b16 %v2828
        %v2964 = vunpack.c.l.b16 %v2829
        %v2965 = vunpack.c.l.b16 %v2830
        %v2966 = vunpack.c.l.b16 %v2831
        %v2967 = vunpack.c.l.b16 %v2832
        %v2968 = vunpack.c.l.b16 %v2833
        %v2969 = vunpack.c.l.b16 %v2834
        %v2970 = vunpack.c.l.b16 %v2835
        %v2971 = vunpack.c.l.b16 %v2836
        %v2972 = vunpack.c.l.b16 %v2837
        %v2973 = vunpack.c.l.b16 %v2838
        %v2974 = vunpack.c.l.b16 %v2839
        %v2975 = vunpack.c.l.b16 %v2840
        %v2976 = vunpack.c.l.b16 %v2841
        %v2977 = vunpack.c.l.b16 %v2842
        %v2978 = vunpack.c.l.b16 %v2843
        %v2979 = vunpack.c.l.b16 %v2844
        %v2980 = vunpack.c.l.b16 %v2845
        %v2981 = vunpack.c.l.b16 %v2846
        %v2982 = vunpack.c.l.b16 %v2847
        %v2983 = vunpack.c.l.b16 %v2848
        %v2984 = vunpack.c.l.b16 %v2849
        %v2985 = vpack.c.b16 %v2922, %v2921
        %v2986 = vpack.c.b16 %v2924, %v2923
        %v2987 = vpack.c.b16 %v2926, %v2925
        %v2988 = vpack.c.b16 %v2928, %v2927
        %v2989 = vpack.c.b16 %v2930, %v2929
        %v2990 = vpack.c.b16 %v2932, %v2931
        %v2991 = vpack.c.b16 %v2934, %v2933
        %v2992 = vpack.c.b16 %v2936, %v2935
        %v2993 = vpack.c.b16 %v2938, %v2937
        %v2994 = vpack.c.b16 %v2940, %v2939
        %v2995 = vpack.c.b16 %v2942, %v2941
        %v2996 = vpack.c.b16 %v2944, %v2943
        %v2997 = vpack.c.b16 %v2946, %v2945
        %v2998 = vpack.c.b16 %v2948, %v2947
        %v2999 = vpack.c.b16 %v2950, %v2949
        %v3000 = vpack.c.b16 %v2952, %v2951
        %v3001 = vpack.c.b16 %v2954, %v2953
        %v3002 = vpack.c.b16 %v2956, %v2955
        %v3003 = vpack.c.b16 %v2958, %v2957
        %v3004 = vpack.c.b16 %v2960, %v2959
        %v3005 = vpack.c.b16 %v2962, %v2961
        %v3006 = vpack.c.b16 %v2964, %v2963
        %v3007 = vpack.c.b16 %v2966, %v2965
        %v3008 = vpack.c.b16 %v2968, %v2967
        %v3009 = vpack.c.b16 %v2970, %v2969
        %v3010 = vpack.c.b16 %v2972, %v2971
        %v3011 = vpack.c.b16 %v2974, %v2973
        %v3012 = vpack.c.b16 %v2976, %v2975
        %v3013 = vpack.c.b16 %v2978, %v2977
        %v3014 = vpack.c.b16 %v2980, %v2979
        %v3015 = vpack.c.b16 %v2982, %v2981
        %v3016 = vpack.c.b16 %v2984, %v2983
        %3049 = vmatprep.subr.bf16.mxu0 0
        %3050 = vmatpush1.bf16.msra.mxu0 %v2985
        %3051 = vmatprep.subr.bf16.mxu0 0
        %3052 = vmatpush1.bf16.msra.mxu0 %v2986
        %3053 = vmatprep.subr.bf16.mxu0 0
        %3054 = vmatpush1.bf16.msra.mxu0 %v2987
        %3055 = vmatprep.subr.bf16.mxu0 0
        %3056 = vmatpush1.bf16.msra.mxu0 %v2988
        %3057 = vmatprep.subr.bf16.mxu0 0
        %3058 = vmatpush1.bf16.msra.mxu0 %v2989
        %3059 = vmatprep.subr.bf16.mxu0 0
        %3060 = vmatpush1.bf16.msra.mxu0 %v2990
        %3061 = vmatprep.subr.bf16.mxu0 0
        %3062 = vmatpush1.bf16.msra.mxu0 %v2991
        %3063 = vmatprep.subr.bf16.mxu0 0
        %3064 = vmatpush1.bf16.msra.mxu0 %v2992
        %3065 = vmatprep.subr.bf16.mxu0 0
        %3066 = vmatpush1.bf16.msra.mxu0 %v2993
        %3067 = vmatprep.subr.bf16.mxu0 0
        %3068 = vmatpush1.bf16.msra.mxu0 %v2994
        %3069 = vmatprep.subr.bf16.mxu0 0
        %3070 = vmatpush1.bf16.msra.mxu0 %v2995
        %3071 = vmatprep.subr.bf16.mxu0 0
        %3072 = vmatpush1.bf16.msra.mxu0 %v2996
        %3073 = vmatprep.subr.bf16.mxu0 0
        %3074 = vmatpush1.bf16.msra.mxu0 %v2997
        %3075 = vmatprep.subr.bf16.mxu0 0
        %3076 = vmatpush1.bf16.msra.mxu0 %v2998
        %3077 = vmatprep.subr.bf16.mxu0 0
        %3078 = vmatpush1.bf16.msra.mxu0 %v2999
        %3079 = vmatprep.subr.bf16.mxu0 0
        %3080 = vmatpush1.bf16.msra.mxu0 %v3000
        %3081 = vmatprep.mubr.bf16.mxu0 %v2779
        %3082 = vmatmul.mubr.bf16.gmra.mrb[0].mxu0 %v2778
        %v3083 = vpop.f32.mrb[0].mxu0
        %v3084 = vadd.f32 %v2855, %v3083
        %v3085 = vpop.f32.mrb[0].mxu0
        %v3086 = vpop.f32.mrb[0].mxu0
        %v3087 = vadd.f32 %v2855, %v3086
        %v3088 = vpop.f32.mrb[0].mxu0
        %3089 = vmatprep.mubr.bf16.mxu0 %v2783
        %3090 = vmatmul.mubr.bf16.gmra.mrb[0].mxu0 %v2782
        %v3091 = vpop.f32.mrb[0].mxu0
        %v3092 = vadd.f32 %v2855, %v3091
        %v3093 = vpop.f32.mrb[0].mxu0
        %v3094 = vpop.f32.mrb[0].mxu0
        %v3095 = vadd.f32 %v2855, %v3094
        %v3096 = vpop.f32.mrb[0].mxu0
        %3097 = vdwg.mxu0
        %3098 = vmatprep.subr.bf16.mxu0 0
        %3099 = vmatpush1.bf16.msra.mxu0 %v3001
        %3100 = vmatprep.subr.bf16.mxu0 0
        %3101 = vmatpush1.bf16.msra.mxu0 %v3002
        %3102 = vmatprep.subr.bf16.mxu0 0
        %3103 = vmatpush1.bf16.msra.mxu0 %v3003
        %3104 = vmatprep.subr.bf16.mxu0 0
        %3105 = vmatpush1.bf16.msra.mxu0 %v3004
        %3106 = vmatprep.subr.bf16.mxu0 0
        %3107 = vmatpush1.bf16.msra.mxu0 %v3005
        %3108 = vmatprep.subr.bf16.mxu0 0
        %3109 = vmatpush1.bf16.msra.mxu0 %v3006
        %3110 = vmatprep.subr.bf16.mxu0 0
        %3111 = vmatpush1.bf16.msra.mxu0 %v3007
        %3112 = vmatprep.subr.bf16.mxu0 0
        %3113 = vmatpush1.bf16.msra.mxu0 %v3008
        %3114 = vmatprep.subr.bf16.mxu0 0
        %3115 = vmatpush1.bf16.msra.mxu0 %v3009
        %3116 = vmatprep.subr.bf16.mxu0 0
        %3117 = vmatpush1.bf16.msra.mxu0 %v3010
        %3118 = vmatprep.subr.bf16.mxu0 0
        %3119 = vmatpush1.bf16.msra.mxu0 %v3011
        %3120 = vmatprep.subr.bf16.mxu0 0
        %3121 = vmatpush1.bf16.msra.mxu0 %v3012
        %3122 = vmatprep.subr.bf16.mxu0 0
        %3123 = vmatpush1.bf16.msra.mxu0 %v3013
        %3124 = vmatprep.subr.bf16.mxu0 0
        %3125 = vmatpush1.bf16.msra.mxu0 %v3014
        %3126 = vmatprep.subr.bf16.mxu0 0
        %3127 = vmatpush1.bf16.msra.mxu0 %v3015
        %3128 = vmatprep.subr.bf16.mxu0 0
        %3129 = vmatpush1.bf16.msra.mxu0 %v3016
        %3130 = vmatprep.mubr.bf16.mxu0 %v2781
        %3131 = vmatmul.mubr.bf16.gmra.mrb[0].mxu0 %v2780
        %v3132 = vpop.f32.mrb[0].mxu0
        %v3133 = vadd.f32 %v3084, %v3132
        %v3134 = vpop.f32.mrb[0].mxu0
        %v3135 = vpop.f32.mrb[0].mxu0
        %v3136 = vadd.f32 %v3087, %v3135
        %v3137 = vpop.f32.mrb[0].mxu0
        %3138 = vmatprep.mubr.bf16.mxu0 %v2785
        %3139 = vmatmul.mubr.bf16.gmra.mrb[0].mxu0 %v2784
        %v3140 = vpop.f32.mrb[0].mxu0
        %v3141 = vadd.f32 %v3092, %v3140
        %v3142 = vpop.f32.mrb[0].mxu0
        %v3143 = vpop.f32.mrb[0].mxu0
        %v3144 = vadd.f32 %v3095, %v3143
        %v3145 = vpop.f32.mrb[0].mxu0
        %3146 = vdwg.mxu0
        %v3147 = vadd.f32 %v2306, %v3133
        %v3148 = vadd.f32 %v2307, %v3136
        %v3149 = vadd.f32 %v2308, %v3141
        %v3150 = vadd.f32 %v2309, %v3144
        %3151 = vst [vmem:[#allocation2] sm:$0xff] %v3147
        %3152 = vst [vmem:[#allocation2 + $0x8] sm:$0xff] %v3148
        %3153 = vst [vmem:[#allocation2 + $0x10] sm:$0xff] %v3149
        %3154 = vst [vmem:[#allocation2 + $0x18] sm:$0xff] %v3150
        %p3155 = scmp.eq.s32.totalorder %s37, 1
        // Predicated region
        $region113: #{tpu_custom_call.1} parent=79 // pred_check
          %p3156 = pneg %p3155
        $region114: #{tpu_custom_call.1} parent=79 // pred_check_branch
          %3158 = sbr.rel (%p3156) target = $region116
        $region115: #{tpu_custom_call.1} parent=79 // pred_region
          %v3159 = vld [vmem:[%s13] sm:$0x1]
          %v3160 = vld [vmem:[%s14] sm:$0x1]
          %3161 = vadd.xlane.f32.xlu0 %v3147
          %v3162 = vpop.xlane.xlu0 %3161
          %3163 = vadd.xlane.f32.xlu0 %v3148
          %v3164 = vpop.xlane.xlu0 %3163
          %3165 = vadd.xlane.f32.xlu0 %v3149
          %v3166 = vpop.xlane.xlu0 %3165
          %3167 = vadd.xlane.f32.xlu0 %v3150
          %v3168 = vpop.xlane.xlu0 %3167
          %v3169 = vmul.f32 %v3162, %v812
          %v3170 = vmul.f32 %v3164, %v812
          %v3171 = vmul.f32 %v3166, %v812
          %v3172 = vmul.f32 %v3168, %v812
          %v3173 = vsub.f32 %v3147, %v3169
          %v3174 = vsub.f32 %v3148, %v3170
          %v3175 = vsub.f32 %v3149, %v3171
          %v3176 = vsub.f32 %v3150, %v3172
          %v3177 = vmul.f32 %v3173, %v3173
          %v3178 = vmul.f32 %v3174, %v3174
          %v3179 = vmul.f32 %v3175, %v3175
          %v3180 = vmul.f32 %v3176, %v3176
          %3181 = vadd.xlane.f32.xlu0 %v3177
          %v3182 = vpop.xlane.xlu0 %3181
          %3183 = vadd.xlane.f32.xlu0 %v3178
          %v3184 = vpop.xlane.xlu0 %3183
          %3185 = vadd.xlane.f32.xlu0 %v3179
          %v3186 = vpop.xlane.xlu0 %3185
          %3187 = vadd.xlane.f32.xlu0 %v3180
          %v3188 = vpop.xlane.xlu0 %3187
          %v3189 = vmul.f32 %v3182, %v812
          %v3190 = vmul.f32 %v3184, %v812
          %v3191 = vmul.f32 %v3186, %v812
          %v3192 = vmul.f32 %v3188, %v812
          %v3193 = vadd.f32 %v3189, 1e-05
          %v3194 = vadd.f32 %v3190, 1e-05
          %v3195 = vadd.f32 %v3191, 1e-05
          %v3196 = vadd.f32 %v3192, 1e-05
          %v3197 = vrsqrt.pop %v3193
          %v3198 = vrsqrt.pop %v3194
          %v3199 = vrsqrt.pop %v3195
          %v3200 = vrsqrt.pop %v3196
          %v3201 = vmul.f32 %v3173, %v3197
          %v3202 = vmul.f32 %v3174, %v3198
          %v3203 = vmul.f32 %v3175, %v3199
          %v3204 = vmul.f32 %v3176, %v3200
          %v3206 = vlaneseq
          %v3207 = vshrl.u32 %v3206, 7
          %v3208 = vsub.s32 0, %v3207
          %v3209 = vrot.slane %v3159, %v3208
          %v3211 = vmul.f32 %v3201, %v3209
          %v3212 = vmul.f32 %v3202, %v3209
          %v3213 = vmul.f32 %v3203, %v3209
          %v3214 = vmul.f32 %v3204, %v3209
          %v3216 = vlaneseq
          %v3217 = vshrl.u32 %v3216, 7
          %v3218 = vsub.s32 0, %v3217
          %v3219 = vrot.slane %v3160, %v3218
          %v3221 = vadd.f32 %v3211, %v3219
          %v3222 = vadd.f32 %v3212, %v3219
          %v3223 = vadd.f32 %v3213, %v3219
          %v3224 = vadd.f32 %v3214, %v3219
          %v3225 = vpack.c.bf16 %v3222, %v3221
          %v3226 = vpack.c.bf16 %v3224, %v3223
          %v3229 = vunpack.c.l.b16 %v3225
          %v3230 = vunpack.c.h.b16 %v3225
          %v3231 = vunpack.c.l.b16 %v3226
          %v3232 = vunpack.c.h.b16 %v3226
          %v3233 = vpack.c.b16 %v3229, %v3229
          %v3234 = vpack.c.b16 %v3230, %v3230
          %v3235 = vpack.c.b16 %v3231, %v3231
          %v3236 = vpack.c.b16 %v3232, %v3232
          %3241 = vst [vmem:[#allocation15] sm:$0xf] %v3233
          %3242 = vst [vmem:[#allocation15 + $0x4] sm:$0xf] %v3234
          %3243 = vst [vmem:[#allocation15 + $0x8] sm:$0xf] %v3235
          %3244 = vst [vmem:[#allocation15 + $0xc] sm:$0xf] %v3236
        $region116: #{tpu_custom_call.1} parent=79 // pred_fallthru
          _
        // Predicated region
        $region117: #{tpu_custom_call.1} parent=79 // pred_check
          %p3245 = pneg %p425
        $region118: #{tpu_custom_call.1} parent=79 // pred_check_branch
          %3247 = sbr.rel (%p3245) target = $region120
        $region119: #{tpu_custom_call.1} parent=79 // pred_region
          %s3249 = ssub.s32 256, 256
          %3250 = vsyncadd [#allocation5], %s3249
          %s3251 = sshll.u32 [#allocation15], 4
          %s3252 = int_to_ptr.vmem [resolvable:$true] %s3251
          %3257 = dma.vmem_to_hbm [thread:$0]  %s3252, 256, %s15, [#allocation5], 64, 64, 4
        $region120: #{tpu_custom_call.1} parent=79 // pred_fallthru
          _
        // Predicated region
        $region121: #{tpu_custom_call.1} parent=79 // pred_check
          %p3258 = pneg %p425
        $region122: #{tpu_custom_call.1} parent=79 // pred_check_branch
          %3260 = sbr.rel (%p3258) target = $region124
        $region123: #{tpu_custom_call.1} parent=79 // pred_region
          %3261 = dma.done [#allocation5], 256
        $region124: #{tpu_custom_call.1} parent=79 // pred_fallthru
          _
      $region80: #{tpu_custom_call.1} parent=5 // pred_fallthru
        _
      %p3262 = scmp.le.s32.totalorder 2, %s32
      // Predicated region
      $region125: #{tpu_custom_call.1} parent=5 // pred_check
        %p3263 = pneg %p3262
      $region126: #{tpu_custom_call.1} parent=5 // pred_check_branch
        %3265 = sbr.rel (%p3263) target = $region128
      $region127: #{tpu_custom_call.1} parent=5 // pred_region
        %s3266 = ssub.s32 %s32, 2
      $region128: #{tpu_custom_call.1} parent=5 // pred_fallthru
        _
    $region6: #{tpu_custom_call.1} parent=1 // loop_footer
      %s36 = sadd.s32 1, %s32
    $region7: #{tpu_custom_call.1} parent=1 // loop_footer_branch
      %31 = sbr.rel target = $region3
    $region8: #{tpu_custom_call.1} parent=1 // loop_exit
      _
    %3267 = vsyncpa [#allocation4], 1
    %s3268 = scalar_lea.sflag [#allocation4], 1
    %3269 = vsyncpa %s3268, 1
    %3270 = vsyncpa [#allocation7], 1
    %s3271 = scalar_lea.sflag [#allocation7], 1
    %3272 = vsyncpa %s3271, 1
    %3273 = vsyncpa [#allocation10], 1
    %s3274 = scalar_lea.sflag [#allocation10], 1
    %3275 = vsyncpa %s3274, 1
    %3276 = vsyncpa [#allocation13], 1
    %s3277 = scalar_lea.sflag [#allocation13], 1
    %3278 = vsyncpa %s3277, 1
    %3279 = vsyncpa [#allocation5], 1
    %s3280 = scalar_lea.sflag [#allocation5], 1
    %3281 = vsyncpa %s3280, 1

</llo_original>
